<compile_context>
chip_gen: v6e
topology: v6e:2x2x1
jax: 0.10.0
libtpu: 0.0.40
codegen_flags: <defaults>
</compile_context>

<pallas_src>
import jax
import jax.numpy as jnp
from jax import lax
from jax.experimental import pallas as pl
from jax.experimental.pallas import tpu as pltpu

EPS = 1e-5                      # calc_mean_std eps
_HIGH = lax.Precision.HIGHEST   # small / numerically sensitive f32 matmuls


# ----------------------------- Pallas kernel -------------------------------

def _make_meta_adain_kernel(C, H, W):
    HW = H * W

    def kernel(c_ref, s_ref, edge_ref, m_ref, r_ref, wv_ref, bv_ref,
               wgb_ref, bgb_ref, sw_ref, sb_ref, o_ref, col_ref):
        c = c_ref[0]                      # (C, HW) content slab
        s = s_ref[0]                      # (C, HW) style slab

        def inorm(x):
            # instance norm over spatial dims; unbiased var like torch .var()
            mu = jnp.mean(x, axis=1, keepdims=True)
            d = x - mu
            var = jnp.sum(d * d, axis=1, keepdims=True) * (1.0 / (HW - 1))
            return d * lax.rsqrt(var + EPS)

        cn = inorm(c)
        sn = inorm(s)

        # ---- attention -----------------------------------------------------
        # softmax(Q^T K) == softmax(cn^T (Wq^T Wk) sn + 1 * (bq^T Wk) sn);
        # the row-constant logit terms cancel under softmax, Wq/Wk were folded
        # outside the kernel.
        msn = jnp.dot(m_ref[...], sn, preferred_element_type=jnp.float32,
                      precision=_HIGH)                               # (C, HW)
        rsn = jnp.dot(r_ref[...], sn, preferred_element_type=jnp.float32,
                      precision=_HIGH)                               # (1, HW)
        # TODO(synk): for large HW tile this flash-style over the style axis
        # (online softmax) instead of materializing the full (HW,HW) logits.
        logits = jnp.dot(jnp.transpose(cn), msn,
                         preferred_element_type=jnp.float32,
                         precision=_HIGH) + rsn                      # (HW, HW)
        logits = logits - jnp.max(logits, axis=-1, keepdims=True)
        e = jnp.exp(logits)
        attn = e * pl.reciprocal(jnp.sum(e, axis=-1, keepdims=True), approx=True)

        v = jnp.dot(wv_ref[...], s, preferred_element_type=jnp.float32,
                    precision=_HIGH) + bv_ref[...]                   # (C, HW)
        # out^T = A @ V^T: only the cheap (C,HW) operands get transposed,
        # never the (HW,HW) attention matrix.  bf16 operands, f32 accumulate.
        outT = jnp.dot(attn.astype(jnp.bfloat16),
                       jnp.transpose(v).astype(jnp.bfloat16),
                       preferred_element_type=jnp.float32)           # (HW, C)
        a_out = jnp.transpose(outT)                                  # (C, HW)

        # ---- reflect-pad 3x3 convs as ONE im2col matmul ----------------------
        edges = edge_ref[...]
        x_first = edges[0:1, :] == 1      # x == 0
        x_last = edges[1:2, :] == 1       # x == W-1
        y_first = edges[2:3, :] == 1      # y == 0
        y_last = edges[3:4, :] == 1       # y == H-1

        # Width-shifted (reflected) taps; wrap columns of the rolls are never
        # consumed (they sit exactly where the edge masks override).
        rp1 = jnp.roll(a_out, 1, axis=1)      # [:, i] <- [:, i-1]
        rm1 = jnp.roll(a_out, -1, axis=1)     # [:, i] <- [:, i+1]
        w_taps = (jnp.where(x_first, rm1, rp1),   # dx = 0
                  a_out,                          # dx = 1
                  jnp.where(x_last, rp1, rm1))    # dx = 2
        for dx in range(3):
            wt = w_taps[dx]
            rpw = jnp.roll(wt, W, axis=1)     # [:, i] <- [:, i-W]
            rmw = jnp.roll(wt, -W, axis=1)    # [:, i] <- [:, i+W]
            col_ref[(0 * 3 + dx) * C:(0 * 3 + dx + 1) * C, :] = \
                jnp.where(y_first, rmw, rpw)                        # dy = 0
            col_ref[(1 * 3 + dx) * C:(1 * 3 + dx + 1) * C, :] = wt  # dy = 1
            col_ref[(2 * 3 + dx) * C:(2 * 3 + dx + 1) * C, :] = \
                jnp.where(y_last, rpw, rmw)                         # dy = 2

        # one (2C, 9C) @ (9C, HW) matmul -> gamma rows then beta rows
        gb = jnp.dot(wgb_ref[...].astype(jnp.bfloat16),
                     col_ref[...].astype(jnp.bfloat16),
                     preferred_element_type=jnp.float32) + bgb_ref[...]
        gb = jnp.maximum(gb, 0.0)             # ReLU
        gamma = gb[:C, :]
        beta = gb[C:, :]

        # ---- AdaIN ----------------------------------------------------------
        shared = cn * sw_ref[...] + sb_ref[...]
        o_ref[0] = (shared * gamma + beta).astype(o_ref.dtype)

    return kernel


# ----------------------------- wrapper --------------------------------------

def meta_adain_forward(content, style, p):
    """MetaAdaIN forward: NCHW content/style -> NCHW output."""
    B, C, H, W = content.shape
    HW = H * W
    c2 = content.reshape(B, C, HW).astype(jnp.float32)
    s2 = style.reshape(B, C, HW).astype(jnp.float32)

    # Fold query/key 1x1 convs (softmax only depends on these combinations).
    m_qk = jnp.dot(p["wq"].T, p["wk"], precision=_HIGH)              # (C, C)
    r_qk = jnp.dot(p["bq"][None, :], p["wk"], precision=_HIGH)       # (1, C)

    # Stack gamma/beta 3x3 conv weights for one im2col matmul:
    # row block k = ky*3+kx (matches in-kernel tap order), inner = in-channel.
    def flat3x3(w):   # (O, I, 3, 3) -> (O, 9*I)
        return jnp.transpose(w, (0, 2, 3, 1)).reshape(C, 9 * C)

    w_gb = jnp.concatenate([flat3x3(p["gamma_w"]), flat3x3(p["beta_w"])], axis=0)
    b_gb = jnp.concatenate([p["gamma_b"], p["beta_b"]])[:, None]     # (2C, 1)

    # Edge masks for in-kernel reflect-pad taps (avoids int div/mod on VPU).
    xs = jnp.arange(HW, dtype=jnp.int32) % W
    ys = jnp.arange(HW, dtype=jnp.int32) // W
    edge = jnp.stack([xs == 0, xs == W - 1, ys == 0, ys == H - 1]).astype(jnp.int32)

    args = (c2, s2, edge, m_qk, r_qk,
            p["wv"], p["bv"][:, None], w_gb, b_gb,
            p["shared_w"][:, None], p["shared_b"][:, None])

    batch_spec = pl.BlockSpec((1, C, HW), lambda b: (b, 0, 0))

    def full_spec(a):
        return pl.BlockSpec(a.shape, lambda b, _n=a.ndim: (0,) * _n)

    in_specs = [batch_spec, batch_spec] + [full_spec(a) for a in args[2:]]

    flops = int(B * (4 * C * HW * HW          # logits + A @ V^T
                     + 36 * C * C * HW        # fused gamma/beta conv
                     + 6 * C * C * HW))       # folded K, V projection
    bytes_accessed = int(4 * (3 * B * C * HW + 4 * HW + 21 * C * C + 8 * C))
    cost = pl.CostEstimate(flops=flops,
                           transcendentals=int(B * HW * HW),
                           bytes_accessed=bytes_accessed)

    out = pl.pallas_call(
        _make_meta_adain_kernel(C, H, W),
        out_shape=jax.ShapeDtypeStruct((B, C, HW), jnp.float32),
        grid=(B,),
        in_specs=in_specs,
        out_specs=batch_spec,
        scratch_shapes=[pltpu.VMEM((9 * C, HW), jnp.float32)],   # im2col taps
        compiler_params=pltpu.CompilerParams(
            dimension_semantics=("parallel",),        # megacore over batch
            vmem_limit_bytes=32 * 1024 * 1024),
        cost_estimate=cost,
    )(*args)
    return out.reshape(B, C, H, W)


# ----------------------------- pure-JAX reference ----------------------------

def _calc_mean_std_ref(f):
    B, C = f.shape[:2]
    v = f.reshape(B, C, -1)
    mean = jnp.mean(v, axis=2)[:, :, None, None]
    var = jnp.var(v, axis=2, ddof=1)[:, :, None, None]
    return mean, jnp.sqrt(var + EPS)


def _mean_norm_ref(f):
    m, s = _calc_mean_std_ref(f)
    return (f - m) / s


def reference_forward(content, style, p):
    B, C, H, W = content.shape

    def conv1x1(x, w, b):
        return (jnp.einsum("oc,bchw->bohw", w, x, precision=_HIGH)
                + b[None, :, None, None])

    q = conv1x1(_mean_norm_ref(content), p["wq"], p["bq"])
    k = conv1x1(_mean_norm_ref(style), p["wk"], p["bk"])
    v = conv1x1(style, p["wv"], p["bv"])
    qf = q.reshape(B, C, -1).transpose(0, 2, 1)
    kf = k.reshape(B, C, -1)
    aw = jax.nn.softmax(jnp.einsum("bic,bcj->bij", qf, kf, precision=_HIGH),
                        axis=-1)
    vf = v.reshape(B, C, -1)
    style_feat = jnp.einsum("bcj,bij->bci", vf, aw,
                            precision=_HIGH).reshape(B, C, H, W)

    padded = jnp.pad(style_feat, ((0, 0), (0, 0), (1, 1), (1, 1)), mode="reflect")

    def conv3x3(x, w, b):
        y = lax.conv_general_dilated(x, w, (1, 1), "VALID",
                                     dimension_numbers=("NCHW", "OIHW", "NCHW"),
                                     precision=_HIGH)
        return y + b[None, :, None, None]

    gamma = jax.nn.relu(conv3x3(padded, p["gamma_w"], p["gamma_b"]))
    beta = jax.nn.relu(conv3x3(padded, p["beta_w"], p["beta_b"]))

    m, s = _calc_mean_std_ref(content)
    norm = (content - m) / s
    shared = (norm * p["shared_w"][None, :, None, None]
              + p["shared_b"][None, :, None, None])
    return shared * gamma + beta


# ----------------------------- main ------------------------------------------

if __name__ == "__main__":
    B, C, H, W = 2, 4, 16, 16

    key = jax.random.PRNGKey(0)
    ks = jax.random.split(key, 12)

    def xavier(k, shape, fan_in, fan_out):
        bound = (6.0 / (fan_in + fan_out)) ** 0.5
        return jax.random.uniform(k, shape, jnp.float32, -bound, bound)

    params = {
        # Attention 1x1 convs (weight stored as (C_out, C_in))
        "wq": xavier(ks[0], (C, C), C, C),
        "bq": jax.random.uniform(ks[1], (C,), jnp.float32, 0.0, 1.0),
        "wk": xavier(ks[2], (C, C), C, C),
        "bk": jax.random.uniform(ks[3], (C,), jnp.float32, 0.0, 1.0),
        "wv": xavier(ks[4], (C, C), C, C),
        "bv": jax.random.uniform(ks[5], (C,), jnp.float32, 0.0, 1.0),
        # 3x3 convs (O, I, 3, 3)
        "gamma_w": xavier(ks[6], (C, C, 3, 3), C * 9, C * 9),
        "gamma_b": jax.random.uniform(ks[7], (C,), jnp.float32, 0.0, 1.0),
        "beta_w": xavier(ks[8], (C, C, 3, 3), C * 9, C * 9),
        "beta_b": jax.random.uniform(ks[9], (C,), jnp.float32, 0.0, 1.0),
        # shared affine
        "shared_w": jnp.ones((C,), jnp.float32),
        "shared_b": jnp.zeros((C,), jnp.float32),
    }

    kc, ksy = jax.random.split(jax.random.PRNGKey(42))
    content = jax.random.normal(kc, (B, C, H, W), jnp.float32)
    style = jax.random.normal(ksy, (B, C, H, W), jnp.float32)

    out = jax.block_until_ready(meta_adain_forward(content, style, params))

    ref = reference_forward(content, style, params)
    assert out.shape == ref.shape == (B, C, H, W)
    max_err = float(jnp.max(jnp.abs(out - ref)))
    # Tolerance reflects bf16 operands on the A@V^T and im2col-conv matmuls.
    assert jnp.allclose(out, ref, atol=3e-2, rtol=3e-2), max_err

    print("KERNEL_OK")
</pallas_src>

<mosaic_0001>
module attributes {stable_mosaic.version = 11 : i64} {
  func.func @kernel(%arg0: i32, %arg1: memref<1x4x256xf32, #tpu.memory_space<vmem>>, %arg2: memref<1x4x256xf32, #tpu.memory_space<vmem>>, %arg3: memref<4x256xi32, #tpu.memory_space<vmem>>, %arg4: memref<4x4xf32, #tpu.memory_space<vmem>>, %arg5: memref<1x4xf32, #tpu.memory_space<vmem>>, %arg6: memref<4x4xf32, #tpu.memory_space<vmem>>, %arg7: memref<4x1xf32, #tpu.memory_space<vmem>>, %arg8: memref<8x36xf32, #tpu.memory_space<vmem>>, %arg9: memref<8x1xf32, #tpu.memory_space<vmem>>, %arg10: memref<4x1xf32, #tpu.memory_space<vmem>>, %arg11: memref<4x1xf32, #tpu.memory_space<vmem>>, %arg12: memref<1x4x256xf32, #tpu.memory_space<vmem>>, %arg13: memref<36x256xf32, #tpu.memory_space<vmem>>) attributes {dimension_semantics = [#tpu.dimension_semantics<parallel>], iteration_bounds = array<i64: 2>, scalar_prefetch = 0 : i64, scratch_operands = 1 : i64, tpu.core_type = #tpu.core_type<tc>, window_params = [{transform_indices = @transform_0, window_bounds = array<i64: 1, 4, 256>}, {transform_indices = @transform_1, window_bounds = array<i64: 1, 4, 256>}, {pipeline_mode = #tpu.pipeline_mode<synchronous>, transform_indices = @transform_2, window_bounds = array<i64: 4, 256>}, {pipeline_mode = #tpu.pipeline_mode<synchronous>, transform_indices = @transform_3, window_bounds = array<i64: 4, 4>}, {pipeline_mode = #tpu.pipeline_mode<synchronous>, transform_indices = @transform_4, window_bounds = array<i64: 1, 4>}, {pipeline_mode = #tpu.pipeline_mode<synchronous>, transform_indices = @transform_5, window_bounds = array<i64: 4, 4>}, {pipeline_mode = #tpu.pipeline_mode<synchronous>, transform_indices = @transform_6, window_bounds = array<i64: 4, 1>}, {pipeline_mode = #tpu.pipeline_mode<synchronous>, transform_indices = @transform_7, window_bounds = array<i64: 8, 36>}, {pipeline_mode = #tpu.pipeline_mode<synchronous>, transform_indices = @transform_8, window_bounds = array<i64: 8, 1>}, {pipeline_mode = #tpu.pipeline_mode<synchronous>, transform_indices = @transform_9, window_bounds = array<i64: 4, 1>}, {pipeline_mode = #tpu.pipeline_mode<synchronous>, transform_indices = @transform_10, window_bounds = array<i64: 4, 1>}, {transform_indices = @transform_11, window_bounds = array<i64: 1, 4, 256>}]} {
    %c0 = arith.constant 0 : index
    %c0_0 = arith.constant 0 : index
    %c0_1 = arith.constant 0 : index
    %0 = vector.load %arg1[%c0, %c0_0, %c0_1] : memref<1x4x256xf32, #tpu.memory_space<vmem>>, vector<1x4x256xf32>
    %1 = vector.shape_cast %0 : vector<1x4x256xf32> to vector<4x256xf32>
    %c0_2 = arith.constant 0 : index
    %c0_3 = arith.constant 0 : index
    %c0_4 = arith.constant 0 : index
    %2 = vector.load %arg2[%c0_2, %c0_3, %c0_4] : memref<1x4x256xf32, #tpu.memory_space<vmem>>, vector<1x4x256xf32>
    %3 = vector.shape_cast %2 : vector<1x4x256xf32> to vector<4x256xf32>
    %cst = arith.constant dense<0.000000e+00> : vector<4xf32>
    %4 = vector.multi_reduction <add>, %1, %cst [1] : vector<4x256xf32> to vector<4xf32>
    %5 = vector.shape_cast %4 : vector<4xf32> to vector<4x1xf32>
    %cst_5 = arith.constant 2.560000e+02 : f32
    %6 = vector.broadcast %cst_5 : f32 to vector<4x1xf32>
    %7 = arith.divf %5, %6 : vector<4x1xf32>
    %8 = vector.broadcast %7 : vector<4x1xf32> to vector<4x256xf32>
    %9 = arith.subf %1, %8 : vector<4x256xf32>
    %10 = arith.mulf %9, %9 : vector<4x256xf32>
    %cst_6 = arith.constant dense<0.000000e+00> : vector<4xf32>
    %11 = vector.multi_reduction <add>, %10, %cst_6 [1] : vector<4x256xf32> to vector<4xf32>
    %12 = vector.shape_cast %11 : vector<4xf32> to vector<4x1xf32>
    %cst_7 = arith.constant 0.00392156886 : f32
    %13 = vector.broadcast %cst_7 : f32 to vector<4x1xf32>
    %14 = arith.mulf %12, %13 : vector<4x1xf32>
    %cst_8 = arith.constant 9.99999974E-6 : f32
    %15 = vector.broadcast %cst_8 : f32 to vector<4x1xf32>
    %16 = arith.addf %14, %15 : vector<4x1xf32>
    %17 = math.rsqrt %16 : vector<4x1xf32>
    %18 = vector.broadcast %17 : vector<4x1xf32> to vector<4x256xf32>
    %19 = arith.mulf %9, %18 : vector<4x256xf32>
    %cst_9 = arith.constant dense<0.000000e+00> : vector<4xf32>
    %20 = vector.multi_reduction <add>, %3, %cst_9 [1] : vector<4x256xf32> to vector<4xf32>
    %21 = vector.shape_cast %20 : vector<4xf32> to vector<4x1xf32>
    %cst_10 = arith.constant 2.560000e+02 : f32
    %22 = vector.broadcast %cst_10 : f32 to vector<4x1xf32>
    %23 = arith.divf %21, %22 : vector<4x1xf32>
    %24 = vector.broadcast %23 : vector<4x1xf32> to vector<4x256xf32>
    %25 = arith.subf %3, %24 : vector<4x256xf32>
    %26 = arith.mulf %25, %25 : vector<4x256xf32>
    %cst_11 = arith.constant dense<0.000000e+00> : vector<4xf32>
    %27 = vector.multi_reduction <add>, %26, %cst_11 [1] : vector<4x256xf32> to vector<4xf32>
    %28 = vector.shape_cast %27 : vector<4xf32> to vector<4x1xf32>
    %cst_12 = arith.constant 0.00392156886 : f32
    %29 = vector.broadcast %cst_12 : f32 to vector<4x1xf32>
    %30 = arith.mulf %28, %29 : vector<4x1xf32>
    %cst_13 = arith.constant 9.99999974E-6 : f32
    %31 = vector.broadcast %cst_13 : f32 to vector<4x1xf32>
    %32 = arith.addf %30, %31 : vector<4x1xf32>
    %33 = math.rsqrt %32 : vector<4x1xf32>
    %34 = vector.broadcast %33 : vector<4x1xf32> to vector<4x256xf32>
    %35 = arith.mulf %25, %34 : vector<4x256xf32>
    %c0_14 = arith.constant 0 : index
    %c0_15 = arith.constant 0 : index
    %36 = vector.load %arg4[%c0_14, %c0_15] : memref<4x4xf32, #tpu.memory_space<vmem>>, vector<4x4xf32>
    %cst_16 = arith.constant dense<0.000000e+00> : vector<4x256xf32>
    %37 = tpu.matmul %36, %35, %cst_16 {dimension_numbers = #tpu.dot_dimension_numbers<[1], [0], [0], [1], [0, 0, 1, 1], [], []>, precision = #tpu.contract_precision<fp32>} : vector<4x4xf32>, vector<4x256xf32>, vector<4x256xf32> -> vector<4x256xf32>
    %c0_17 = arith.constant 0 : index
    %c0_18 = arith.constant 0 : index
    %38 = vector.load %arg5[%c0_17, %c0_18] : memref<1x4xf32, #tpu.memory_space<vmem>>, vector<1x4xf32>
    %cst_19 = arith.constant dense<0.000000e+00> : vector<1x256xf32>
    %39 = tpu.matmul %38, %35, %cst_19 {dimension_numbers = #tpu.dot_dimension_numbers<[1], [0], [0], [1], [0, 0, 1, 1], [], []>, precision = #tpu.contract_precision<fp32>} : vector<1x4xf32>, vector<4x256xf32>, vector<1x256xf32> -> vector<1x256xf32>
    %40 = tpu.transpose %19, [1, 0] : vector<4x256xf32> -> vector<256x4xf32>
    %cst_20 = arith.constant dense<0.000000e+00> : vector<256x256xf32>
    %41 = tpu.matmul %40, %37, %cst_20 {dimension_numbers = #tpu.dot_dimension_numbers<[1], [0], [0], [1], [0, 0, 1, 1], [], []>, precision = #tpu.contract_precision<fp32>} : vector<256x4xf32>, vector<4x256xf32>, vector<256x256xf32> -> vector<256x256xf32>
    %42 = vector.broadcast %39 : vector<1x256xf32> to vector<256x256xf32>
    %43 = arith.addf %41, %42 : vector<256x256xf32>
    %cst_21 = arith.constant dense<0xFF800000> : vector<256xf32>
    %44 = vector.multi_reduction <maximumf>, %43, %cst_21 [1] : vector<256x256xf32> to vector<256xf32>
    %45 = vector.shape_cast %44 : vector<256xf32> to vector<256x1xf32>
    %46 = vector.broadcast %45 : vector<256x1xf32> to vector<256x256xf32>
    %47 = arith.subf %43, %46 : vector<256x256xf32>
    %48 = math.exp %47 : vector<256x256xf32>
    %cst_22 = arith.constant dense<0.000000e+00> : vector<256xf32>
    %49 = vector.multi_reduction <add>, %48, %cst_22 [1] : vector<256x256xf32> to vector<256xf32>
    %50 = vector.shape_cast %49 : vector<256xf32> to vector<256x1xf32>
    %51 = tpu.reciprocal %50 {approx = true} : vector<256x1xf32> -> vector<256x1xf32>
    %52 = vector.broadcast %51 : vector<256x1xf32> to vector<256x256xf32>
    %53 = arith.mulf %48, %52 : vector<256x256xf32>
    %c0_23 = arith.constant 0 : index
    %c0_24 = arith.constant 0 : index
    %54 = vector.load %arg6[%c0_23, %c0_24] : memref<4x4xf32, #tpu.memory_space<vmem>>, vector<4x4xf32>
    %cst_25 = arith.constant dense<0.000000e+00> : vector<4x256xf32>
    %55 = tpu.matmul %54, %3, %cst_25 {dimension_numbers = #tpu.dot_dimension_numbers<[1], [0], [0], [1], [0, 0, 1, 1], [], []>, precision = #tpu.contract_precision<fp32>} : vector<4x4xf32>, vector<4x256xf32>, vector<4x256xf32> -> vector<4x256xf32>
    %c0_26 = arith.constant 0 : index
    %c0_27 = arith.constant 0 : index
    %56 = vector.load %arg7[%c0_26, %c0_27] : memref<4x1xf32, #tpu.memory_space<vmem>>, vector<4x1xf32>
    %57 = vector.broadcast %56 : vector<4x1xf32> to vector<4x256xf32>
    %58 = arith.addf %55, %57 : vector<4x256xf32>
    %59 = arith.truncf %53 : vector<256x256xf32> to vector<256x256xbf16>
    %60 = tpu.transpose %58, [1, 0] : vector<4x256xf32> -> vector<256x4xf32>
    %61 = arith.truncf %60 : vector<256x4xf32> to vector<256x4xbf16>
    %cst_28 = arith.constant dense<0.000000e+00> : vector<256x4xf32>
    %62 = tpu.matmul %59, %61, %cst_28 {dimension_numbers = #tpu.dot_dimension_numbers<[1], [0], [0], [1], [0, 0, 1, 1], [], []>} : vector<256x256xbf16>, vector<256x4xbf16>, vector<256x4xf32> -> vector<256x4xf32>
    %63 = tpu.transpose %62, [1, 0] : vector<256x4xf32> -> vector<4x256xf32>
    %c0_29 = arith.constant 0 : index
    %c0_30 = arith.constant 0 : index
    %64 = vector.load %arg3[%c0_29, %c0_30] : memref<4x256xi32, #tpu.memory_space<vmem>>, vector<4x256xi32>
    %65 = vector.extract_strided_slice %64 {offsets = [0, 0], sizes = [1, 256], strides = [1, 1]} : vector<4x256xi32> to vector<1x256xi32>
    %c1_i32 = arith.constant 1 : i32
    %66 = vector.broadcast %c1_i32 : i32 to vector<1x256xi32>
    %67 = arith.cmpi eq, %65, %66 : vector<1x256xi32>
    %68 = vector.extract_strided_slice %64 {offsets = [1, 0], sizes = [1, 256], strides = [1, 1]} : vector<4x256xi32> to vector<1x256xi32>
    %c1_i32_31 = arith.constant 1 : i32
    %69 = vector.broadcast %c1_i32_31 : i32 to vector<1x256xi32>
    %70 = arith.cmpi eq, %68, %69 : vector<1x256xi32>
    %71 = vector.extract_strided_slice %64 {offsets = [2, 0], sizes = [1, 256], strides = [1, 1]} : vector<4x256xi32> to vector<1x256xi32>
    %c1_i32_32 = arith.constant 1 : i32
    %72 = vector.broadcast %c1_i32_32 : i32 to vector<1x256xi32>
    %73 = arith.cmpi eq, %71, %72 : vector<1x256xi32>
    %74 = vector.extract_strided_slice %64 {offsets = [3, 0], sizes = [1, 256], strides = [1, 1]} : vector<4x256xi32> to vector<1x256xi32>
    %c1_i32_33 = arith.constant 1 : i32
    %75 = vector.broadcast %c1_i32_33 : i32 to vector<1x256xi32>
    %76 = arith.cmpi eq, %74, %75 : vector<1x256xi32>
    %77 = vector.extract_strided_slice %63 {offsets = [0, 255], sizes = [4, 1], strides = [1, 1]} : vector<4x256xf32> to vector<4x1xf32>
    %78 = vector.extract_strided_slice %63 {offsets = [0, 0], sizes = [4, 255], strides = [1, 1]} : vector<4x256xf32> to vector<4x255xf32>
    %79 = tpu.concatenate %77, %78 in 1 : vector<4x1xf32>, vector<4x255xf32> -> vector<4x256xf32>
    %80 = vector.extract_strided_slice %63 {offsets = [0, 1], sizes = [4, 255], strides = [1, 1]} : vector<4x256xf32> to vector<4x255xf32>
    %81 = vector.extract_strided_slice %63 {offsets = [0, 0], sizes = [4, 1], strides = [1, 1]} : vector<4x256xf32> to vector<4x1xf32>
    %82 = tpu.concatenate %80, %81 in 1 : vector<4x255xf32>, vector<4x1xf32> -> vector<4x256xf32>
    %83 = vector.shape_cast %67 : vector<1x256xi1> to vector<1x256xi1>
    %84 = vector.broadcast %83 : vector<1x256xi1> to vector<4x256xi1>
    %85 = arith.select %84, %82, %79 : vector<4x256xi1>, vector<4x256xf32>
    %86 = vector.shape_cast %70 : vector<1x256xi1> to vector<1x256xi1>
    %87 = vector.broadcast %86 : vector<1x256xi1> to vector<4x256xi1>
    %88 = arith.select %87, %79, %82 : vector<4x256xi1>, vector<4x256xf32>
    %89 = vector.extract_strided_slice %85 {offsets = [0, 240], sizes = [4, 16], strides = [1, 1]} : vector<4x256xf32> to vector<4x16xf32>
    %90 = vector.extract_strided_slice %85 {offsets = [0, 0], sizes = [4, 240], strides = [1, 1]} : vector<4x256xf32> to vector<4x240xf32>
    %91 = tpu.concatenate %89, %90 in 1 : vector<4x16xf32>, vector<4x240xf32> -> vector<4x256xf32>
    %92 = vector.extract_strided_slice %85 {offsets = [0, 16], sizes = [4, 240], strides = [1, 1]} : vector<4x256xf32> to vector<4x240xf32>
    %93 = vector.extract_strided_slice %85 {offsets = [0, 0], sizes = [4, 16], strides = [1, 1]} : vector<4x256xf32> to vector<4x16xf32>
    %94 = tpu.concatenate %92, %93 in 1 : vector<4x240xf32>, vector<4x16xf32> -> vector<4x256xf32>
    %95 = vector.shape_cast %73 : vector<1x256xi1> to vector<1x256xi1>
    %96 = vector.broadcast %95 : vector<1x256xi1> to vector<4x256xi1>
    %97 = arith.select %96, %94, %91 : vector<4x256xi1>, vector<4x256xf32>
    %c0_34 = arith.constant 0 : index
    %c0_35 = arith.constant 0 : index
    %98 = vector.load %arg13[%c0_34, %c0_35] : memref<36x256xf32, #tpu.memory_space<vmem>>, vector<4x256xf32>
    tpu.vector_store %arg13[%c0_34, %c0_35], %97 {strides = array<i32>} : memref<36x256xf32, #tpu.memory_space<vmem>>, vector<4x256xf32>,
    %c12 = arith.constant 12 : index
    %c0_36 = arith.constant 0 : index
    %99 = vector.load %arg13[%c12, %c0_36] : memref<36x256xf32, #tpu.memory_space<vmem>>, vector<4x256xf32>
    tpu.vector_store %arg13[%c12, %c0_36], %85 {strides = array<i32>} : memref<36x256xf32, #tpu.memory_space<vmem>>, vector<4x256xf32>,
    %100 = vector.shape_cast %76 : vector<1x256xi1> to vector<1x256xi1>
    %101 = vector.broadcast %100 : vector<1x256xi1> to vector<4x256xi1>
    %102 = arith.select %101, %91, %94 : vector<4x256xi1>, vector<4x256xf32>
    %c24 = arith.constant 24 : index
    %c0_37 = arith.constant 0 : index
    %103 = vector.load %arg13[%c24, %c0_37] : memref<36x256xf32, #tpu.memory_space<vmem>>, vector<4x256xf32>
    tpu.vector_store %arg13[%c24, %c0_37], %102 {strides = array<i32>} : memref<36x256xf32, #tpu.memory_space<vmem>>, vector<4x256xf32>,
    %104 = vector.extract_strided_slice %63 {offsets = [0, 240], sizes = [4, 16], strides = [1, 1]} : vector<4x256xf32> to vector<4x16xf32>
    %105 = vector.extract_strided_slice %63 {offsets = [0, 0], sizes = [4, 240], strides = [1, 1]} : vector<4x256xf32> to vector<4x240xf32>
    %106 = tpu.concatenate %104, %105 in 1 : vector<4x16xf32>, vector<4x240xf32> -> vector<4x256xf32>
    %107 = vector.extract_strided_slice %63 {offsets = [0, 16], sizes = [4, 240], strides = [1, 1]} : vector<4x256xf32> to vector<4x240xf32>
    %108 = vector.extract_strided_slice %63 {offsets = [0, 0], sizes = [4, 16], strides = [1, 1]} : vector<4x256xf32> to vector<4x16xf32>
    %109 = tpu.concatenate %107, %108 in 1 : vector<4x240xf32>, vector<4x16xf32> -> vector<4x256xf32>
    %110 = vector.shape_cast %73 : vector<1x256xi1> to vector<1x256xi1>
    %111 = vector.broadcast %110 : vector<1x256xi1> to vector<4x256xi1>
    %112 = arith.select %111, %109, %106 : vector<4x256xi1>, vector<4x256xf32>
    %c4 = arith.constant 4 : index
    %c0_38 = arith.constant 0 : index
    %113 = vector.load %arg13[%c4, %c0_38] : memref<36x256xf32, #tpu.memory_space<vmem>>, vector<4x256xf32>
    tpu.vector_store %arg13[%c4, %c0_38], %112 {strides = array<i32>} : memref<36x256xf32, #tpu.memory_space<vmem>>, vector<4x256xf32>,
    %c16 = arith.constant 16 : index
    %c0_39 = arith.constant 0 : index
    %114 = vector.load %arg13[%c16, %c0_39] : memref<36x256xf32, #tpu.memory_space<vmem>>, vector<4x256xf32>
    tpu.vector_store %arg13[%c16, %c0_39], %63 {strides = array<i32>} : memref<36x256xf32, #tpu.memory_space<vmem>>, vector<4x256xf32>,
    %115 = vector.shape_cast %76 : vector<1x256xi1> to vector<1x256xi1>
    %116 = vector.broadcast %115 : vector<1x256xi1> to vector<4x256xi1>
    %117 = arith.select %116, %106, %109 : vector<4x256xi1>, vector<4x256xf32>
    %c28 = arith.constant 28 : index
    %c0_40 = arith.constant 0 : index
    %118 = vector.load %arg13[%c28, %c0_40] : memref<36x256xf32, #tpu.memory_space<vmem>>, vector<4x256xf32>
    tpu.vector_store %arg13[%c28, %c0_40], %117 {strides = array<i32>} : memref<36x256xf32, #tpu.memory_space<vmem>>, vector<4x256xf32>,
    %119 = vector.extract_strided_slice %88 {offsets = [0, 240], sizes = [4, 16], strides = [1, 1]} : vector<4x256xf32> to vector<4x16xf32>
    %120 = vector.extract_strided_slice %88 {offsets = [0, 0], sizes = [4, 240], strides = [1, 1]} : vector<4x256xf32> to vector<4x240xf32>
    %121 = tpu.concatenate %119, %120 in 1 : vector<4x16xf32>, vector<4x240xf32> -> vector<4x256xf32>
    %122 = vector.extract_strided_slice %88 {offsets = [0, 16], sizes = [4, 240], strides = [1, 1]} : vector<4x256xf32> to vector<4x240xf32>
    %123 = vector.extract_strided_slice %88 {offsets = [0, 0], sizes = [4, 16], strides = [1, 1]} : vector<4x256xf32> to vector<4x16xf32>
    %124 = tpu.concatenate %122, %123 in 1 : vector<4x240xf32>, vector<4x16xf32> -> vector<4x256xf32>
    %125 = vector.shape_cast %73 : vector<1x256xi1> to vector<1x256xi1>
    %126 = vector.broadcast %125 : vector<1x256xi1> to vector<4x256xi1>
    %127 = arith.select %126, %124, %121 : vector<4x256xi1>, vector<4x256xf32>
    %c8 = arith.constant 8 : index
    %c0_41 = arith.constant 0 : index
    %128 = vector.load %arg13[%c8, %c0_41] : memref<36x256xf32, #tpu.memory_space<vmem>>, vector<4x256xf32>
    tpu.vector_store %arg13[%c8, %c0_41], %127 {strides = array<i32>} : memref<36x256xf32, #tpu.memory_space<vmem>>, vector<4x256xf32>,
    %c20 = arith.constant 20 : index
    %c0_42 = arith.constant 0 : index
    %129 = vector.load %arg13[%c20, %c0_42] : memref<36x256xf32, #tpu.memory_space<vmem>>, vector<4x256xf32>
    tpu.vector_store %arg13[%c20, %c0_42], %88 {strides = array<i32>} : memref<36x256xf32, #tpu.memory_space<vmem>>, vector<4x256xf32>,
    %130 = vector.shape_cast %76 : vector<1x256xi1> to vector<1x256xi1>
    %131 = vector.broadcast %130 : vector<1x256xi1> to vector<4x256xi1>
    %132 = arith.select %131, %121, %124 : vector<4x256xi1>, vector<4x256xf32>
    %c32 = arith.constant 32 : index
    %c0_43 = arith.constant 0 : index
    %133 = vector.load %arg13[%c32, %c0_43] : memref<36x256xf32, #tpu.memory_space<vmem>>, vector<4x256xf32>
    tpu.vector_store %arg13[%c32, %c0_43], %132 {strides = array<i32>} : memref<36x256xf32, #tpu.memory_space<vmem>>, vector<4x256xf32>,
    %c0_44 = arith.constant 0 : index
    %c0_45 = arith.constant 0 : index
    %134 = vector.load %arg8[%c0_44, %c0_45] : memref<8x36xf32, #tpu.memory_space<vmem>>, vector<8x36xf32>
    %135 = arith.truncf %134 : vector<8x36xf32> to vector<8x36xbf16>
    %c0_46 = arith.constant 0 : index
    %c0_47 = arith.constant 0 : index
    %136 = vector.load %arg13[%c0_46, %c0_47] : memref<36x256xf32, #tpu.memory_space<vmem>>, vector<36x256xf32>
    %137 = arith.truncf %136 : vector<36x256xf32> to vector<36x256xbf16>
    %cst_48 = arith.constant dense<0.000000e+00> : vector<8x256xf32>
    %138 = tpu.matmul %135, %137, %cst_48 {dimension_numbers = #tpu.dot_dimension_numbers<[1], [0], [0], [1], [0, 0, 1, 1], [], []>} : vector<8x36xbf16>, vector<36x256xbf16>, vector<8x256xf32> -> vector<8x256xf32>
    %c0_49 = arith.constant 0 : index
    %c0_50 = arith.constant 0 : index
    %139 = vector.load %arg9[%c0_49, %c0_50] : memref<8x1xf32, #tpu.memory_space<vmem>>, vector<8x1xf32>
    %140 = vector.broadcast %139 : vector<8x1xf32> to vector<8x256xf32>
    %141 = arith.addf %138, %140 : vector<8x256xf32>
    %cst_51 = arith.constant 0.000000e+00 : f32
    %142 = vector.broadcast %cst_51 : f32 to vector<8x256xf32>
    %143 = arith.maximumf %141, %142 : vector<8x256xf32>
    %144 = vector.extract_strided_slice %143 {offsets = [0, 0], sizes = [4, 256], strides = [1, 1]} : vector<8x256xf32> to vector<4x256xf32>
    %145 = vector.extract_strided_slice %143 {offsets = [4, 0], sizes = [4, 256], strides = [1, 1]} : vector<8x256xf32> to vector<4x256xf32>
    %c0_52 = arith.constant 0 : index
    %c0_53 = arith.constant 0 : index
    %146 = vector.load %arg10[%c0_52, %c0_53] : memref<4x1xf32, #tpu.memory_space<vmem>>, vector<4x1xf32>
    %147 = vector.broadcast %146 : vector<4x1xf32> to vector<4x256xf32>
    %148 = arith.mulf %19, %147 : vector<4x256xf32>
    %c0_54 = arith.constant 0 : index
    %c0_55 = arith.constant 0 : index
    %149 = vector.load %arg11[%c0_54, %c0_55] : memref<4x1xf32, #tpu.memory_space<vmem>>, vector<4x1xf32>
    %150 = vector.broadcast %149 : vector<4x1xf32> to vector<4x256xf32>
    %151 = arith.addf %148, %150 : vector<4x256xf32>
    %152 = arith.mulf %151, %144 : vector<4x256xf32>
    %153 = arith.addf %152, %145 : vector<4x256xf32>
    %c0_56 = arith.constant 0 : index
    %c0_57 = arith.constant 0 : index
    %c0_58 = arith.constant 0 : index
    %154 = vector.load %arg12[%c0_56, %c0_57, %c0_58] : memref<1x4x256xf32, #tpu.memory_space<vmem>>, vector<1x4x256xf32>
    %155 = vector.shape_cast %154 : vector<1x4x256xf32> to vector<4x256xf32>
    %156 = vector.shape_cast %153 : vector<4x256xf32> to vector<1x4x256xf32>
    tpu.vector_store %arg12[%c0_56, %c0_57, %c0_58], %156 {strides = array<i32>} : memref<1x4x256xf32, #tpu.memory_space<vmem>>, vector<1x4x256xf32>,
    return
  }
  func.func @transform_0(%arg0: i32) -> (i32, i32, i32) {
    %c0_i32 = arith.constant 0 : i32
    %c0_i32_0 = arith.constant 0 : i32
    %c0_i32_1 = arith.constant 0 : i32
    return %arg0, %c0_i32, %c0_i32_0 : i32, i32, i32
  }
  func.func @transform_1(%arg0: i32) -> (i32, i32, i32) {
    %c0_i32 = arith.constant 0 : i32
    %c0_i32_0 = arith.constant 0 : i32
    %c0_i32_1 = arith.constant 0 : i32
    return %arg0, %c0_i32, %c0_i32_0 : i32, i32, i32
  }
  func.func @transform_2(%arg0: i32) -> (i32, i32) {
    %c0_i32 = arith.constant 0 : i32
    %c0_i32_0 = arith.constant 0 : i32
    %c0_i32_1 = arith.constant 0 : i32
    return %c0_i32, %c0_i32_0 : i32, i32
  }
  func.func @transform_3(%arg0: i32) -> (i32, i32) {
    %c0_i32 = arith.constant 0 : i32
    %c0_i32_0 = arith.constant 0 : i32
    %c0_i32_1 = arith.constant 0 : i32
    return %c0_i32, %c0_i32_0 : i32, i32
  }
  func.func @transform_4(%arg0: i32) -> (i32, i32) {
    %c0_i32 = arith.constant 0 : i32
    %c0_i32_0 = arith.constant 0 : i32
    %c0_i32_1 = arith.constant 0 : i32
    return %c0_i32, %c0_i32_0 : i32, i32
  }
  func.func @transform_5(%arg0: i32) -> (i32, i32) {
    %c0_i32 = arith.constant 0 : i32
    %c0_i32_0 = arith.constant 0 : i32
    %c0_i32_1 = arith.constant 0 : i32
    return %c0_i32, %c0_i32_0 : i32, i32
  }
  func.func @transform_6(%arg0: i32) -> (i32, i32) {
    %c0_i32 = arith.constant 0 : i32
    %c0_i32_0 = arith.constant 0 : i32
    %c0_i32_1 = arith.constant 0 : i32
    return %c0_i32, %c0_i32_0 : i32, i32
  }
  func.func @transform_7(%arg0: i32) -> (i32, i32) {
    %c0_i32 = arith.constant 0 : i32
    %c0_i32_0 = arith.constant 0 : i32
    %c0_i32_1 = arith.constant 0 : i32
    return %c0_i32, %c0_i32_0 : i32, i32
  }
  func.func @transform_8(%arg0: i32) -> (i32, i32) {
    %c0_i32 = arith.constant 0 : i32
    %c0_i32_0 = arith.constant 0 : i32
    %c0_i32_1 = arith.constant 0 : i32
    return %c0_i32, %c0_i32_0 : i32, i32
  }
  func.func @transform_9(%arg0: i32) -> (i32, i32) {
    %c0_i32 = arith.constant 0 : i32
    %c0_i32_0 = arith.constant 0 : i32
    %c0_i32_1 = arith.constant 0 : i32
    return %c0_i32, %c0_i32_0 : i32, i32
  }
  func.func @transform_10(%arg0: i32) -> (i32, i32) {
    %c0_i32 = arith.constant 0 : i32
    %c0_i32_0 = arith.constant 0 : i32
    %c0_i32_1 = arith.constant 0 : i32
    return %c0_i32, %c0_i32_0 : i32, i32
  }
  func.func @transform_11(%arg0: i32) -> (i32, i32, i32) {
    %c0_i32 = arith.constant 0 : i32
    %c0_i32_0 = arith.constant 0 : i32
    %c0_i32_1 = arith.constant 0 : i32
    return %arg0, %c0_i32, %c0_i32_0 : i32, i32, i32
  }
}

</mosaic_0001>

<llo_original>
// kernel: tpu_custom_call.1
$region0: #{tpu_custom_call.1}
  #allocation0 [shape = 'u32[]', space=smem, size = 0x4, offset = 0x4, fixed_abs, tag = 'smem constant byte address 0x4 - core index']
  #allocation1 [shape = 'u32[144,128]{1,0:T(1,128)}', space=vmem, size = 0x12000, scoped, tag = 'internal scratch']
  #allocation2 [shape = 'f32[36,256]{1,0:T(8,128)}', space=vmem, size = 0xa000, scoped, tag = 'scratch operand']
  %s0 = inlined_call_operand.hbm [shape: f32[2,4,256], index: 0, kind: input, shape index: {}]
  %s1 = inlined_call_operand.hbm [shape: f32[2,4,256], index: 1, kind: input, shape index: {}]
  %s2 = inlined_call_operand.vmem [shape: s32[4,256], index: 2, kind: input, shape index: {}]
  %s3 = inlined_call_operand.vmem [shape: f32[4,4], index: 3, kind: input, shape index: {}]
  %s4 = inlined_call_operand.vmem [shape: f32[1,4], index: 4, kind: input, shape index: {}]
  %s5 = inlined_call_operand.vmem [shape: f32[4,4], index: 5, kind: input, shape index: {}]
  %s6 = inlined_call_operand.vmem [shape: f32[4,1], index: 6, kind: input, shape index: {}]
  %s7 = inlined_call_operand.vmem [shape: f32[8,36], index: 7, kind: input, shape index: {}]
  %s8 = inlined_call_operand.vmem [shape: f32[8,1], index: 8, kind: input, shape index: {}]
  %s9 = inlined_call_operand.vmem [shape: f32[4,1], index: 9, kind: input, shape index: {}]
  %s10 = inlined_call_operand.vmem [shape: f32[4,1], index: 10, kind: input, shape index: {}]
  %s11 = inlined_call_operand.hbm [shape: f32[2,4,256], index: 11, kind: output, shape index: {}]
  %s12 = sld [smem:[#allocation0]]
  $region85: #{tpu_custom_call.1} parent=0
    _
  %s14 = ssub.s32 1, %s12
  %s15 = scalar_select 0, %s14, %s12
  $region1: #{tpu_custom_call.1} parent=0
    #allocation3 [shape = 'u8[8192]{0}', space=vmem, size = 0x2000, scoped, tag = 'input window, operand 0']
    #allocation4 [shape = 's32[2]{0}', space=sflag, size = 0x8, scoped, tag = 'scoped memory for tpu_custom_call.1']
    #allocation5 [shape = 's32[2]{0}', space=sflag, size = 0x8, scoped, tag = 'scoped memory for tpu_custom_call.1']
    #allocation6 [shape = 'u8[8192]{0}', space=vmem, size = 0x2000, scoped, tag = 'input window, operand 1']
    #allocation7 [shape = 's32[2]{0}', space=sflag, size = 0x8, scoped, tag = 'scoped memory for tpu_custom_call.1']
    #allocation8 [shape = 'u8[8192]{0}', space=vmem, size = 0x2000, scoped, tag = 'output window, operand 0']
    %16 = vsyncpa [#allocation4], 0
    %s17 = scalar_lea.sflag [#allocation4], 1
    %18 = vsyncpa %s17, 0
    %19 = vsyncpa [#allocation7], 0
    %s20 = scalar_lea.sflag [#allocation7], 1
    %21 = vsyncpa %s20, 0
    %22 = vsyncpa [#allocation5], 0
    %s23 = scalar_lea.sflag [#allocation5], 1
    %24 = vsyncpa %s23, 0
    loop: start=0, step=1, limit=4
    $region2: #{tpu_custom_call.1} parent=1 // loop_pre_header
      _
    $region3: #{tpu_custom_call.1} parent=1 // loop_header
      %s26 = sphi 0, %s30
      %p27 = scmp.ge.s32.totalorder %s26, 4
      %s36 = sphi 0, %s38
      %s39 = sphi 0, %s36
      %s40 = sphi 0, %s39
      %s56 = sphi 0, %s40
      %s62 = sphi 0, %s64
      %s65 = sphi 0, %s62
      %s66 = sphi 0, %s65
      %s82 = sphi 0, %s66
      %s86 = sphi 0, %s86
      %s88 = sphi 0, %s86
      %s89 = sphi 0, %s88
      %s103 = sphi 0, %s89
      %s107 = sphi 0, %s107
      %s109 = sphi 0, %s107
      %s110 = sphi 0, %s109
      %s124 = sphi 0, %s110
      %s128 = sphi 0, %s128
      %s130 = sphi 0, %s128
      %s131 = sphi 0, %s130
      %s145 = sphi 0, %s131
      %s149 = sphi 0, %s149
      %s151 = sphi 0, %s149
      %s152 = sphi 0, %s151
      %s166 = sphi 0, %s152
      %s170 = sphi 0, %s170
      %s172 = sphi 0, %s170
      %s173 = sphi 0, %s172
      %s187 = sphi 0, %s173
      %s191 = sphi 0, %s191
      %s193 = sphi 0, %s191
      %s194 = sphi 0, %s193
      %s208 = sphi 0, %s194
      %s212 = sphi 0, %s212
      %s214 = sphi 0, %s212
      %s215 = sphi 0, %s214
      %s229 = sphi 0, %s215
      %s233 = sphi 0, %s233
      %s235 = sphi 0, %s233
      %s236 = sphi 0, %s235
      %s250 = sphi 0, %s236
      %s254 = sphi 0, %s254
      %s256 = sphi 0, %s254
      %s257 = sphi 0, %s256
      %s271 = sphi 0, %s257
      %s277 = sphi 0, %s279
      %s280 = sphi 0, %s277
      %s281 = sphi 0, %s280
      %s297 = sphi 0, %s281
    $region4: #{tpu_custom_call.1} parent=1 // loop_header_branch
      %29 = sbr.rel (%p27) target = $region8
    $region5: #{tpu_custom_call.1} parent=1 // loop_body
      %s31 = ssub.s32 %s26, 1
      %s32 = ssub.s32 %s26, 2
      %s33 = sadd.s32 %s26, 1
      %s34 = ssub.s32 %s26, %s33
      %p35 = scmp.eq.s32.totalorder %s34, 0
      %s37 = sadd.s32 %s36, 1
      %s38 = scalar_select %p35, %s36, %s37
      %p41 = pneg %p35
      %p42 = scmp.eq.s32.totalorder %s26, 1
      %p43 = por %p41, %p42
      %p44 = scmp.ne.s32.totalorder %s36, %s39
      %p45 = scmp.eq.s32.totalorder %s26, 0
      %p46 = por %p44, %p45
      %p47 = scmp.ne.s32.totalorder %s36, %s39
      %p48 = scmp.eq.s32.totalorder %s31, 1
      %p49 = por %p47, %p48
      %p50 = scmp.ne.s32.totalorder %s39, %s40
      %p51 = scmp.eq.s32.totalorder %s31, 0
      %p52 = por %p50, %p51
      %p53 = scmp.ne.s32.totalorder %s39, %s40
      %p54 = scmp.eq.s32.totalorder %s32, 1
      %p55 = por %p53, %p54
      %p57 = scmp.ne.s32.totalorder %s40, %s56
      %p58 = scmp.eq.s32.totalorder %s32, 0
      %p59 = por %p57, %p58
      %s60 = ssub.s32 %s26, %s33
      %p61 = scmp.eq.s32.totalorder %s60, 0
      %s63 = sadd.s32 %s62, 1
      %s64 = scalar_select %p61, %s62, %s63
      %p67 = pneg %p61
      %p68 = scmp.eq.s32.totalorder %s26, 1
      %p69 = por %p67, %p68
      %p70 = scmp.ne.s32.totalorder %s62, %s65
      %p71 = scmp.eq.s32.totalorder %s26, 0
      %p72 = por %p70, %p71
      %p73 = scmp.ne.s32.totalorder %s62, %s65
      %p74 = scmp.eq.s32.totalorder %s31, 1
      %p75 = por %p73, %p74
      %p76 = scmp.ne.s32.totalorder %s65, %s66
      %p77 = scmp.eq.s32.totalorder %s31, 0
      %p78 = por %p76, %p77
      %p79 = scmp.ne.s32.totalorder %s65, %s66
      %p80 = scmp.eq.s32.totalorder %s32, 1
      %p81 = por %p79, %p80
      %p83 = scmp.ne.s32.totalorder %s66, %s82
      %p84 = scmp.eq.s32.totalorder %s32, 0
      %p85 = por %p83, %p84
      %s87 = sadd.s32 %s86, 1
      %p90 = scmp.eq.s32.totalorder %s26, 1
      %p91 = scmp.ne.s32.totalorder %s86, %s88
      %p92 = scmp.eq.s32.totalorder %s26, 0
      %p93 = por %p91, %p92
      %p94 = scmp.ne.s32.totalorder %s86, %s88
      %p95 = scmp.eq.s32.totalorder %s31, 1
      %p96 = por %p94, %p95
      %p97 = scmp.ne.s32.totalorder %s88, %s89
      %p98 = scmp.eq.s32.totalorder %s31, 0
      %p99 = por %p97, %p98
      %p100 = scmp.ne.s32.totalorder %s88, %s89
      %p101 = scmp.eq.s32.totalorder %s32, 1
      %p102 = por %p100, %p101
      %p104 = scmp.ne.s32.totalorder %s89, %s103
      %p105 = scmp.eq.s32.totalorder %s32, 0
      %p106 = por %p104, %p105
      %s108 = sadd.s32 %s107, 1
      %p111 = scmp.eq.s32.totalorder %s26, 1
      %p112 = scmp.ne.s32.totalorder %s107, %s109
      %p113 = scmp.eq.s32.totalorder %s26, 0
      %p114 = por %p112, %p113
      %p115 = scmp.ne.s32.totalorder %s107, %s109
      %p116 = scmp.eq.s32.totalorder %s31, 1
      %p117 = por %p115, %p116
      %p118 = scmp.ne.s32.totalorder %s109, %s110
      %p119 = scmp.eq.s32.totalorder %s31, 0
      %p120 = por %p118, %p119
      %p121 = scmp.ne.s32.totalorder %s109, %s110
      %p122 = scmp.eq.s32.totalorder %s32, 1
      %p123 = por %p121, %p122
      %p125 = scmp.ne.s32.totalorder %s110, %s124
      %p126 = scmp.eq.s32.totalorder %s32, 0
      %p127 = por %p125, %p126
      %s129 = sadd.s32 %s128, 1
      %p132 = scmp.eq.s32.totalorder %s26, 1
      %p133 = scmp.ne.s32.totalorder %s128, %s130
      %p134 = scmp.eq.s32.totalorder %s26, 0
      %p135 = por %p133, %p134
      %p136 = scmp.ne.s32.totalorder %s128, %s130
      %p137 = scmp.eq.s32.totalorder %s31, 1
      %p138 = por %p136, %p137
      %p139 = scmp.ne.s32.totalorder %s130, %s131
      %p140 = scmp.eq.s32.totalorder %s31, 0
      %p141 = por %p139, %p140
      %p142 = scmp.ne.s32.totalorder %s130, %s131
      %p143 = scmp.eq.s32.totalorder %s32, 1
      %p144 = por %p142, %p143
      %p146 = scmp.ne.s32.totalorder %s131, %s145
      %p147 = scmp.eq.s32.totalorder %s32, 0
      %p148 = por %p146, %p147
      %s150 = sadd.s32 %s149, 1
      %p153 = scmp.eq.s32.totalorder %s26, 1
      %p154 = scmp.ne.s32.totalorder %s149, %s151
      %p155 = scmp.eq.s32.totalorder %s26, 0
      %p156 = por %p154, %p155
      %p157 = scmp.ne.s32.totalorder %s149, %s151
      %p158 = scmp.eq.s32.totalorder %s31, 1
      %p159 = por %p157, %p158
      %p160 = scmp.ne.s32.totalorder %s151, %s152
      %p161 = scmp.eq.s32.totalorder %s31, 0
      %p162 = por %p160, %p161
      %p163 = scmp.ne.s32.totalorder %s151, %s152
      %p164 = scmp.eq.s32.totalorder %s32, 1
      %p165 = por %p163, %p164
      %p167 = scmp.ne.s32.totalorder %s152, %s166
      %p168 = scmp.eq.s32.totalorder %s32, 0
      %p169 = por %p167, %p168
      %s171 = sadd.s32 %s170, 1
      %p174 = scmp.eq.s32.totalorder %s26, 1
      %p175 = scmp.ne.s32.totalorder %s170, %s172
      %p176 = scmp.eq.s32.totalorder %s26, 0
      %p177 = por %p175, %p176
      %p178 = scmp.ne.s32.totalorder %s170, %s172
      %p179 = scmp.eq.s32.totalorder %s31, 1
      %p180 = por %p178, %p179
      %p181 = scmp.ne.s32.totalorder %s172, %s173
      %p182 = scmp.eq.s32.totalorder %s31, 0
      %p183 = por %p181, %p182
      %p184 = scmp.ne.s32.totalorder %s172, %s173
      %p185 = scmp.eq.s32.totalorder %s32, 1
      %p186 = por %p184, %p185
      %p188 = scmp.ne.s32.totalorder %s173, %s187
      %p189 = scmp.eq.s32.totalorder %s32, 0
      %p190 = por %p188, %p189
      %s192 = sadd.s32 %s191, 1
      %p195 = scmp.eq.s32.totalorder %s26, 1
      %p196 = scmp.ne.s32.totalorder %s191, %s193
      %p197 = scmp.eq.s32.totalorder %s26, 0
      %p198 = por %p196, %p197
      %p199 = scmp.ne.s32.totalorder %s191, %s193
      %p200 = scmp.eq.s32.totalorder %s31, 1
      %p201 = por %p199, %p200
      %p202 = scmp.ne.s32.totalorder %s193, %s194
      %p203 = scmp.eq.s32.totalorder %s31, 0
      %p204 = por %p202, %p203
      %p205 = scmp.ne.s32.totalorder %s193, %s194
      %p206 = scmp.eq.s32.totalorder %s32, 1
      %p207 = por %p205, %p206
      %p209 = scmp.ne.s32.totalorder %s194, %s208
      %p210 = scmp.eq.s32.totalorder %s32, 0
      %p211 = por %p209, %p210
      %s213 = sadd.s32 %s212, 1
      %p216 = scmp.eq.s32.totalorder %s26, 1
      %p217 = scmp.ne.s32.totalorder %s212, %s214
      %p218 = scmp.eq.s32.totalorder %s26, 0
      %p219 = por %p217, %p218
      %p220 = scmp.ne.s32.totalorder %s212, %s214
      %p221 = scmp.eq.s32.totalorder %s31, 1
      %p222 = por %p220, %p221
      %p223 = scmp.ne.s32.totalorder %s214, %s215
      %p224 = scmp.eq.s32.totalorder %s31, 0
      %p225 = por %p223, %p224
      %p226 = scmp.ne.s32.totalorder %s214, %s215
      %p227 = scmp.eq.s32.totalorder %s32, 1
      %p228 = por %p226, %p227
      %p230 = scmp.ne.s32.totalorder %s215, %s229
      %p231 = scmp.eq.s32.totalorder %s32, 0
      %p232 = por %p230, %p231
      %s234 = sadd.s32 %s233, 1
      %p237 = scmp.eq.s32.totalorder %s26, 1
      %p238 = scmp.ne.s32.totalorder %s233, %s235
      %p239 = scmp.eq.s32.totalorder %s26, 0
      %p240 = por %p238, %p239
      %p241 = scmp.ne.s32.totalorder %s233, %s235
      %p242 = scmp.eq.s32.totalorder %s31, 1
      %p243 = por %p241, %p242
      %p244 = scmp.ne.s32.totalorder %s235, %s236
      %p245 = scmp.eq.s32.totalorder %s31, 0
      %p246 = por %p244, %p245
      %p247 = scmp.ne.s32.totalorder %s235, %s236
      %p248 = scmp.eq.s32.totalorder %s32, 1
      %p249 = por %p247, %p248
      %p251 = scmp.ne.s32.totalorder %s236, %s250
      %p252 = scmp.eq.s32.totalorder %s32, 0
      %p253 = por %p251, %p252
      %s255 = sadd.s32 %s254, 1
      %p258 = scmp.eq.s32.totalorder %s26, 1
      %p259 = scmp.ne.s32.totalorder %s254, %s256
      %p260 = scmp.eq.s32.totalorder %s26, 0
      %p261 = por %p259, %p260
      %p262 = scmp.ne.s32.totalorder %s254, %s256
      %p263 = scmp.eq.s32.totalorder %s31, 1
      %p264 = por %p262, %p263
      %p265 = scmp.ne.s32.totalorder %s256, %s257
      %p266 = scmp.eq.s32.totalorder %s31, 0
      %p267 = por %p265, %p266
      %p268 = scmp.ne.s32.totalorder %s256, %s257
      %p269 = scmp.eq.s32.totalorder %s32, 1
      %p270 = por %p268, %p269
      %p272 = scmp.ne.s32.totalorder %s257, %s271
      %p273 = scmp.eq.s32.totalorder %s32, 0
      %p274 = por %p272, %p273
      %s275 = ssub.s32 %s26, %s33
      %p276 = scmp.eq.s32.totalorder %s275, 0
      %s278 = sadd.s32 %s277, 1
      %s279 = scalar_select %p276, %s277, %s278
      %p282 = pneg %p276
      %p283 = scmp.eq.s32.totalorder %s26, 1
      %p284 = por %p282, %p283
      %p285 = scmp.ne.s32.totalorder %s277, %s280
      %p286 = scmp.eq.s32.totalorder %s26, 0
      %p287 = por %p285, %p286
      %p288 = scmp.ne.s32.totalorder %s277, %s280
      %p289 = scmp.eq.s32.totalorder %s31, 1
      %p290 = por %p288, %p289
      %p291 = scmp.ne.s32.totalorder %s280, %s281
      %p292 = scmp.eq.s32.totalorder %s31, 0
      %p293 = por %p291, %p292
      %p294 = scmp.ne.s32.totalorder %s280, %s281
      %p295 = scmp.eq.s32.totalorder %s32, 1
      %p296 = por %p294, %p295
      %p298 = scmp.ne.s32.totalorder %s281, %s297
      %p299 = scmp.eq.s32.totalorder %s32, 0
      %p300 = por %p298, %p299
      %p301 = scmp.le.s32.totalorder 1, %s26
      %p302 = scmp.lt.s32.totalorder %s26, 3
      %p303 = pnand %p301, %p302
      %p304 = pneg %p303
      // Predicated region
      $region9: #{tpu_custom_call.1} parent=5 // pred_check
        _
      $region10: #{tpu_custom_call.1} parent=5 // pred_check_branch
        %306 = sbr.rel (%p303) target = $region12
      $region11: #{tpu_custom_call.1} parent=5 // pred_region
        %s307 = ssub.s32 %s26, 1
        // Predicated region
        $region13: #{tpu_custom_call.1} parent=11 // pred_check
          %p308 = pneg %p99
        $region14: #{tpu_custom_call.1} parent=11 // pred_check_branch
          %310 = sbr.rel (%p308) target = $region16
        $region15: #{tpu_custom_call.1} parent=11 // pred_region
          _
        $region16: #{tpu_custom_call.1} parent=11 // pred_fallthru
          _
        // Predicated region
        $region17: #{tpu_custom_call.1} parent=11 // pred_check
          %p311 = pneg %p120
        $region18: #{tpu_custom_call.1} parent=11 // pred_check_branch
          %313 = sbr.rel (%p311) target = $region20
        $region19: #{tpu_custom_call.1} parent=11 // pred_region
          _
        $region20: #{tpu_custom_call.1} parent=11 // pred_fallthru
          _
        // Predicated region
        $region21: #{tpu_custom_call.1} parent=11 // pred_check
          %p314 = pneg %p141
        $region22: #{tpu_custom_call.1} parent=11 // pred_check_branch
          %316 = sbr.rel (%p314) target = $region24
        $region23: #{tpu_custom_call.1} parent=11 // pred_region
          _
        $region24: #{tpu_custom_call.1} parent=11 // pred_fallthru
          _
        // Predicated region
        $region25: #{tpu_custom_call.1} parent=11 // pred_check
          %p317 = pneg %p162
        $region26: #{tpu_custom_call.1} parent=11 // pred_check_branch
          %319 = sbr.rel (%p317) target = $region28
        $region27: #{tpu_custom_call.1} parent=11 // pred_region
          _
        $region28: #{tpu_custom_call.1} parent=11 // pred_fallthru
          _
        // Predicated region
        $region29: #{tpu_custom_call.1} parent=11 // pred_check
          %p320 = pneg %p183
        $region30: #{tpu_custom_call.1} parent=11 // pred_check_branch
          %322 = sbr.rel (%p320) target = $region32
        $region31: #{tpu_custom_call.1} parent=11 // pred_region
          _
        $region32: #{tpu_custom_call.1} parent=11 // pred_fallthru
          _
        // Predicated region
        $region33: #{tpu_custom_call.1} parent=11 // pred_check
          %p323 = pneg %p204
        $region34: #{tpu_custom_call.1} parent=11 // pred_check_branch
          %325 = sbr.rel (%p323) target = $region36
        $region35: #{tpu_custom_call.1} parent=11 // pred_region
          _
        $region36: #{tpu_custom_call.1} parent=11 // pred_fallthru
          _
        // Predicated region
        $region37: #{tpu_custom_call.1} parent=11 // pred_check
          %p326 = pneg %p225
        $region38: #{tpu_custom_call.1} parent=11 // pred_check_branch
          %328 = sbr.rel (%p326) target = $region40
        $region39: #{tpu_custom_call.1} parent=11 // pred_region
          _
        $region40: #{tpu_custom_call.1} parent=11 // pred_fallthru
          _
        // Predicated region
        $region41: #{tpu_custom_call.1} parent=11 // pred_check
          %p329 = pneg %p246
        $region42: #{tpu_custom_call.1} parent=11 // pred_check_branch
          %331 = sbr.rel (%p329) target = $region44
        $region43: #{tpu_custom_call.1} parent=11 // pred_region
          _
        $region44: #{tpu_custom_call.1} parent=11 // pred_fallthru
          _
        // Predicated region
        $region45: #{tpu_custom_call.1} parent=11 // pred_check
          %p332 = pneg %p267
        $region46: #{tpu_custom_call.1} parent=11 // pred_check_branch
          %334 = sbr.rel (%p332) target = $region48
        $region47: #{tpu_custom_call.1} parent=11 // pred_region
          _
        $region48: #{tpu_custom_call.1} parent=11 // pred_fallthru
          _
      $region12: #{tpu_custom_call.1} parent=5 // pred_fallthru
        _
      %p335 = scmp.lt.s32.totalorder %s26, 2
      // Predicated region
      $region49: #{tpu_custom_call.1} parent=5 // pred_check
        %p336 = pneg %p335
      $region50: #{tpu_custom_call.1} parent=5 // pred_check_branch
        %338 = sbr.rel (%p336) target = $region52
      $region51: #{tpu_custom_call.1} parent=5 // pred_region
        // Predicated region
        $region53: #{tpu_custom_call.1} parent=51 // pred_check
          %p339 = pneg %p46
        $region54: #{tpu_custom_call.1} parent=51 // pred_check_branch
          %341 = sbr.rel (%p339) target = $region56
        $region55: #{tpu_custom_call.1} parent=51 // pred_region
          %s342 = sand.u32 %s36, 1
          %s343 = scalar_lea.sflag [#allocation4], %s342
          %s344 = sand.u32 %s36, 1
          %s345 = smul.addr %s344, 8
          %s346 = scalar_lea.vmem [#allocation3], %s345
          %s348 = ssub.s32 128, 128
          %349 = vsyncadd %s343, %s348
          %s350 = smul.addr %s26, 2
          %s351 = smul.addr %s350, 64
          %s352 = scalar_lea.hbm %s0, %s351
          %s354 = sshll.u32 %s346, 4
          %s355 = int_to_ptr.vmem [resolvable:$true] %s354
          %357 = dma.hbm_to_vmem [thread:$0]  %s352, 128, %s355, %s343
        $region56: #{tpu_custom_call.1} parent=51 // pred_fallthru
          _
        // Predicated region
        $region57: #{tpu_custom_call.1} parent=51 // pred_check
          %p358 = pneg %p72
        $region58: #{tpu_custom_call.1} parent=51 // pred_check_branch
          %360 = sbr.rel (%p358) target = $region60
        $region59: #{tpu_custom_call.1} parent=51 // pred_region
          %s361 = sand.u32 %s62, 1
          %s362 = scalar_lea.sflag [#allocation7], %s361
          %s363 = sand.u32 %s62, 1
          %s364 = smul.addr %s363, 8
          %s365 = scalar_lea.vmem [#allocation6], %s364
          %s367 = ssub.s32 128, 128
          %368 = vsyncadd %s362, %s367
          %s369 = smul.addr %s26, 2
          %s370 = smul.addr %s369, 64
          %s371 = scalar_lea.hbm %s1, %s370
          %s373 = sshll.u32 %s365, 4
          %s374 = int_to_ptr.vmem [resolvable:$true] %s373
          %376 = dma.hbm_to_vmem [thread:$0]  %s371, 128, %s374, %s362
        $region60: #{tpu_custom_call.1} parent=51 // pred_fallthru
          _
      $region52: #{tpu_custom_call.1} parent=5 // pred_fallthru
        _
      %p377 = scmp.le.s32.totalorder 1, %s26
      %p378 = scmp.lt.s32.totalorder %s26, 3
      %p379 = pnand %p377, %p378
      %p380 = pneg %p379
      // Predicated region
      $region61: #{tpu_custom_call.1} parent=5 // pred_check
        _
      $region62: #{tpu_custom_call.1} parent=5 // pred_check_branch
        %382 = sbr.rel (%p379) target = $region64
      $region63: #{tpu_custom_call.1} parent=5 // pred_region
        %s383 = ssub.s32 %s26, 1
        %s384 = sand.u32 %s39, 1
        %s385 = scalar_lea.sflag [#allocation4], %s384
        %s386 = sand.u32 %s39, 1
        %s387 = smul.addr %s386, 8
        %s388 = scalar_lea.vmem [#allocation3], %s387
        // Predicated region
        $region65: #{tpu_custom_call.1} parent=63 // pred_check
          %p389 = pneg %p52
        $region66: #{tpu_custom_call.1} parent=63 // pred_check_branch
          %391 = sbr.rel (%p389) target = $region68
        $region67: #{tpu_custom_call.1} parent=63 // pred_region
          %392 = dma.done %s385, 128
        $region68: #{tpu_custom_call.1} parent=63 // pred_fallthru
          _
        %s393 = sand.u32 %s65, 1
        %s394 = scalar_lea.sflag [#allocation7], %s393
        %s395 = sand.u32 %s65, 1
        %s396 = smul.addr %s395, 8
        %s397 = scalar_lea.vmem [#allocation6], %s396
        // Predicated region
        $region69: #{tpu_custom_call.1} parent=63 // pred_check
          %p398 = pneg %p78
        $region70: #{tpu_custom_call.1} parent=63 // pred_check_branch
          %400 = sbr.rel (%p398) target = $region72
        $region71: #{tpu_custom_call.1} parent=63 // pred_region
          %401 = dma.done %s394, 128
        $region72: #{tpu_custom_call.1} parent=63 // pred_fallthru
          _
        %s402 = sand.u32 %s39, 1
        %s403 = scalar_lea.sflag [#allocation4], %s402
        %s404 = sand.u32 %s39, 1
        %s405 = smul.addr %s404, 8
        %s406 = scalar_lea.vmem [#allocation3], %s405
        %p407 = pneg %p52
        %p408 = pneg %p49
        %s409 = sand.u32 %s65, 1
        %s410 = scalar_lea.sflag [#allocation7], %s409
        %s411 = sand.u32 %s65, 1
        %s412 = smul.addr %s411, 8
        %s413 = scalar_lea.vmem [#allocation6], %s412
        %p414 = pneg %p78
        %p415 = pneg %p75
        %p416 = pneg %p99
        %p417 = pneg %p96
        %p418 = pneg %p120
        %p419 = pneg %p117
        %p420 = pneg %p141
        %p421 = pneg %p138
        %p422 = pneg %p162
        %p423 = pneg %p159
        %p424 = pneg %p183
        %p425 = pneg %p180
        %p426 = pneg %p204
        %p427 = pneg %p201
        %p428 = pneg %p225
        %p429 = pneg %p222
        %p430 = pneg %p246
        %p431 = pneg %p243
        %p432 = pneg %p267
        %p433 = pneg %p264
        %p434 = pneg %p293
        %p435 = pneg %p290
        %s436 = sand.u32 %s280, 1
        %s437 = scalar_lea.sflag [#allocation5], %s436
        %s438 = sand.u32 %s280, 1
        %s439 = smul.addr %s438, 8
        %s440 = scalar_lea.vmem [#allocation8], %s439
        %v442 = vld [vmem:[%s388] sm:$0xff]
        %v443 = vld [vmem:[%s397] sm:$0xff]
        %v445 = vcombine.high %v442, %v442
        %vm447 = vcmask 1043456
        %v448 = vsel %vm447, %v442, 0.0
        %v449 = vsel %vm447, %v445, 0.0
        %v450 = vadd.f32 %v448, %v449
        %451 = vadd.xlane.f32.xlu0 %v450
        %v452 = vpop.xlane.xlu0 %451
        %v453 = vrcp.pop 256.0
        %v454 = vmul.f32 %v452, %v453
        %v457 = vunpack.c.l.s4 839922192
        %v458 = vunpack.c.0.s8 %v457
        %v459 = vlaneseq
        %v460 = vshrl.u32 %v459, 7
        %v461 = vsub.s32 %v458, %v460
        %v462 = vrot.slane %v454, %v461
        %v464 = vsub.f32 %v442, %v462
        %v465 = vmul.f32 %v464, %v464
        %v467 = vcombine.high %v465, %v465
        %v469 = vsel %vm447, %v465, 0.0
        %v470 = vsel %vm447, %v467, 0.0
        %v471 = vadd.f32 %v469, %v470
        %472 = vadd.xlane.f32.xlu0 %v471
        %v473 = vpop.xlane.xlu0 %472
        %v474 = vmul.f32 %v473, 0.003921569
        %v475 = vadd.f32 %v474, 1e-05
        %v476 = vrsqrt.pop %v475
        %v479 = vunpack.c.l.s4 839922192
        %v480 = vunpack.c.0.s8 %v479
        %v481 = vlaneseq
        %v482 = vshrl.u32 %v481, 7
        %v483 = vsub.s32 %v480, %v482
        %v484 = vrot.slane %v476, %v483
        %v486 = vmul.f32 %v464, %v484
        %v488 = vcombine.high %v443, %v443
        %v490 = vsel %vm447, %v443, 0.0
        %v491 = vsel %vm447, %v488, 0.0
        %v492 = vadd.f32 %v490, %v491
        %493 = vadd.xlane.f32.xlu0 %v492
        %v494 = vpop.xlane.xlu0 %493
        %v495 = vmul.f32 %v494, %v453
        %v498 = vunpack.c.l.s4 839922192
        %v499 = vunpack.c.0.s8 %v498
        %v500 = vlaneseq
        %v501 = vshrl.u32 %v500, 7
        %v502 = vsub.s32 %v499, %v501
        %v503 = vrot.slane %v495, %v502
        %v505 = vsub.f32 %v443, %v503
        %v506 = vmul.f32 %v505, %v505
        %v508 = vcombine.high %v506, %v506
        %v510 = vsel %vm447, %v506, 0.0
        %v511 = vsel %vm447, %v508, 0.0
        %v512 = vadd.f32 %v510, %v511
        %513 = vadd.xlane.f32.xlu0 %v512
        %v514 = vpop.xlane.xlu0 %513
        %v515 = vmul.f32 %v514, 0.003921569
        %v516 = vadd.f32 %v515, 1e-05
        %v517 = vrsqrt.pop %v516
        %v520 = vunpack.c.l.s4 839922192
        %v521 = vunpack.c.0.s8 %v520
        %v522 = vlaneseq
        %v523 = vshrl.u32 %v522, 7
        %v524 = vsub.s32 %v521, %v523
        %v525 = vrot.slane %v517, %v524
        %v527 = vmul.f32 %v505, %v525
        %v528 = vld [vmem:[%s3] sm:$0xf]
        %v530 = vcombine.high %v527, %v527
        %vm531 = vcmask 31744
        %v533 = vsel %vm531, %v528, 0
        %v535 = vsel %vm447, %v527, 0
        %v537 = vsel %vm447, %v530, 0
        %539 = vmatprep.subr.mxu0 0.0
        %540 = vmatpush1.msra.mxu0 0.0
        %541 = vmatprep.subr.mxu0 0.0
        %542 = vmatpush1.msra.mxu0 0.0
        %543 = vmatprep.subr.mxu0 0.0
        %544 = vmatpush1.msra.mxu0 0.0
        %545 = vmatprep.subr.mxu0 0.0
        %546 = vmatpush1.msra.mxu0 0.0
        %547 = vmatprep.subr.mxu0 0.0
        %548 = vmatpush1.msra.mxu0 0.0
        %549 = vmatprep.subr.mxu0 0.0
        %550 = vmatpush1.msra.mxu0 0.0
        %551 = vmatprep.subr.mxu0 0.0
        %552 = vmatpush1.msra.mxu0 0.0
        %553 = vmatprep.subr.mxu0 0.0
        %554 = vmatpush1.msra.mxu0 0.0
        %555 = vmatprep.subr.mxu0 0.0
        %556 = vmatpush1.msra.mxu0 0.0
        %557 = vmatprep.subr.mxu0 0.0
        %558 = vmatpush1.msra.mxu0 0.0
        %559 = vmatprep.subr.mxu0 0.0
        %560 = vmatpush1.msra.mxu0 0.0
        %561 = vmatprep.subr.mxu0 0.0
        %562 = vmatpush1.msra.mxu0 0.0
        %563 = vmatprep.subr.mxu0 0.0
        %564 = vmatpush1.msra.mxu0 0.0
        %565 = vmatprep.subr.mxu0 0.0
        %566 = vmatpush1.msra.mxu0 0.0
        %567 = vmatprep.subr.mxu0 0.0
        %568 = vmatpush1.msra.mxu0 0.0
        %v569 = vand.u32 %v537, 4294901760
        %570 = vmatprep.subr.mxu0 %v569
        %v571 = vand.u32 %v535, 4294901760
        %572 = vmatpush1.msra.mxu0 %v571
        %573 = vmatprep.subr.mxu0 0.0
        %574 = vmatpush2.msra.mxu0 0.0
        %575 = vmatprep.subr.mxu0 0.0
        %576 = vmatpush2.msra.mxu0 0.0
        %577 = vmatprep.subr.mxu0 0.0
        %578 = vmatpush2.msra.mxu0 0.0
        %579 = vmatprep.subr.mxu0 0.0
        %580 = vmatpush2.msra.mxu0 0.0
        %581 = vmatprep.subr.mxu0 0.0
        %582 = vmatpush2.msra.mxu0 0.0
        %583 = vmatprep.subr.mxu0 0.0
        %584 = vmatpush2.msra.mxu0 0.0
        %585 = vmatprep.subr.mxu0 0.0
        %586 = vmatpush2.msra.mxu0 0.0
        %587 = vmatprep.subr.mxu0 0.0
        %588 = vmatpush2.msra.mxu0 0.0
        %589 = vmatprep.subr.mxu0 0.0
        %590 = vmatpush2.msra.mxu0 0.0
        %591 = vmatprep.subr.mxu0 0.0
        %592 = vmatpush2.msra.mxu0 0.0
        %593 = vmatprep.subr.mxu0 0.0
        %594 = vmatpush2.msra.mxu0 0.0
        %595 = vmatprep.subr.mxu0 0.0
        %596 = vmatpush2.msra.mxu0 0.0
        %597 = vmatprep.subr.mxu0 0.0
        %598 = vmatpush2.msra.mxu0 0.0
        %599 = vmatprep.subr.mxu0 0.0
        %600 = vmatpush2.msra.mxu0 0.0
        %601 = vmatprep.subr.mxu0 0.0
        %602 = vmatpush2.msra.mxu0 0.0
        %603 = vmatprep.subr.mxu0 0.0
        %604 = vmatpush2.msra.mxu0 0.0
        %605 = vmatprep.mubr.f32.mxu0 0.0
        %v606 = vand.u32 %v533, 4294901760
        %v607 = vsub.f32 %v533, %v606
        %v608 = vand.u32 %v607, 4294901760
        %v609 = vsub.f32 %v607, %v608
        %v610 = vand.u32 %v609, 4294901760
        %611 = vmatmul.mubr.f32.gmra.mxu0 %v610
        %v612 = vpop.f32.mrf.mxu0
        %v613 = vadd.f32 0.0, %v612
        %v614 = vpop.f32.mrf.mxu0
        %v615 = vadd.f32 0.0, %v614
        %616 = vdwg.mxu0
        %617 = vmatprep.subr.mxu0 0.0
        %618 = vmatpush1.msra.mxu0 0.0
        %619 = vmatprep.subr.mxu0 0.0
        %620 = vmatpush1.msra.mxu0 0.0
        %621 = vmatprep.subr.mxu0 0.0
        %622 = vmatpush1.msra.mxu0 0.0
        %623 = vmatprep.subr.mxu0 0.0
        %624 = vmatpush1.msra.mxu0 0.0
        %625 = vmatprep.subr.mxu0 0.0
        %626 = vmatpush1.msra.mxu0 0.0
        %627 = vmatprep.subr.mxu0 0.0
        %628 = vmatpush1.msra.mxu0 0.0
        %629 = vmatprep.subr.mxu0 0.0
        %630 = vmatpush1.msra.mxu0 0.0
        %631 = vmatprep.subr.mxu0 0.0
        %632 = vmatpush1.msra.mxu0 0.0
        %633 = vmatprep.subr.mxu0 0.0
        %634 = vmatpush1.msra.mxu0 0.0
        %635 = vmatprep.subr.mxu0 0.0
        %636 = vmatpush1.msra.mxu0 0.0
        %637 = vmatprep.subr.mxu0 0.0
        %638 = vmatpush1.msra.mxu0 0.0
        %639 = vmatprep.subr.mxu0 0.0
        %640 = vmatpush1.msra.mxu0 0.0
        %641 = vmatprep.subr.mxu0 0.0
        %642 = vmatpush1.msra.mxu0 0.0
        %643 = vmatprep.subr.mxu0 0.0
        %644 = vmatpush1.msra.mxu0 0.0
        %645 = vmatprep.subr.mxu0 0.0
        %646 = vmatpush1.msra.mxu0 0.0
        %v647 = vand.u32 %v537, 4294901760
        %v648 = vsub.f32 %v537, %v647
        %v649 = vand.u32 %v648, 4294901760
        %v650 = vsub.f32 %v648, %v649
        %v651 = vand.u32 %v650, 4294901760
        %652 = vmatprep.subr.mxu0 %v651
        %v653 = vand.u32 %v535, 4294901760
        %v654 = vsub.f32 %v535, %v653
        %v655 = vand.u32 %v654, 4294901760
        %v656 = vsub.f32 %v654, %v655
        %v657 = vand.u32 %v656, 4294901760
        %658 = vmatpush1.msra.mxu0 %v657
        %659 = vmatprep.subr.mxu0 0.0
        %660 = vmatpush2.msra.mxu0 0.0
        %661 = vmatprep.subr.mxu0 0.0
        %662 = vmatpush2.msra.mxu0 0.0
        %663 = vmatprep.subr.mxu0 0.0
        %664 = vmatpush2.msra.mxu0 0.0
        %665 = vmatprep.subr.mxu0 0.0
        %666 = vmatpush2.msra.mxu0 0.0
        %667 = vmatprep.subr.mxu0 0.0
        %668 = vmatpush2.msra.mxu0 0.0
        %669 = vmatprep.subr.mxu0 0.0
        %670 = vmatpush2.msra.mxu0 0.0
        %671 = vmatprep.subr.mxu0 0.0
        %672 = vmatpush2.msra.mxu0 0.0
        %673 = vmatprep.subr.mxu0 0.0
        %674 = vmatpush2.msra.mxu0 0.0
        %675 = vmatprep.subr.mxu0 0.0
        %676 = vmatpush2.msra.mxu0 0.0
        %677 = vmatprep.subr.mxu0 0.0
        %678 = vmatpush2.msra.mxu0 0.0
        %679 = vmatprep.subr.mxu0 0.0
        %680 = vmatpush2.msra.mxu0 0.0
        %681 = vmatprep.subr.mxu0 0.0
        %682 = vmatpush2.msra.mxu0 0.0
        %683 = vmatprep.subr.mxu0 0.0
        %684 = vmatpush2.msra.mxu0 0.0
        %685 = vmatprep.subr.mxu0 0.0
        %686 = vmatpush2.msra.mxu0 0.0
        %687 = vmatprep.subr.mxu0 0.0
        %688 = vmatpush2.msra.mxu0 0.0
        %689 = vmatprep.subr.mxu0 0.0
        %690 = vmatpush2.msra.mxu0 0.0
        %691 = vmatprep.mubr.f32.mxu0 0.0
        %v692 = vand.u32 %v533, 4294901760
        %693 = vmatmul.mubr.f32.gmra.mxu0 %v692
        %v694 = vpop.f32.mrf.mxu0
        %v695 = vadd.f32 %v613, %v694
        %v696 = vpop.f32.mrf.mxu0
        %v697 = vadd.f32 %v615, %v696
        %698 = vdwg.mxu0
        %699 = vmatprep.subr.mxu0 0.0
        %700 = vmatpush1.msra.mxu0 0.0
        %701 = vmatprep.subr.mxu0 0.0
        %702 = vmatpush1.msra.mxu0 0.0
        %703 = vmatprep.subr.mxu0 0.0
        %704 = vmatpush1.msra.mxu0 0.0
        %705 = vmatprep.subr.mxu0 0.0
        %706 = vmatpush1.msra.mxu0 0.0
        %707 = vmatprep.subr.mxu0 0.0
        %708 = vmatpush1.msra.mxu0 0.0
        %709 = vmatprep.subr.mxu0 0.0
        %710 = vmatpush1.msra.mxu0 0.0
        %711 = vmatprep.subr.mxu0 0.0
        %712 = vmatpush1.msra.mxu0 0.0
        %713 = vmatprep.subr.mxu0 0.0
        %714 = vmatpush1.msra.mxu0 0.0
        %715 = vmatprep.subr.mxu0 0.0
        %716 = vmatpush1.msra.mxu0 0.0
        %717 = vmatprep.subr.mxu0 0.0
        %718 = vmatpush1.msra.mxu0 0.0
        %719 = vmatprep.subr.mxu0 0.0
        %720 = vmatpush1.msra.mxu0 0.0
        %721 = vmatprep.subr.mxu0 0.0
        %722 = vmatpush1.msra.mxu0 0.0
        %723 = vmatprep.subr.mxu0 0.0
        %724 = vmatpush1.msra.mxu0 0.0
        %725 = vmatprep.subr.mxu0 0.0
        %726 = vmatpush1.msra.mxu0 0.0
        %727 = vmatprep.subr.mxu0 0.0
        %728 = vmatpush1.msra.mxu0 0.0
        %v729 = vand.u32 %v537, 4294901760
        %v730 = vsub.f32 %v537, %v729
        %731 = vmatprep.subr.mxu0 %v730
        %v732 = vand.u32 %v535, 4294901760
        %v733 = vsub.f32 %v535, %v732
        %734 = vmatpush1.msra.mxu0 %v733
        %735 = vmatprep.subr.mxu0 0.0
        %736 = vmatpush2.msra.mxu0 0.0
        %737 = vmatprep.subr.mxu0 0.0
        %738 = vmatpush2.msra.mxu0 0.0
        %739 = vmatprep.subr.mxu0 0.0
        %740 = vmatpush2.msra.mxu0 0.0
        %741 = vmatprep.subr.mxu0 0.0
        %742 = vmatpush2.msra.mxu0 0.0
        %743 = vmatprep.subr.mxu0 0.0
        %744 = vmatpush2.msra.mxu0 0.0
        %745 = vmatprep.subr.mxu0 0.0
        %746 = vmatpush2.msra.mxu0 0.0
        %747 = vmatprep.subr.mxu0 0.0
        %748 = vmatpush2.msra.mxu0 0.0
        %749 = vmatprep.subr.mxu0 0.0
        %750 = vmatpush2.msra.mxu0 0.0
        %751 = vmatprep.subr.mxu0 0.0
        %752 = vmatpush2.msra.mxu0 0.0
        %753 = vmatprep.subr.mxu0 0.0
        %754 = vmatpush2.msra.mxu0 0.0
        %755 = vmatprep.subr.mxu0 0.0
        %756 = vmatpush2.msra.mxu0 0.0
        %757 = vmatprep.subr.mxu0 0.0
        %758 = vmatpush2.msra.mxu0 0.0
        %759 = vmatprep.subr.mxu0 0.0
        %760 = vmatpush2.msra.mxu0 0.0
        %761 = vmatprep.subr.mxu0 0.0
        %762 = vmatpush2.msra.mxu0 0.0
        %763 = vmatprep.subr.mxu0 0.0
        %764 = vmatpush2.msra.mxu0 0.0
        %765 = vmatprep.subr.mxu0 0.0
        %766 = vmatpush2.msra.mxu0 0.0
        %767 = vmatprep.mubr.f32.mxu0 0.0
        %v768 = vand.u32 %v533, 4294901760
        %v769 = vsub.f32 %v533, %v768
        %770 = vmatmul.mubr.f32.gmra.mxu0 %v769
        %v771 = vpop.f32.mrf.mxu0
        %v772 = vadd.f32 %v695, %v771
        %v773 = vpop.f32.mrf.mxu0
        %v774 = vadd.f32 %v697, %v773
        %775 = vdwg.mxu0
        %776 = vmatprep.subr.mxu0 0.0
        %777 = vmatpush1.msra.mxu0 0.0
        %778 = vmatprep.subr.mxu0 0.0
        %779 = vmatpush1.msra.mxu0 0.0
        %780 = vmatprep.subr.mxu0 0.0
        %781 = vmatpush1.msra.mxu0 0.0
        %782 = vmatprep.subr.mxu0 0.0
        %783 = vmatpush1.msra.mxu0 0.0
        %784 = vmatprep.subr.mxu0 0.0
        %785 = vmatpush1.msra.mxu0 0.0
        %786 = vmatprep.subr.mxu0 0.0
        %787 = vmatpush1.msra.mxu0 0.0
        %788 = vmatprep.subr.mxu0 0.0
        %789 = vmatpush1.msra.mxu0 0.0
        %790 = vmatprep.subr.mxu0 0.0
        %791 = vmatpush1.msra.mxu0 0.0
        %792 = vmatprep.subr.mxu0 0.0
        %793 = vmatpush1.msra.mxu0 0.0
        %794 = vmatprep.subr.mxu0 0.0
        %795 = vmatpush1.msra.mxu0 0.0
        %796 = vmatprep.subr.mxu0 0.0
        %797 = vmatpush1.msra.mxu0 0.0
        %798 = vmatprep.subr.mxu0 0.0
        %799 = vmatpush1.msra.mxu0 0.0
        %800 = vmatprep.subr.mxu0 0.0
        %801 = vmatpush1.msra.mxu0 0.0
        %802 = vmatprep.subr.mxu0 0.0
        %803 = vmatpush1.msra.mxu0 0.0
        %804 = vmatprep.subr.mxu0 0.0
        %805 = vmatpush1.msra.mxu0 0.0
        %v806 = vand.u32 %v537, 4294901760
        %807 = vmatprep.subr.mxu0 %v806
        %v808 = vand.u32 %v535, 4294901760
        %809 = vmatpush1.msra.mxu0 %v808
        %810 = vmatprep.subr.mxu0 0.0
        %811 = vmatpush2.msra.mxu0 0.0
        %812 = vmatprep.subr.mxu0 0.0
        %813 = vmatpush2.msra.mxu0 0.0
        %814 = vmatprep.subr.mxu0 0.0
        %815 = vmatpush2.msra.mxu0 0.0
        %816 = vmatprep.subr.mxu0 0.0
        %817 = vmatpush2.msra.mxu0 0.0
        %818 = vmatprep.subr.mxu0 0.0
        %819 = vmatpush2.msra.mxu0 0.0
        %820 = vmatprep.subr.mxu0 0.0
        %821 = vmatpush2.msra.mxu0 0.0
        %822 = vmatprep.subr.mxu0 0.0
        %823 = vmatpush2.msra.mxu0 0.0
        %824 = vmatprep.subr.mxu0 0.0
        %825 = vmatpush2.msra.mxu0 0.0
        %826 = vmatprep.subr.mxu0 0.0
        %827 = vmatpush2.msra.mxu0 0.0
        %828 = vmatprep.subr.mxu0 0.0
        %829 = vmatpush2.msra.mxu0 0.0
        %830 = vmatprep.subr.mxu0 0.0
        %831 = vmatpush2.msra.mxu0 0.0
        %832 = vmatprep.subr.mxu0 0.0
        %833 = vmatpush2.msra.mxu0 0.0
        %834 = vmatprep.subr.mxu0 0.0
        %835 = vmatpush2.msra.mxu0 0.0
        %836 = vmatprep.subr.mxu0 0.0
        %837 = vmatpush2.msra.mxu0 0.0
        %838 = vmatprep.subr.mxu0 0.0
        %839 = vmatpush2.msra.mxu0 0.0
        %840 = vmatprep.subr.mxu0 0.0
        %841 = vmatpush2.msra.mxu0 0.0
        %842 = vmatprep.mubr.f32.mxu0 0.0
        %v843 = vand.u32 %v533, 4294901760
        %v844 = vsub.f32 %v533, %v843
        %v845 = vand.u32 %v844, 4294901760
        %846 = vmatmul.mubr.f32.gmra.mxu0 %v845
        %v847 = vpop.f32.mrf.mxu0
        %v848 = vadd.f32 %v772, %v847
        %v849 = vpop.f32.mrf.mxu0
        %v850 = vadd.f32 %v774, %v849
        %851 = vdwg.mxu0
        %852 = vmatprep.subr.mxu0 0.0
        %853 = vmatpush1.msra.mxu0 0.0
        %854 = vmatprep.subr.mxu0 0.0
        %855 = vmatpush1.msra.mxu0 0.0
        %856 = vmatprep.subr.mxu0 0.0
        %857 = vmatpush1.msra.mxu0 0.0
        %858 = vmatprep.subr.mxu0 0.0
        %859 = vmatpush1.msra.mxu0 0.0
        %860 = vmatprep.subr.mxu0 0.0
        %861 = vmatpush1.msra.mxu0 0.0
        %862 = vmatprep.subr.mxu0 0.0
        %863 = vmatpush1.msra.mxu0 0.0
        %864 = vmatprep.subr.mxu0 0.0
        %865 = vmatpush1.msra.mxu0 0.0
        %866 = vmatprep.subr.mxu0 0.0
        %867 = vmatpush1.msra.mxu0 0.0
        %868 = vmatprep.subr.mxu0 0.0
        %869 = vmatpush1.msra.mxu0 0.0
        %870 = vmatprep.subr.mxu0 0.0
        %871 = vmatpush1.msra.mxu0 0.0
        %872 = vmatprep.subr.mxu0 0.0
        %873 = vmatpush1.msra.mxu0 0.0
        %874 = vmatprep.subr.mxu0 0.0
        %875 = vmatpush1.msra.mxu0 0.0
        %876 = vmatprep.subr.mxu0 0.0
        %877 = vmatpush1.msra.mxu0 0.0
        %878 = vmatprep.subr.mxu0 0.0
        %879 = vmatpush1.msra.mxu0 0.0
        %880 = vmatprep.subr.mxu0 0.0
        %881 = vmatpush1.msra.mxu0 0.0
        %v882 = vand.u32 %v537, 4294901760
        %v883 = vsub.f32 %v537, %v882
        %v884 = vand.u32 %v883, 4294901760
        %885 = vmatprep.subr.mxu0 %v884
        %v886 = vand.u32 %v535, 4294901760
        %v887 = vsub.f32 %v535, %v886
        %v888 = vand.u32 %v887, 4294901760
        %889 = vmatpush1.msra.mxu0 %v888
        %890 = vmatprep.subr.mxu0 0.0
        %891 = vmatpush2.msra.mxu0 0.0
        %892 = vmatprep.subr.mxu0 0.0
        %893 = vmatpush2.msra.mxu0 0.0
        %894 = vmatprep.subr.mxu0 0.0
        %895 = vmatpush2.msra.mxu0 0.0
        %896 = vmatprep.subr.mxu0 0.0
        %897 = vmatpush2.msra.mxu0 0.0
        %898 = vmatprep.subr.mxu0 0.0
        %899 = vmatpush2.msra.mxu0 0.0
        %900 = vmatprep.subr.mxu0 0.0
        %901 = vmatpush2.msra.mxu0 0.0
        %902 = vmatprep.subr.mxu0 0.0
        %903 = vmatpush2.msra.mxu0 0.0
        %904 = vmatprep.subr.mxu0 0.0
        %905 = vmatpush2.msra.mxu0 0.0
        %906 = vmatprep.subr.mxu0 0.0
        %907 = vmatpush2.msra.mxu0 0.0
        %908 = vmatprep.subr.mxu0 0.0
        %909 = vmatpush2.msra.mxu0 0.0
        %910 = vmatprep.subr.mxu0 0.0
        %911 = vmatpush2.msra.mxu0 0.0
        %912 = vmatprep.subr.mxu0 0.0
        %913 = vmatpush2.msra.mxu0 0.0
        %914 = vmatprep.subr.mxu0 0.0
        %915 = vmatpush2.msra.mxu0 0.0
        %916 = vmatprep.subr.mxu0 0.0
        %917 = vmatpush2.msra.mxu0 0.0
        %918 = vmatprep.subr.mxu0 0.0
        %919 = vmatpush2.msra.mxu0 0.0
        %920 = vmatprep.subr.mxu0 0.0
        %921 = vmatpush2.msra.mxu0 0.0
        %922 = vmatprep.mubr.f32.mxu0 0.0
        %v923 = vand.u32 %v533, 4294901760
        %924 = vmatmul.mubr.f32.gmra.mxu0 %v923
        %v925 = vpop.f32.mrf.mxu0
        %v926 = vadd.f32 %v848, %v925
        %v927 = vpop.f32.mrf.mxu0
        %v928 = vadd.f32 %v850, %v927
        %929 = vdwg.mxu0
        %930 = vmatprep.subr.mxu0 0.0
        %931 = vmatpush1.msra.mxu0 0.0
        %932 = vmatprep.subr.mxu0 0.0
        %933 = vmatpush1.msra.mxu0 0.0
        %934 = vmatprep.subr.mxu0 0.0
        %935 = vmatpush1.msra.mxu0 0.0
        %936 = vmatprep.subr.mxu0 0.0
        %937 = vmatpush1.msra.mxu0 0.0
        %938 = vmatprep.subr.mxu0 0.0
        %939 = vmatpush1.msra.mxu0 0.0
        %940 = vmatprep.subr.mxu0 0.0
        %941 = vmatpush1.msra.mxu0 0.0
        %942 = vmatprep.subr.mxu0 0.0
        %943 = vmatpush1.msra.mxu0 0.0
        %944 = vmatprep.subr.mxu0 0.0
        %945 = vmatpush1.msra.mxu0 0.0
        %946 = vmatprep.subr.mxu0 0.0
        %947 = vmatpush1.msra.mxu0 0.0
        %948 = vmatprep.subr.mxu0 0.0
        %949 = vmatpush1.msra.mxu0 0.0
        %950 = vmatprep.subr.mxu0 0.0
        %951 = vmatpush1.msra.mxu0 0.0
        %952 = vmatprep.subr.mxu0 0.0
        %953 = vmatpush1.msra.mxu0 0.0
        %954 = vmatprep.subr.mxu0 0.0
        %955 = vmatpush1.msra.mxu0 0.0
        %956 = vmatprep.subr.mxu0 0.0
        %957 = vmatpush1.msra.mxu0 0.0
        %958 = vmatprep.subr.mxu0 0.0
        %959 = vmatpush1.msra.mxu0 0.0
        %v960 = vand.u32 %v537, 4294901760
        %961 = vmatprep.subr.mxu0 %v960
        %v962 = vand.u32 %v535, 4294901760
        %963 = vmatpush1.msra.mxu0 %v962
        %964 = vmatprep.subr.mxu0 0.0
        %965 = vmatpush2.msra.mxu0 0.0
        %966 = vmatprep.subr.mxu0 0.0
        %967 = vmatpush2.msra.mxu0 0.0
        %968 = vmatprep.subr.mxu0 0.0
        %969 = vmatpush2.msra.mxu0 0.0
        %970 = vmatprep.subr.mxu0 0.0
        %971 = vmatpush2.msra.mxu0 0.0
        %972 = vmatprep.subr.mxu0 0.0
        %973 = vmatpush2.msra.mxu0 0.0
        %974 = vmatprep.subr.mxu0 0.0
        %975 = vmatpush2.msra.mxu0 0.0
        %976 = vmatprep.subr.mxu0 0.0
        %977 = vmatpush2.msra.mxu0 0.0
        %978 = vmatprep.subr.mxu0 0.0
        %979 = vmatpush2.msra.mxu0 0.0
        %980 = vmatprep.subr.mxu0 0.0
        %981 = vmatpush2.msra.mxu0 0.0
        %982 = vmatprep.subr.mxu0 0.0
        %983 = vmatpush2.msra.mxu0 0.0
        %984 = vmatprep.subr.mxu0 0.0
        %985 = vmatpush2.msra.mxu0 0.0
        %986 = vmatprep.subr.mxu0 0.0
        %987 = vmatpush2.msra.mxu0 0.0
        %988 = vmatprep.subr.mxu0 0.0
        %989 = vmatpush2.msra.mxu0 0.0
        %990 = vmatprep.subr.mxu0 0.0
        %991 = vmatpush2.msra.mxu0 0.0
        %992 = vmatprep.subr.mxu0 0.0
        %993 = vmatpush2.msra.mxu0 0.0
        %994 = vmatprep.subr.mxu0 0.0
        %995 = vmatpush2.msra.mxu0 0.0
        %996 = vmatprep.mubr.f32.mxu0 0.0
        %v997 = vand.u32 %v533, 4294901760
        %998 = vmatmul.mubr.f32.gmra.mxu0 %v997
        %v999 = vpop.f32.mrf.mxu0
        %v1000 = vadd.f32 %v926, %v999
        %v1001 = vpop.f32.mrf.mxu0
        %v1002 = vadd.f32 %v928, %v1001
        %1003 = vdwg.mxu0
        %v1004 = vld [vmem:[%s4] sm:$0x1]
        %v1006 = vsel %vm531, %v1004, 0
        %1008 = vmatprep.subr.mxu0 0.0
        %1009 = vmatpush1.msra.mxu0 0.0
        %1010 = vmatprep.subr.mxu0 0.0
        %1011 = vmatpush1.msra.mxu0 0.0
        %1012 = vmatprep.subr.mxu0 0.0
        %1013 = vmatpush1.msra.mxu0 0.0
        %1014 = vmatprep.subr.mxu0 0.0
        %1015 = vmatpush1.msra.mxu0 0.0
        %1016 = vmatprep.subr.mxu0 0.0
        %1017 = vmatpush1.msra.mxu0 0.0
        %1018 = vmatprep.subr.mxu0 0.0
        %1019 = vmatpush1.msra.mxu0 0.0
        %1020 = vmatprep.subr.mxu0 0.0
        %1021 = vmatpush1.msra.mxu0 0.0
        %1022 = vmatprep.subr.mxu0 0.0
        %1023 = vmatpush1.msra.mxu0 0.0
        %1024 = vmatprep.subr.mxu0 0.0
        %1025 = vmatpush1.msra.mxu0 0.0
        %1026 = vmatprep.subr.mxu0 0.0
        %1027 = vmatpush1.msra.mxu0 0.0
        %1028 = vmatprep.subr.mxu0 0.0
        %1029 = vmatpush1.msra.mxu0 0.0
        %1030 = vmatprep.subr.mxu0 0.0
        %1031 = vmatpush1.msra.mxu0 0.0
        %1032 = vmatprep.subr.mxu0 0.0
        %1033 = vmatpush1.msra.mxu0 0.0
        %1034 = vmatprep.subr.mxu0 0.0
        %1035 = vmatpush1.msra.mxu0 0.0
        %1036 = vmatprep.subr.mxu0 0.0
        %1037 = vmatpush1.msra.mxu0 0.0
        %v1038 = vand.u32 %v537, 4294901760
        %1039 = vmatprep.subr.mxu0 %v1038
        %v1040 = vand.u32 %v535, 4294901760
        %1041 = vmatpush1.msra.mxu0 %v1040
        %1042 = vmatprep.subr.mxu0 0.0
        %1043 = vmatpush2.msra.mxu0 0.0
        %1044 = vmatprep.subr.mxu0 0.0
        %1045 = vmatpush2.msra.mxu0 0.0
        %1046 = vmatprep.subr.mxu0 0.0
        %1047 = vmatpush2.msra.mxu0 0.0
        %1048 = vmatprep.subr.mxu0 0.0
        %1049 = vmatpush2.msra.mxu0 0.0
        %1050 = vmatprep.subr.mxu0 0.0
        %1051 = vmatpush2.msra.mxu0 0.0
        %1052 = vmatprep.subr.mxu0 0.0
        %1053 = vmatpush2.msra.mxu0 0.0
        %1054 = vmatprep.subr.mxu0 0.0
        %1055 = vmatpush2.msra.mxu0 0.0
        %1056 = vmatprep.subr.mxu0 0.0
        %1057 = vmatpush2.msra.mxu0 0.0
        %1058 = vmatprep.subr.mxu0 0.0
        %1059 = vmatpush2.msra.mxu0 0.0
        %1060 = vmatprep.subr.mxu0 0.0
        %1061 = vmatpush2.msra.mxu0 0.0
        %1062 = vmatprep.subr.mxu0 0.0
        %1063 = vmatpush2.msra.mxu0 0.0
        %1064 = vmatprep.subr.mxu0 0.0
        %1065 = vmatpush2.msra.mxu0 0.0
        %1066 = vmatprep.subr.mxu0 0.0
        %1067 = vmatpush2.msra.mxu0 0.0
        %1068 = vmatprep.subr.mxu0 0.0
        %1069 = vmatpush2.msra.mxu0 0.0
        %1070 = vmatprep.subr.mxu0 0.0
        %1071 = vmatpush2.msra.mxu0 0.0
        %1072 = vmatprep.subr.mxu0 0.0
        %1073 = vmatpush2.msra.mxu0 0.0
        %1074 = vmatprep.mubr.f32.mxu0 0.0
        %v1075 = vand.u32 %v1006, 4294901760
        %v1076 = vsub.f32 %v1006, %v1075
        %v1077 = vand.u32 %v1076, 4294901760
        %v1078 = vsub.f32 %v1076, %v1077
        %v1079 = vand.u32 %v1078, 4294901760
        %1080 = vmatmul.mubr.f32.gmra.mxu0 %v1079
        %v1081 = vpop.f32.mrf.mxu0
        %v1082 = vadd.f32 0.0, %v1081
        %v1083 = vpop.f32.mrf.mxu0
        %v1084 = vadd.f32 0.0, %v1083
        %1085 = vdwg.mxu0
        %1086 = vmatprep.subr.mxu0 0.0
        %1087 = vmatpush1.msra.mxu0 0.0
        %1088 = vmatprep.subr.mxu0 0.0
        %1089 = vmatpush1.msra.mxu0 0.0
        %1090 = vmatprep.subr.mxu0 0.0
        %1091 = vmatpush1.msra.mxu0 0.0
        %1092 = vmatprep.subr.mxu0 0.0
        %1093 = vmatpush1.msra.mxu0 0.0
        %1094 = vmatprep.subr.mxu0 0.0
        %1095 = vmatpush1.msra.mxu0 0.0
        %1096 = vmatprep.subr.mxu0 0.0
        %1097 = vmatpush1.msra.mxu0 0.0
        %1098 = vmatprep.subr.mxu0 0.0
        %1099 = vmatpush1.msra.mxu0 0.0
        %1100 = vmatprep.subr.mxu0 0.0
        %1101 = vmatpush1.msra.mxu0 0.0
        %1102 = vmatprep.subr.mxu0 0.0
        %1103 = vmatpush1.msra.mxu0 0.0
        %1104 = vmatprep.subr.mxu0 0.0
        %1105 = vmatpush1.msra.mxu0 0.0
        %1106 = vmatprep.subr.mxu0 0.0
        %1107 = vmatpush1.msra.mxu0 0.0
        %1108 = vmatprep.subr.mxu0 0.0
        %1109 = vmatpush1.msra.mxu0 0.0
        %1110 = vmatprep.subr.mxu0 0.0
        %1111 = vmatpush1.msra.mxu0 0.0
        %1112 = vmatprep.subr.mxu0 0.0
        %1113 = vmatpush1.msra.mxu0 0.0
        %1114 = vmatprep.subr.mxu0 0.0
        %1115 = vmatpush1.msra.mxu0 0.0
        %v1116 = vand.u32 %v537, 4294901760
        %v1117 = vsub.f32 %v537, %v1116
        %v1118 = vand.u32 %v1117, 4294901760
        %v1119 = vsub.f32 %v1117, %v1118
        %v1120 = vand.u32 %v1119, 4294901760
        %1121 = vmatprep.subr.mxu0 %v1120
        %v1122 = vand.u32 %v535, 4294901760
        %v1123 = vsub.f32 %v535, %v1122
        %v1124 = vand.u32 %v1123, 4294901760
        %v1125 = vsub.f32 %v1123, %v1124
        %v1126 = vand.u32 %v1125, 4294901760
        %1127 = vmatpush1.msra.mxu0 %v1126
        %1128 = vmatprep.subr.mxu0 0.0
        %1129 = vmatpush2.msra.mxu0 0.0
        %1130 = vmatprep.subr.mxu0 0.0
        %1131 = vmatpush2.msra.mxu0 0.0
        %1132 = vmatprep.subr.mxu0 0.0
        %1133 = vmatpush2.msra.mxu0 0.0
        %1134 = vmatprep.subr.mxu0 0.0
        %1135 = vmatpush2.msra.mxu0 0.0
        %1136 = vmatprep.subr.mxu0 0.0
        %1137 = vmatpush2.msra.mxu0 0.0
        %1138 = vmatprep.subr.mxu0 0.0
        %1139 = vmatpush2.msra.mxu0 0.0
        %1140 = vmatprep.subr.mxu0 0.0
        %1141 = vmatpush2.msra.mxu0 0.0
        %1142 = vmatprep.subr.mxu0 0.0
        %1143 = vmatpush2.msra.mxu0 0.0
        %1144 = vmatprep.subr.mxu0 0.0
        %1145 = vmatpush2.msra.mxu0 0.0
        %1146 = vmatprep.subr.mxu0 0.0
        %1147 = vmatpush2.msra.mxu0 0.0
        %1148 = vmatprep.subr.mxu0 0.0
        %1149 = vmatpush2.msra.mxu0 0.0
        %1150 = vmatprep.subr.mxu0 0.0
        %1151 = vmatpush2.msra.mxu0 0.0
        %1152 = vmatprep.subr.mxu0 0.0
        %1153 = vmatpush2.msra.mxu0 0.0
        %1154 = vmatprep.subr.mxu0 0.0
        %1155 = vmatpush2.msra.mxu0 0.0
        %1156 = vmatprep.subr.mxu0 0.0
        %1157 = vmatpush2.msra.mxu0 0.0
        %1158 = vmatprep.subr.mxu0 0.0
        %1159 = vmatpush2.msra.mxu0 0.0
        %1160 = vmatprep.mubr.f32.mxu0 0.0
        %v1161 = vand.u32 %v1006, 4294901760
        %1162 = vmatmul.mubr.f32.gmra.mxu0 %v1161
        %v1163 = vpop.f32.mrf.mxu0
        %v1164 = vadd.f32 %v1082, %v1163
        %v1165 = vpop.f32.mrf.mxu0
        %v1166 = vadd.f32 %v1084, %v1165
        %1167 = vdwg.mxu0
        %1168 = vmatprep.subr.mxu0 0.0
        %1169 = vmatpush1.msra.mxu0 0.0
        %1170 = vmatprep.subr.mxu0 0.0
        %1171 = vmatpush1.msra.mxu0 0.0
        %1172 = vmatprep.subr.mxu0 0.0
        %1173 = vmatpush1.msra.mxu0 0.0
        %1174 = vmatprep.subr.mxu0 0.0
        %1175 = vmatpush1.msra.mxu0 0.0
        %1176 = vmatprep.subr.mxu0 0.0
        %1177 = vmatpush1.msra.mxu0 0.0
        %1178 = vmatprep.subr.mxu0 0.0
        %1179 = vmatpush1.msra.mxu0 0.0
        %1180 = vmatprep.subr.mxu0 0.0
        %1181 = vmatpush1.msra.mxu0 0.0
        %1182 = vmatprep.subr.mxu0 0.0
        %1183 = vmatpush1.msra.mxu0 0.0
        %1184 = vmatprep.subr.mxu0 0.0
        %1185 = vmatpush1.msra.mxu0 0.0
        %1186 = vmatprep.subr.mxu0 0.0
        %1187 = vmatpush1.msra.mxu0 0.0
        %1188 = vmatprep.subr.mxu0 0.0
        %1189 = vmatpush1.msra.mxu0 0.0
        %1190 = vmatprep.subr.mxu0 0.0
        %1191 = vmatpush1.msra.mxu0 0.0
        %1192 = vmatprep.subr.mxu0 0.0
        %1193 = vmatpush1.msra.mxu0 0.0
        %1194 = vmatprep.subr.mxu0 0.0
        %1195 = vmatpush1.msra.mxu0 0.0
        %1196 = vmatprep.subr.mxu0 0.0
        %1197 = vmatpush1.msra.mxu0 0.0
        %v1198 = vand.u32 %v537, 4294901760
        %v1199 = vsub.f32 %v537, %v1198
        %1200 = vmatprep.subr.mxu0 %v1199
        %v1201 = vand.u32 %v535, 4294901760
        %v1202 = vsub.f32 %v535, %v1201
        %1203 = vmatpush1.msra.mxu0 %v1202
        %1204 = vmatprep.subr.mxu0 0.0
        %1205 = vmatpush2.msra.mxu0 0.0
        %1206 = vmatprep.subr.mxu0 0.0
        %1207 = vmatpush2.msra.mxu0 0.0
        %1208 = vmatprep.subr.mxu0 0.0
        %1209 = vmatpush2.msra.mxu0 0.0
        %1210 = vmatprep.subr.mxu0 0.0
        %1211 = vmatpush2.msra.mxu0 0.0
        %1212 = vmatprep.subr.mxu0 0.0
        %1213 = vmatpush2.msra.mxu0 0.0
        %1214 = vmatprep.subr.mxu0 0.0
        %1215 = vmatpush2.msra.mxu0 0.0
        %1216 = vmatprep.subr.mxu0 0.0
        %1217 = vmatpush2.msra.mxu0 0.0
        %1218 = vmatprep.subr.mxu0 0.0
        %1219 = vmatpush2.msra.mxu0 0.0
        %1220 = vmatprep.subr.mxu0 0.0
        %1221 = vmatpush2.msra.mxu0 0.0
        %1222 = vmatprep.subr.mxu0 0.0
        %1223 = vmatpush2.msra.mxu0 0.0
        %1224 = vmatprep.subr.mxu0 0.0
        %1225 = vmatpush2.msra.mxu0 0.0
        %1226 = vmatprep.subr.mxu0 0.0
        %1227 = vmatpush2.msra.mxu0 0.0
        %1228 = vmatprep.subr.mxu0 0.0
        %1229 = vmatpush2.msra.mxu0 0.0
        %1230 = vmatprep.subr.mxu0 0.0
        %1231 = vmatpush2.msra.mxu0 0.0
        %1232 = vmatprep.subr.mxu0 0.0
        %1233 = vmatpush2.msra.mxu0 0.0
        %1234 = vmatprep.subr.mxu0 0.0
        %1235 = vmatpush2.msra.mxu0 0.0
        %1236 = vmatprep.mubr.f32.mxu0 0.0
        %v1237 = vand.u32 %v1006, 4294901760
        %v1238 = vsub.f32 %v1006, %v1237
        %1239 = vmatmul.mubr.f32.gmra.mxu0 %v1238
        %v1240 = vpop.f32.mrf.mxu0
        %v1241 = vadd.f32 %v1164, %v1240
        %v1242 = vpop.f32.mrf.mxu0
        %v1243 = vadd.f32 %v1166, %v1242
        %1244 = vdwg.mxu0
        %1245 = vmatprep.subr.mxu0 0.0
        %1246 = vmatpush1.msra.mxu0 0.0
        %1247 = vmatprep.subr.mxu0 0.0
        %1248 = vmatpush1.msra.mxu0 0.0
        %1249 = vmatprep.subr.mxu0 0.0
        %1250 = vmatpush1.msra.mxu0 0.0
        %1251 = vmatprep.subr.mxu0 0.0
        %1252 = vmatpush1.msra.mxu0 0.0
        %1253 = vmatprep.subr.mxu0 0.0
        %1254 = vmatpush1.msra.mxu0 0.0
        %1255 = vmatprep.subr.mxu0 0.0
        %1256 = vmatpush1.msra.mxu0 0.0
        %1257 = vmatprep.subr.mxu0 0.0
        %1258 = vmatpush1.msra.mxu0 0.0
        %1259 = vmatprep.subr.mxu0 0.0
        %1260 = vmatpush1.msra.mxu0 0.0
        %1261 = vmatprep.subr.mxu0 0.0
        %1262 = vmatpush1.msra.mxu0 0.0
        %1263 = vmatprep.subr.mxu0 0.0
        %1264 = vmatpush1.msra.mxu0 0.0
        %1265 = vmatprep.subr.mxu0 0.0
        %1266 = vmatpush1.msra.mxu0 0.0
        %1267 = vmatprep.subr.mxu0 0.0
        %1268 = vmatpush1.msra.mxu0 0.0
        %1269 = vmatprep.subr.mxu0 0.0
        %1270 = vmatpush1.msra.mxu0 0.0
        %1271 = vmatprep.subr.mxu0 0.0
        %1272 = vmatpush1.msra.mxu0 0.0
        %1273 = vmatprep.subr.mxu0 0.0
        %1274 = vmatpush1.msra.mxu0 0.0
        %v1275 = vand.u32 %v537, 4294901760
        %1276 = vmatprep.subr.mxu0 %v1275
        %v1277 = vand.u32 %v535, 4294901760
        %1278 = vmatpush1.msra.mxu0 %v1277
        %1279 = vmatprep.subr.mxu0 0.0
        %1280 = vmatpush2.msra.mxu0 0.0
        %1281 = vmatprep.subr.mxu0 0.0
        %1282 = vmatpush2.msra.mxu0 0.0
        %1283 = vmatprep.subr.mxu0 0.0
        %1284 = vmatpush2.msra.mxu0 0.0
        %1285 = vmatprep.subr.mxu0 0.0
        %1286 = vmatpush2.msra.mxu0 0.0
        %1287 = vmatprep.subr.mxu0 0.0
        %1288 = vmatpush2.msra.mxu0 0.0
        %1289 = vmatprep.subr.mxu0 0.0
        %1290 = vmatpush2.msra.mxu0 0.0
        %1291 = vmatprep.subr.mxu0 0.0
        %1292 = vmatpush2.msra.mxu0 0.0
        %1293 = vmatprep.subr.mxu0 0.0
        %1294 = vmatpush2.msra.mxu0 0.0
        %1295 = vmatprep.subr.mxu0 0.0
        %1296 = vmatpush2.msra.mxu0 0.0
        %1297 = vmatprep.subr.mxu0 0.0
        %1298 = vmatpush2.msra.mxu0 0.0
        %1299 = vmatprep.subr.mxu0 0.0
        %1300 = vmatpush2.msra.mxu0 0.0
        %1301 = vmatprep.subr.mxu0 0.0
        %1302 = vmatpush2.msra.mxu0 0.0
        %1303 = vmatprep.subr.mxu0 0.0
        %1304 = vmatpush2.msra.mxu0 0.0
        %1305 = vmatprep.subr.mxu0 0.0
        %1306 = vmatpush2.msra.mxu0 0.0
        %1307 = vmatprep.subr.mxu0 0.0
        %1308 = vmatpush2.msra.mxu0 0.0
        %1309 = vmatprep.subr.mxu0 0.0
        %1310 = vmatpush2.msra.mxu0 0.0
        %1311 = vmatprep.mubr.f32.mxu0 0.0
        %v1312 = vand.u32 %v1006, 4294901760
        %v1313 = vsub.f32 %v1006, %v1312
        %v1314 = vand.u32 %v1313, 4294901760
        %1315 = vmatmul.mubr.f32.gmra.mxu0 %v1314
        %v1316 = vpop.f32.mrf.mxu0
        %v1317 = vadd.f32 %v1241, %v1316
        %v1318 = vpop.f32.mrf.mxu0
        %v1319 = vadd.f32 %v1243, %v1318
        %1320 = vdwg.mxu0
        %1321 = vmatprep.subr.mxu0 0.0
        %1322 = vmatpush1.msra.mxu0 0.0
        %1323 = vmatprep.subr.mxu0 0.0
        %1324 = vmatpush1.msra.mxu0 0.0
        %1325 = vmatprep.subr.mxu0 0.0
        %1326 = vmatpush1.msra.mxu0 0.0
        %1327 = vmatprep.subr.mxu0 0.0
        %1328 = vmatpush1.msra.mxu0 0.0
        %1329 = vmatprep.subr.mxu0 0.0
        %1330 = vmatpush1.msra.mxu0 0.0
        %1331 = vmatprep.subr.mxu0 0.0
        %1332 = vmatpush1.msra.mxu0 0.0
        %1333 = vmatprep.subr.mxu0 0.0
        %1334 = vmatpush1.msra.mxu0 0.0
        %1335 = vmatprep.subr.mxu0 0.0
        %1336 = vmatpush1.msra.mxu0 0.0
        %1337 = vmatprep.subr.mxu0 0.0
        %1338 = vmatpush1.msra.mxu0 0.0
        %1339 = vmatprep.subr.mxu0 0.0
        %1340 = vmatpush1.msra.mxu0 0.0
        %1341 = vmatprep.subr.mxu0 0.0
        %1342 = vmatpush1.msra.mxu0 0.0
        %1343 = vmatprep.subr.mxu0 0.0
        %1344 = vmatpush1.msra.mxu0 0.0
        %1345 = vmatprep.subr.mxu0 0.0
        %1346 = vmatpush1.msra.mxu0 0.0
        %1347 = vmatprep.subr.mxu0 0.0
        %1348 = vmatpush1.msra.mxu0 0.0
        %1349 = vmatprep.subr.mxu0 0.0
        %1350 = vmatpush1.msra.mxu0 0.0
        %v1351 = vand.u32 %v537, 4294901760
        %v1352 = vsub.f32 %v537, %v1351
        %v1353 = vand.u32 %v1352, 4294901760
        %1354 = vmatprep.subr.mxu0 %v1353
        %v1355 = vand.u32 %v535, 4294901760
        %v1356 = vsub.f32 %v535, %v1355
        %v1357 = vand.u32 %v1356, 4294901760
        %1358 = vmatpush1.msra.mxu0 %v1357
        %1359 = vmatprep.subr.mxu0 0.0
        %1360 = vmatpush2.msra.mxu0 0.0
        %1361 = vmatprep.subr.mxu0 0.0
        %1362 = vmatpush2.msra.mxu0 0.0
        %1363 = vmatprep.subr.mxu0 0.0
        %1364 = vmatpush2.msra.mxu0 0.0
        %1365 = vmatprep.subr.mxu0 0.0
        %1366 = vmatpush2.msra.mxu0 0.0
        %1367 = vmatprep.subr.mxu0 0.0
        %1368 = vmatpush2.msra.mxu0 0.0
        %1369 = vmatprep.subr.mxu0 0.0
        %1370 = vmatpush2.msra.mxu0 0.0
        %1371 = vmatprep.subr.mxu0 0.0
        %1372 = vmatpush2.msra.mxu0 0.0
        %1373 = vmatprep.subr.mxu0 0.0
        %1374 = vmatpush2.msra.mxu0 0.0
        %1375 = vmatprep.subr.mxu0 0.0
        %1376 = vmatpush2.msra.mxu0 0.0
        %1377 = vmatprep.subr.mxu0 0.0
        %1378 = vmatpush2.msra.mxu0 0.0
        %1379 = vmatprep.subr.mxu0 0.0
        %1380 = vmatpush2.msra.mxu0 0.0
        %1381 = vmatprep.subr.mxu0 0.0
        %1382 = vmatpush2.msra.mxu0 0.0
        %1383 = vmatprep.subr.mxu0 0.0
        %1384 = vmatpush2.msra.mxu0 0.0
        %1385 = vmatprep.subr.mxu0 0.0
        %1386 = vmatpush2.msra.mxu0 0.0
        %1387 = vmatprep.subr.mxu0 0.0
        %1388 = vmatpush2.msra.mxu0 0.0
        %1389 = vmatprep.subr.mxu0 0.0
        %1390 = vmatpush2.msra.mxu0 0.0
        %1391 = vmatprep.mubr.f32.mxu0 0.0
        %v1392 = vand.u32 %v1006, 4294901760
        %1393 = vmatmul.mubr.f32.gmra.mxu0 %v1392
        %v1394 = vpop.f32.mrf.mxu0
        %v1395 = vadd.f32 %v1317, %v1394
        %v1396 = vpop.f32.mrf.mxu0
        %v1397 = vadd.f32 %v1319, %v1396
        %1398 = vdwg.mxu0
        %1399 = vmatprep.subr.mxu0 0.0
        %1400 = vmatpush1.msra.mxu0 0.0
        %1401 = vmatprep.subr.mxu0 0.0
        %1402 = vmatpush1.msra.mxu0 0.0
        %1403 = vmatprep.subr.mxu0 0.0
        %1404 = vmatpush1.msra.mxu0 0.0
        %1405 = vmatprep.subr.mxu0 0.0
        %1406 = vmatpush1.msra.mxu0 0.0
        %1407 = vmatprep.subr.mxu0 0.0
        %1408 = vmatpush1.msra.mxu0 0.0
        %1409 = vmatprep.subr.mxu0 0.0
        %1410 = vmatpush1.msra.mxu0 0.0
        %1411 = vmatprep.subr.mxu0 0.0
        %1412 = vmatpush1.msra.mxu0 0.0
        %1413 = vmatprep.subr.mxu0 0.0
        %1414 = vmatpush1.msra.mxu0 0.0
        %1415 = vmatprep.subr.mxu0 0.0
        %1416 = vmatpush1.msra.mxu0 0.0
        %1417 = vmatprep.subr.mxu0 0.0
        %1418 = vmatpush1.msra.mxu0 0.0
        %1419 = vmatprep.subr.mxu0 0.0
        %1420 = vmatpush1.msra.mxu0 0.0
        %1421 = vmatprep.subr.mxu0 0.0
        %1422 = vmatpush1.msra.mxu0 0.0
        %1423 = vmatprep.subr.mxu0 0.0
        %1424 = vmatpush1.msra.mxu0 0.0
        %1425 = vmatprep.subr.mxu0 0.0
        %1426 = vmatpush1.msra.mxu0 0.0
        %1427 = vmatprep.subr.mxu0 0.0
        %1428 = vmatpush1.msra.mxu0 0.0
        %v1429 = vand.u32 %v537, 4294901760
        %1430 = vmatprep.subr.mxu0 %v1429
        %v1431 = vand.u32 %v535, 4294901760
        %1432 = vmatpush1.msra.mxu0 %v1431
        %1433 = vmatprep.subr.mxu0 0.0
        %1434 = vmatpush2.msra.mxu0 0.0
        %1435 = vmatprep.subr.mxu0 0.0
        %1436 = vmatpush2.msra.mxu0 0.0
        %1437 = vmatprep.subr.mxu0 0.0
        %1438 = vmatpush2.msra.mxu0 0.0
        %1439 = vmatprep.subr.mxu0 0.0
        %1440 = vmatpush2.msra.mxu0 0.0
        %1441 = vmatprep.subr.mxu0 0.0
        %1442 = vmatpush2.msra.mxu0 0.0
        %1443 = vmatprep.subr.mxu0 0.0
        %1444 = vmatpush2.msra.mxu0 0.0
        %1445 = vmatprep.subr.mxu0 0.0
        %1446 = vmatpush2.msra.mxu0 0.0
        %1447 = vmatprep.subr.mxu0 0.0
        %1448 = vmatpush2.msra.mxu0 0.0
        %1449 = vmatprep.subr.mxu0 0.0
        %1450 = vmatpush2.msra.mxu0 0.0
        %1451 = vmatprep.subr.mxu0 0.0
        %1452 = vmatpush2.msra.mxu0 0.0
        %1453 = vmatprep.subr.mxu0 0.0
        %1454 = vmatpush2.msra.mxu0 0.0
        %1455 = vmatprep.subr.mxu0 0.0
        %1456 = vmatpush2.msra.mxu0 0.0
        %1457 = vmatprep.subr.mxu0 0.0
        %1458 = vmatpush2.msra.mxu0 0.0
        %1459 = vmatprep.subr.mxu0 0.0
        %1460 = vmatpush2.msra.mxu0 0.0
        %1461 = vmatprep.subr.mxu0 0.0
        %1462 = vmatpush2.msra.mxu0 0.0
        %1463 = vmatprep.subr.mxu0 0.0
        %1464 = vmatpush2.msra.mxu0 0.0
        %1465 = vmatprep.mubr.f32.mxu0 0.0
        %v1466 = vand.u32 %v1006, 4294901760
        %1467 = vmatmul.mubr.f32.gmra.mxu0 %v1466
        %v1468 = vpop.f32.mrf.mxu0
        %v1469 = vadd.f32 %v1395, %v1468
        %v1470 = vpop.f32.mrf.mxu0
        %v1471 = vadd.f32 %v1397, %v1470
        %1472 = vdwg.mxu0
        %v1474 = vcombine.high %v486, %v486
        %1476 = vxpose.xlu0.b32.start [1/16] %v486, 128
        %1477 = vxpose.xlu0.b32.cont [2/16] 0.0, 128
        %1478 = vxpose.xlu0.b32.cont [3/16] 0.0, 128
        %1479 = vxpose.xlu0.b32.cont [4/16] 0.0, 128
        %1480 = vxpose.xlu0.b32.cont [5/16] 0.0, 128
        %1481 = vxpose.xlu0.b32.cont [6/16] 0.0, 128
        %1482 = vxpose.xlu0.b32.cont [7/16] 0.0, 128
        %1483 = vxpose.xlu0.b32.cont [8/16] 0.0, 128
        %1484 = vxpose.xlu0.b32.cont [9/16] 0.0, 128
        %1485 = vxpose.xlu0.b32.cont [10/16] 0.0, 128
        %1486 = vxpose.xlu0.b32.cont [11/16] 0.0, 128
        %1487 = vxpose.xlu0.b32.cont [12/16] 0.0, 128
        %1488 = vxpose.xlu0.b32.cont [13/16] 0.0, 128
        %1489 = vxpose.xlu0.b32.cont [14/16] 0.0, 128
        %1490 = vxpose.xlu0.b32.cont [15/16] 0.0, 128
        %1491 = vxpose.xlu0.b32.end [16/16] 0.0, 128
        %v1492 = vpop.trf.xlu0
        %v1493 = vpop.trf.xlu0
        %v1494 = vpop.trf.xlu0
        %v1495 = vpop.trf.xlu0
        %v1496 = vpop.trf.xlu0
        %v1497 = vpop.trf.xlu0
        %v1498 = vpop.trf.xlu0
        %v1499 = vpop.trf.xlu0
        %v1500 = vpop.trf.xlu0
        %v1501 = vpop.trf.xlu0
        %v1502 = vpop.trf.xlu0
        %v1503 = vpop.trf.xlu0
        %v1504 = vpop.trf.xlu0
        %v1505 = vpop.trf.xlu0
        %v1506 = vpop.trf.xlu0
        %v1507 = vpop.trf.xlu0
        %1508 = vxpose.xlu0.b32.start [1/16] %v1474, 128
        %1509 = vxpose.xlu0.b32.cont [2/16] 0.0, 128
        %1510 = vxpose.xlu0.b32.cont [3/16] 0.0, 128
        %1511 = vxpose.xlu0.b32.cont [4/16] 0.0, 128
        %1512 = vxpose.xlu0.b32.cont [5/16] 0.0, 128
        %1513 = vxpose.xlu0.b32.cont [6/16] 0.0, 128
        %1514 = vxpose.xlu0.b32.cont [7/16] 0.0, 128
        %1515 = vxpose.xlu0.b32.cont [8/16] 0.0, 128
        %1516 = vxpose.xlu0.b32.cont [9/16] 0.0, 128
        %1517 = vxpose.xlu0.b32.cont [10/16] 0.0, 128
        %1518 = vxpose.xlu0.b32.cont [11/16] 0.0, 128
        %1519 = vxpose.xlu0.b32.cont [12/16] 0.0, 128
        %1520 = vxpose.xlu0.b32.cont [13/16] 0.0, 128
        %1521 = vxpose.xlu0.b32.cont [14/16] 0.0, 128
        %1522 = vxpose.xlu0.b32.cont [15/16] 0.0, 128
        %1523 = vxpose.xlu0.b32.end [16/16] 0.0, 128
        %v1524 = vpop.trf.xlu0
        %v1525 = vpop.trf.xlu0
        %v1526 = vpop.trf.xlu0
        %v1527 = vpop.trf.xlu0
        %v1528 = vpop.trf.xlu0
        %v1529 = vpop.trf.xlu0
        %v1530 = vpop.trf.xlu0
        %v1531 = vpop.trf.xlu0
        %v1532 = vpop.trf.xlu0
        %v1533 = vpop.trf.xlu0
        %v1534 = vpop.trf.xlu0
        %v1535 = vpop.trf.xlu0
        %v1536 = vpop.trf.xlu0
        %v1537 = vpop.trf.xlu0
        %v1538 = vpop.trf.xlu0
        %v1539 = vpop.trf.xlu0
        %v1540 = vlaneseq
        %v1541 = vshrl.u32 %v1540, 7
        %v1542 = vsub.s32 0, %v1541
        %v1543 = vrot.slane %v1469, %v1542
        %v1544 = vlaneseq
        %v1545 = vshrl.u32 %v1544, 7
        %v1546 = vsub.s32 0, %v1545
        %v1547 = vrot.slane %v1471, %v1546
        %v1549 = vsel %vm531, %v1492, 0
        %v1552 = vsel %vm531, %v1493, 0
        %v1555 = vsel %vm531, %v1494, 0
        %v1558 = vsel %vm531, %v1495, 0
        %v1561 = vsel %vm531, %v1496, 0
        %v1564 = vsel %vm531, %v1497, 0
        %v1567 = vsel %vm531, %v1498, 0
        %v1570 = vsel %vm531, %v1499, 0
        %v1573 = vsel %vm531, %v1500, 0
        %v1576 = vsel %vm531, %v1501, 0
        %v1579 = vsel %vm531, %v1502, 0
        %v1582 = vsel %vm531, %v1503, 0
        %v1585 = vsel %vm531, %v1504, 0
        %v1588 = vsel %vm531, %v1505, 0
        %v1591 = vsel %vm531, %v1506, 0
        %v1594 = vsel %vm531, %v1507, 0
        %v1597 = vsel %vm531, %v1524, 0
        %v1600 = vsel %vm531, %v1525, 0
        %v1603 = vsel %vm531, %v1526, 0
        %v1606 = vsel %vm531, %v1527, 0
        %v1609 = vsel %vm531, %v1528, 0
        %v1612 = vsel %vm531, %v1529, 0
        %v1615 = vsel %vm531, %v1530, 0
        %v1618 = vsel %vm531, %v1531, 0
        %v1621 = vsel %vm531, %v1532, 0
        %v1624 = vsel %vm531, %v1533, 0
        %v1627 = vsel %vm531, %v1534, 0
        %v1630 = vsel %vm531, %v1535, 0
        %v1633 = vsel %vm531, %v1536, 0
        %v1636 = vsel %vm531, %v1537, 0
        %v1639 = vsel %vm531, %v1538, 0
        %v1642 = vsel %vm531, %v1539, 0
        %v1645 = vsel %vm447, %v1000, 0
        %v1648 = vsel %vm447, %v1002, 0
        %1650 = vmatprep.subr.mxu0 0.0
        %1651 = vmatpush1.msra.mxu0 0.0
        %1652 = vmatprep.subr.mxu0 0.0
        %1653 = vmatpush1.msra.mxu0 0.0
        %1654 = vmatprep.subr.mxu0 0.0
        %1655 = vmatpush1.msra.mxu0 0.0
        %1656 = vmatprep.subr.mxu0 0.0
        %1657 = vmatpush1.msra.mxu0 0.0
        %1658 = vmatprep.subr.mxu0 0.0
        %1659 = vmatpush1.msra.mxu0 0.0
        %1660 = vmatprep.subr.mxu0 0.0
        %1661 = vmatpush1.msra.mxu0 0.0
        %1662 = vmatprep.subr.mxu0 0.0
        %1663 = vmatpush1.msra.mxu0 0.0
        %1664 = vmatprep.subr.mxu0 0.0
        %1665 = vmatpush1.msra.mxu0 0.0
        %1666 = vmatprep.subr.mxu0 0.0
        %1667 = vmatpush1.msra.mxu0 0.0
        %1668 = vmatprep.subr.mxu0 0.0
        %1669 = vmatpush1.msra.mxu0 0.0
        %1670 = vmatprep.subr.mxu0 0.0
        %1671 = vmatpush1.msra.mxu0 0.0
        %1672 = vmatprep.subr.mxu0 0.0
        %1673 = vmatpush1.msra.mxu0 0.0
        %1674 = vmatprep.subr.mxu0 0.0
        %1675 = vmatpush1.msra.mxu0 0.0
        %1676 = vmatprep.subr.mxu0 0.0
        %1677 = vmatpush1.msra.mxu0 0.0
        %1678 = vmatprep.subr.mxu0 0.0
        %1679 = vmatpush1.msra.mxu0 0.0
        %v1680 = vand.u32 %v1648, 4294901760
        %1681 = vmatprep.subr.mxu0 %v1680
        %v1682 = vand.u32 %v1645, 4294901760
        %1683 = vmatpush1.msra.mxu0 %v1682
        %1684 = vmatprep.subr.mxu0 0.0
        %1685 = vmatpush2.msra.mxu0 0.0
        %1686 = vmatprep.subr.mxu0 0.0
        %1687 = vmatpush2.msra.mxu0 0.0
        %1688 = vmatprep.subr.mxu0 0.0
        %1689 = vmatpush2.msra.mxu0 0.0
        %1690 = vmatprep.subr.mxu0 0.0
        %1691 = vmatpush2.msra.mxu0 0.0
        %1692 = vmatprep.subr.mxu0 0.0
        %1693 = vmatpush2.msra.mxu0 0.0
        %1694 = vmatprep.subr.mxu0 0.0
        %1695 = vmatpush2.msra.mxu0 0.0
        %1696 = vmatprep.subr.mxu0 0.0
        %1697 = vmatpush2.msra.mxu0 0.0
        %1698 = vmatprep.subr.mxu0 0.0
        %1699 = vmatpush2.msra.mxu0 0.0
        %1700 = vmatprep.subr.mxu0 0.0
        %1701 = vmatpush2.msra.mxu0 0.0
        %1702 = vmatprep.subr.mxu0 0.0
        %1703 = vmatpush2.msra.mxu0 0.0
        %1704 = vmatprep.subr.mxu0 0.0
        %1705 = vmatpush2.msra.mxu0 0.0
        %1706 = vmatprep.subr.mxu0 0.0
        %1707 = vmatpush2.msra.mxu0 0.0
        %1708 = vmatprep.subr.mxu0 0.0
        %1709 = vmatpush2.msra.mxu0 0.0
        %1710 = vmatprep.subr.mxu0 0.0
        %1711 = vmatpush2.msra.mxu0 0.0
        %1712 = vmatprep.subr.mxu0 0.0
        %1713 = vmatpush2.msra.mxu0 0.0
        %1714 = vmatprep.subr.mxu0 0.0
        %1715 = vmatpush2.msra.mxu0 0.0
        %1716 = vmatprep.mubr.f32.mxu0 0.0
        %v1717 = vand.u32 %v1549, 4294901760
        %v1718 = vsub.f32 %v1549, %v1717
        %v1719 = vand.u32 %v1718, 4294901760
        %v1720 = vsub.f32 %v1718, %v1719
        %v1721 = vand.u32 %v1720, 4294901760
        %1722 = vmatmul.mubr.f32.gmra.mxu0 %v1721
        %v1723 = vpop.f32.mrf.mxu0
        %v1724 = vadd.f32 %v1543, %v1723
        %v1725 = vpop.f32.mrf.mxu0
        %v1726 = vadd.f32 %v1547, %v1725
        %1727 = vmatprep.mubr.f32.mxu0 0.0
        %v1728 = vand.u32 %v1552, 4294901760
        %v1729 = vsub.f32 %v1552, %v1728
        %v1730 = vand.u32 %v1729, 4294901760
        %v1731 = vsub.f32 %v1729, %v1730
        %v1732 = vand.u32 %v1731, 4294901760
        %1733 = vmatmul.mubr.f32.gmra.mxu0 %v1732
        %v1734 = vpop.f32.mrf.mxu0
        %v1735 = vadd.f32 %v1543, %v1734
        %v1736 = vpop.f32.mrf.mxu0
        %v1737 = vadd.f32 %v1547, %v1736
        %1738 = vmatprep.mubr.f32.mxu0 0.0
        %v1739 = vand.u32 %v1555, 4294901760
        %v1740 = vsub.f32 %v1555, %v1739
        %v1741 = vand.u32 %v1740, 4294901760
        %v1742 = vsub.f32 %v1740, %v1741
        %v1743 = vand.u32 %v1742, 4294901760
        %1744 = vmatmul.mubr.f32.gmra.mxu0 %v1743
        %v1745 = vpop.f32.mrf.mxu0
        %v1746 = vadd.f32 %v1543, %v1745
        %v1747 = vpop.f32.mrf.mxu0
        %v1748 = vadd.f32 %v1547, %v1747
        %1749 = vmatprep.mubr.f32.mxu0 0.0
        %v1750 = vand.u32 %v1558, 4294901760
        %v1751 = vsub.f32 %v1558, %v1750
        %v1752 = vand.u32 %v1751, 4294901760
        %v1753 = vsub.f32 %v1751, %v1752
        %v1754 = vand.u32 %v1753, 4294901760
        %1755 = vmatmul.mubr.f32.gmra.mxu0 %v1754
        %v1756 = vpop.f32.mrf.mxu0
        %v1757 = vadd.f32 %v1543, %v1756
        %v1758 = vpop.f32.mrf.mxu0
        %v1759 = vadd.f32 %v1547, %v1758
        %1760 = vmatprep.mubr.f32.mxu0 0.0
        %v1761 = vand.u32 %v1561, 4294901760
        %v1762 = vsub.f32 %v1561, %v1761
        %v1763 = vand.u32 %v1762, 4294901760
        %v1764 = vsub.f32 %v1762, %v1763
        %v1765 = vand.u32 %v1764, 4294901760
        %1766 = vmatmul.mubr.f32.gmra.mxu0 %v1765
        %v1767 = vpop.f32.mrf.mxu0
        %v1768 = vadd.f32 %v1543, %v1767
        %v1769 = vpop.f32.mrf.mxu0
        %v1770 = vadd.f32 %v1547, %v1769
        %1771 = vmatprep.mubr.f32.mxu0 0.0
        %v1772 = vand.u32 %v1564, 4294901760
        %v1773 = vsub.f32 %v1564, %v1772
        %v1774 = vand.u32 %v1773, 4294901760
        %v1775 = vsub.f32 %v1773, %v1774
        %v1776 = vand.u32 %v1775, 4294901760
        %1777 = vmatmul.mubr.f32.gmra.mxu0 %v1776
        %v1778 = vpop.f32.mrf.mxu0
        %v1779 = vadd.f32 %v1543, %v1778
        %v1780 = vpop.f32.mrf.mxu0
        %v1781 = vadd.f32 %v1547, %v1780
        %1782 = vmatprep.mubr.f32.mxu0 0.0
        %v1783 = vand.u32 %v1567, 4294901760
        %v1784 = vsub.f32 %v1567, %v1783
        %v1785 = vand.u32 %v1784, 4294901760
        %v1786 = vsub.f32 %v1784, %v1785
        %v1787 = vand.u32 %v1786, 4294901760
        %1788 = vmatmul.mubr.f32.gmra.mxu0 %v1787
        %v1789 = vpop.f32.mrf.mxu0
        %v1790 = vadd.f32 %v1543, %v1789
        %v1791 = vpop.f32.mrf.mxu0
        %v1792 = vadd.f32 %v1547, %v1791
        %1793 = vmatprep.mubr.f32.mxu0 0.0
        %v1794 = vand.u32 %v1570, 4294901760
        %v1795 = vsub.f32 %v1570, %v1794
        %v1796 = vand.u32 %v1795, 4294901760
        %v1797 = vsub.f32 %v1795, %v1796
        %v1798 = vand.u32 %v1797, 4294901760
        %1799 = vmatmul.mubr.f32.gmra.mxu0 %v1798
        %v1800 = vpop.f32.mrf.mxu0
        %v1801 = vadd.f32 %v1543, %v1800
        %v1802 = vpop.f32.mrf.mxu0
        %v1803 = vadd.f32 %v1547, %v1802
        %1804 = vmatprep.mubr.f32.mxu0 0.0
        %v1805 = vand.u32 %v1573, 4294901760
        %v1806 = vsub.f32 %v1573, %v1805
        %v1807 = vand.u32 %v1806, 4294901760
        %v1808 = vsub.f32 %v1806, %v1807
        %v1809 = vand.u32 %v1808, 4294901760
        %1810 = vmatmul.mubr.f32.gmra.mxu0 %v1809
        %v1811 = vpop.f32.mrf.mxu0
        %v1812 = vadd.f32 %v1543, %v1811
        %v1813 = vpop.f32.mrf.mxu0
        %v1814 = vadd.f32 %v1547, %v1813
        %1815 = vmatprep.mubr.f32.mxu0 0.0
        %v1816 = vand.u32 %v1576, 4294901760
        %v1817 = vsub.f32 %v1576, %v1816
        %v1818 = vand.u32 %v1817, 4294901760
        %v1819 = vsub.f32 %v1817, %v1818
        %v1820 = vand.u32 %v1819, 4294901760
        %1821 = vmatmul.mubr.f32.gmra.mxu0 %v1820
        %v1822 = vpop.f32.mrf.mxu0
        %v1823 = vadd.f32 %v1543, %v1822
        %v1824 = vpop.f32.mrf.mxu0
        %v1825 = vadd.f32 %v1547, %v1824
        %1826 = vmatprep.mubr.f32.mxu0 0.0
        %v1827 = vand.u32 %v1579, 4294901760
        %v1828 = vsub.f32 %v1579, %v1827
        %v1829 = vand.u32 %v1828, 4294901760
        %v1830 = vsub.f32 %v1828, %v1829
        %v1831 = vand.u32 %v1830, 4294901760
        %1832 = vmatmul.mubr.f32.gmra.mxu0 %v1831
        %v1833 = vpop.f32.mrf.mxu0
        %v1834 = vadd.f32 %v1543, %v1833
        %v1835 = vpop.f32.mrf.mxu0
        %v1836 = vadd.f32 %v1547, %v1835
        %1837 = vmatprep.mubr.f32.mxu0 0.0
        %v1838 = vand.u32 %v1582, 4294901760
        %v1839 = vsub.f32 %v1582, %v1838
        %v1840 = vand.u32 %v1839, 4294901760
        %v1841 = vsub.f32 %v1839, %v1840
        %v1842 = vand.u32 %v1841, 4294901760
        %1843 = vmatmul.mubr.f32.gmra.mxu0 %v1842
        %v1844 = vpop.f32.mrf.mxu0
        %v1845 = vadd.f32 %v1543, %v1844
        %v1846 = vpop.f32.mrf.mxu0
        %v1847 = vadd.f32 %v1547, %v1846
        %1848 = vmatprep.mubr.f32.mxu0 0.0
        %v1849 = vand.u32 %v1585, 4294901760
        %v1850 = vsub.f32 %v1585, %v1849
        %v1851 = vand.u32 %v1850, 4294901760
        %v1852 = vsub.f32 %v1850, %v1851
        %v1853 = vand.u32 %v1852, 4294901760
        %1854 = vmatmul.mubr.f32.gmra.mxu0 %v1853
        %v1855 = vpop.f32.mrf.mxu0
        %v1856 = vadd.f32 %v1543, %v1855
        %v1857 = vpop.f32.mrf.mxu0
        %v1858 = vadd.f32 %v1547, %v1857
        %1859 = vmatprep.mubr.f32.mxu0 0.0
        %v1860 = vand.u32 %v1588, 4294901760
        %v1861 = vsub.f32 %v1588, %v1860
        %v1862 = vand.u32 %v1861, 4294901760
        %v1863 = vsub.f32 %v1861, %v1862
        %v1864 = vand.u32 %v1863, 4294901760
        %1865 = vmatmul.mubr.f32.gmra.mxu0 %v1864
        %v1866 = vpop.f32.mrf.mxu0
        %v1867 = vadd.f32 %v1543, %v1866
        %v1868 = vpop.f32.mrf.mxu0
        %v1869 = vadd.f32 %v1547, %v1868
        %1870 = vmatprep.mubr.f32.mxu0 0.0
        %v1871 = vand.u32 %v1591, 4294901760
        %v1872 = vsub.f32 %v1591, %v1871
        %v1873 = vand.u32 %v1872, 4294901760
        %v1874 = vsub.f32 %v1872, %v1873
        %v1875 = vand.u32 %v1874, 4294901760
        %1876 = vmatmul.mubr.f32.gmra.mxu0 %v1875
        %v1877 = vpop.f32.mrf.mxu0
        %v1878 = vadd.f32 %v1543, %v1877
        %v1879 = vpop.f32.mrf.mxu0
        %v1880 = vadd.f32 %v1547, %v1879
        %1881 = vmatprep.mubr.f32.mxu0 0.0
        %v1882 = vand.u32 %v1594, 4294901760
        %v1883 = vsub.f32 %v1594, %v1882
        %v1884 = vand.u32 %v1883, 4294901760
        %v1885 = vsub.f32 %v1883, %v1884
        %v1886 = vand.u32 %v1885, 4294901760
        %1887 = vmatmul.mubr.f32.gmra.mxu0 %v1886
        %v1888 = vpop.f32.mrf.mxu0
        %v1889 = vadd.f32 %v1543, %v1888
        %v1890 = vpop.f32.mrf.mxu0
        %v1891 = vadd.f32 %v1547, %v1890
        %1892 = vmatprep.mubr.f32.mxu0 0.0
        %v1893 = vand.u32 %v1597, 4294901760
        %v1894 = vsub.f32 %v1597, %v1893
        %v1895 = vand.u32 %v1894, 4294901760
        %v1896 = vsub.f32 %v1894, %v1895
        %v1897 = vand.u32 %v1896, 4294901760
        %1898 = vmatmul.mubr.f32.gmra.mxu0 %v1897
        %v1899 = vpop.f32.mrf.mxu0
        %v1900 = vadd.f32 %v1543, %v1899
        %v1901 = vpop.f32.mrf.mxu0
        %v1902 = vadd.f32 %v1547, %v1901
        %1903 = vmatprep.mubr.f32.mxu0 0.0
        %v1904 = vand.u32 %v1600, 4294901760
        %v1905 = vsub.f32 %v1600, %v1904
        %v1906 = vand.u32 %v1905, 4294901760
        %v1907 = vsub.f32 %v1905, %v1906
        %v1908 = vand.u32 %v1907, 4294901760
        %1909 = vmatmul.mubr.f32.gmra.mxu0 %v1908
        %v1910 = vpop.f32.mrf.mxu0
        %v1911 = vadd.f32 %v1543, %v1910
        %v1912 = vpop.f32.mrf.mxu0
        %v1913 = vadd.f32 %v1547, %v1912
        %1914 = vmatprep.mubr.f32.mxu0 0.0
        %v1915 = vand.u32 %v1603, 4294901760
        %v1916 = vsub.f32 %v1603, %v1915
        %v1917 = vand.u32 %v1916, 4294901760
        %v1918 = vsub.f32 %v1916, %v1917
        %v1919 = vand.u32 %v1918, 4294901760
        %1920 = vmatmul.mubr.f32.gmra.mxu0 %v1919
        %v1921 = vpop.f32.mrf.mxu0
        %v1922 = vadd.f32 %v1543, %v1921
        %v1923 = vpop.f32.mrf.mxu0
        %v1924 = vadd.f32 %v1547, %v1923
        %1925 = vmatprep.mubr.f32.mxu0 0.0
        %v1926 = vand.u32 %v1606, 4294901760
        %v1927 = vsub.f32 %v1606, %v1926
        %v1928 = vand.u32 %v1927, 4294901760
        %v1929 = vsub.f32 %v1927, %v1928
        %v1930 = vand.u32 %v1929, 4294901760
        %1931 = vmatmul.mubr.f32.gmra.mxu0 %v1930
        %v1932 = vpop.f32.mrf.mxu0
        %v1933 = vadd.f32 %v1543, %v1932
        %v1934 = vpop.f32.mrf.mxu0
        %v1935 = vadd.f32 %v1547, %v1934
        %1936 = vmatprep.mubr.f32.mxu0 0.0
        %v1937 = vand.u32 %v1609, 4294901760
        %v1938 = vsub.f32 %v1609, %v1937
        %v1939 = vand.u32 %v1938, 4294901760
        %v1940 = vsub.f32 %v1938, %v1939
        %v1941 = vand.u32 %v1940, 4294901760
        %1942 = vmatmul.mubr.f32.gmra.mxu0 %v1941
        %v1943 = vpop.f32.mrf.mxu0
        %v1944 = vadd.f32 %v1543, %v1943
        %v1945 = vpop.f32.mrf.mxu0
        %v1946 = vadd.f32 %v1547, %v1945
        %1947 = vmatprep.mubr.f32.mxu0 0.0
        %v1948 = vand.u32 %v1612, 4294901760
        %v1949 = vsub.f32 %v1612, %v1948
        %v1950 = vand.u32 %v1949, 4294901760
        %v1951 = vsub.f32 %v1949, %v1950
        %v1952 = vand.u32 %v1951, 4294901760
        %1953 = vmatmul.mubr.f32.gmra.mxu0 %v1952
        %v1954 = vpop.f32.mrf.mxu0
        %v1955 = vadd.f32 %v1543, %v1954
        %v1956 = vpop.f32.mrf.mxu0
        %v1957 = vadd.f32 %v1547, %v1956
        %1958 = vmatprep.mubr.f32.mxu0 0.0
        %v1959 = vand.u32 %v1615, 4294901760
        %v1960 = vsub.f32 %v1615, %v1959
        %v1961 = vand.u32 %v1960, 4294901760
        %v1962 = vsub.f32 %v1960, %v1961
        %v1963 = vand.u32 %v1962, 4294901760
        %1964 = vmatmul.mubr.f32.gmra.mxu0 %v1963
        %v1965 = vpop.f32.mrf.mxu0
        %v1966 = vadd.f32 %v1543, %v1965
        %v1967 = vpop.f32.mrf.mxu0
        %v1968 = vadd.f32 %v1547, %v1967
        %1969 = vmatprep.mubr.f32.mxu0 0.0
        %v1970 = vand.u32 %v1618, 4294901760
        %v1971 = vsub.f32 %v1618, %v1970
        %v1972 = vand.u32 %v1971, 4294901760
        %v1973 = vsub.f32 %v1971, %v1972
        %v1974 = vand.u32 %v1973, 4294901760
        %1975 = vmatmul.mubr.f32.gmra.mxu0 %v1974
        %v1976 = vpop.f32.mrf.mxu0
        %v1977 = vadd.f32 %v1543, %v1976
        %v1978 = vpop.f32.mrf.mxu0
        %v1979 = vadd.f32 %v1547, %v1978
        %1980 = vmatprep.mubr.f32.mxu0 0.0
        %v1981 = vand.u32 %v1621, 4294901760
        %v1982 = vsub.f32 %v1621, %v1981
        %v1983 = vand.u32 %v1982, 4294901760
        %v1984 = vsub.f32 %v1982, %v1983
        %v1985 = vand.u32 %v1984, 4294901760
        %1986 = vmatmul.mubr.f32.gmra.mxu0 %v1985
        %v1987 = vpop.f32.mrf.mxu0
        %v1988 = vadd.f32 %v1543, %v1987
        %v1989 = vpop.f32.mrf.mxu0
        %v1990 = vadd.f32 %v1547, %v1989
        %1991 = vmatprep.mubr.f32.mxu0 0.0
        %v1992 = vand.u32 %v1624, 4294901760
        %v1993 = vsub.f32 %v1624, %v1992
        %v1994 = vand.u32 %v1993, 4294901760
        %v1995 = vsub.f32 %v1993, %v1994
        %v1996 = vand.u32 %v1995, 4294901760
        %1997 = vmatmul.mubr.f32.gmra.mxu0 %v1996
        %v1998 = vpop.f32.mrf.mxu0
        %v1999 = vadd.f32 %v1543, %v1998
        %v2000 = vpop.f32.mrf.mxu0
        %v2001 = vadd.f32 %v1547, %v2000
        %2002 = vmatprep.mubr.f32.mxu0 0.0
        %v2003 = vand.u32 %v1627, 4294901760
        %v2004 = vsub.f32 %v1627, %v2003
        %v2005 = vand.u32 %v2004, 4294901760
        %v2006 = vsub.f32 %v2004, %v2005
        %v2007 = vand.u32 %v2006, 4294901760
        %2008 = vmatmul.mubr.f32.gmra.mxu0 %v2007
        %v2009 = vpop.f32.mrf.mxu0
        %v2010 = vadd.f32 %v1543, %v2009
        %v2011 = vpop.f32.mrf.mxu0
        %v2012 = vadd.f32 %v1547, %v2011
        %2013 = vmatprep.mubr.f32.mxu0 0.0
        %v2014 = vand.u32 %v1630, 4294901760
        %v2015 = vsub.f32 %v1630, %v2014
        %v2016 = vand.u32 %v2015, 4294901760
        %v2017 = vsub.f32 %v2015, %v2016
        %v2018 = vand.u32 %v2017, 4294901760
        %2019 = vmatmul.mubr.f32.gmra.mxu0 %v2018
        %v2020 = vpop.f32.mrf.mxu0
        %v2021 = vadd.f32 %v1543, %v2020
        %v2022 = vpop.f32.mrf.mxu0
        %v2023 = vadd.f32 %v1547, %v2022
        %2024 = vmatprep.mubr.f32.mxu0 0.0
        %v2025 = vand.u32 %v1633, 4294901760
        %v2026 = vsub.f32 %v1633, %v2025
        %v2027 = vand.u32 %v2026, 4294901760
        %v2028 = vsub.f32 %v2026, %v2027
        %v2029 = vand.u32 %v2028, 4294901760
        %2030 = vmatmul.mubr.f32.gmra.mxu0 %v2029
        %v2031 = vpop.f32.mrf.mxu0
        %v2032 = vadd.f32 %v1543, %v2031
        %v2033 = vpop.f32.mrf.mxu0
        %v2034 = vadd.f32 %v1547, %v2033
        %2035 = vmatprep.mubr.f32.mxu0 0.0
        %v2036 = vand.u32 %v1636, 4294901760
        %v2037 = vsub.f32 %v1636, %v2036
        %v2038 = vand.u32 %v2037, 4294901760
        %v2039 = vsub.f32 %v2037, %v2038
        %v2040 = vand.u32 %v2039, 4294901760
        %2041 = vmatmul.mubr.f32.gmra.mxu0 %v2040
        %v2042 = vpop.f32.mrf.mxu0
        %v2043 = vadd.f32 %v1543, %v2042
        %v2044 = vpop.f32.mrf.mxu0
        %v2045 = vadd.f32 %v1547, %v2044
        %2046 = vmatprep.mubr.f32.mxu0 0.0
        %v2047 = vand.u32 %v1639, 4294901760
        %v2048 = vsub.f32 %v1639, %v2047
        %v2049 = vand.u32 %v2048, 4294901760
        %v2050 = vsub.f32 %v2048, %v2049
        %v2051 = vand.u32 %v2050, 4294901760
        %2052 = vmatmul.mubr.f32.gmra.mxu0 %v2051
        %v2053 = vpop.f32.mrf.mxu0
        %v2054 = vadd.f32 %v1543, %v2053
        %v2055 = vpop.f32.mrf.mxu0
        %v2056 = vadd.f32 %v1547, %v2055
        %2057 = vmatprep.mubr.f32.mxu0 0.0
        %v2058 = vand.u32 %v1642, 4294901760
        %v2059 = vsub.f32 %v1642, %v2058
        %v2060 = vand.u32 %v2059, 4294901760
        %v2061 = vsub.f32 %v2059, %v2060
        %v2062 = vand.u32 %v2061, 4294901760
        %2063 = vmatmul.mubr.f32.gmra.mxu0 %v2062
        %v2064 = vpop.f32.mrf.mxu0
        %v2065 = vadd.f32 %v1543, %v2064
        %v2066 = vpop.f32.mrf.mxu0
        %v2067 = vadd.f32 %v1547, %v2066
        %2068 = vdwg.mxu0
        %2069 = vmatprep.subr.mxu0 0.0
        %2070 = vmatpush1.msra.mxu0 0.0
        %2071 = vmatprep.subr.mxu0 0.0
        %2072 = vmatpush1.msra.mxu0 0.0
        %2073 = vmatprep.subr.mxu0 0.0
        %2074 = vmatpush1.msra.mxu0 0.0
        %2075 = vmatprep.subr.mxu0 0.0
        %2076 = vmatpush1.msra.mxu0 0.0
        %2077 = vmatprep.subr.mxu0 0.0
        %2078 = vmatpush1.msra.mxu0 0.0
        %2079 = vmatprep.subr.mxu0 0.0
        %2080 = vmatpush1.msra.mxu0 0.0
        %2081 = vmatprep.subr.mxu0 0.0
        %2082 = vmatpush1.msra.mxu0 0.0
        %2083 = vmatprep.subr.mxu0 0.0
        %2084 = vmatpush1.msra.mxu0 0.0
        %2085 = vmatprep.subr.mxu0 0.0
        %2086 = vmatpush1.msra.mxu0 0.0
        %2087 = vmatprep.subr.mxu0 0.0
        %2088 = vmatpush1.msra.mxu0 0.0
        %2089 = vmatprep.subr.mxu0 0.0
        %2090 = vmatpush1.msra.mxu0 0.0
        %2091 = vmatprep.subr.mxu0 0.0
        %2092 = vmatpush1.msra.mxu0 0.0
        %2093 = vmatprep.subr.mxu0 0.0
        %2094 = vmatpush1.msra.mxu0 0.0
        %2095 = vmatprep.subr.mxu0 0.0
        %2096 = vmatpush1.msra.mxu0 0.0
        %2097 = vmatprep.subr.mxu0 0.0
        %2098 = vmatpush1.msra.mxu0 0.0
        %v2099 = vand.u32 %v1648, 4294901760
        %v2100 = vsub.f32 %v1648, %v2099
        %v2101 = vand.u32 %v2100, 4294901760
        %v2102 = vsub.f32 %v2100, %v2101
        %v2103 = vand.u32 %v2102, 4294901760
        %2104 = vmatprep.subr.mxu0 %v2103
        %v2105 = vand.u32 %v1645, 4294901760
        %v2106 = vsub.f32 %v1645, %v2105
        %v2107 = vand.u32 %v2106, 4294901760
        %v2108 = vsub.f32 %v2106, %v2107
        %v2109 = vand.u32 %v2108, 4294901760
        %2110 = vmatpush1.msra.mxu0 %v2109
        %2111 = vmatprep.subr.mxu0 0.0
        %2112 = vmatpush2.msra.mxu0 0.0
        %2113 = vmatprep.subr.mxu0 0.0
        %2114 = vmatpush2.msra.mxu0 0.0
        %2115 = vmatprep.subr.mxu0 0.0
        %2116 = vmatpush2.msra.mxu0 0.0
        %2117 = vmatprep.subr.mxu0 0.0
        %2118 = vmatpush2.msra.mxu0 0.0
        %2119 = vmatprep.subr.mxu0 0.0
        %2120 = vmatpush2.msra.mxu0 0.0
        %2121 = vmatprep.subr.mxu0 0.0
        %2122 = vmatpush2.msra.mxu0 0.0
        %2123 = vmatprep.subr.mxu0 0.0
        %2124 = vmatpush2.msra.mxu0 0.0
        %2125 = vmatprep.subr.mxu0 0.0
        %2126 = vmatpush2.msra.mxu0 0.0
        %2127 = vmatprep.subr.mxu0 0.0
        %2128 = vmatpush2.msra.mxu0 0.0
        %2129 = vmatprep.subr.mxu0 0.0
        %2130 = vmatpush2.msra.mxu0 0.0
        %2131 = vmatprep.subr.mxu0 0.0
        %2132 = vmatpush2.msra.mxu0 0.0
        %2133 = vmatprep.subr.mxu0 0.0
        %2134 = vmatpush2.msra.mxu0 0.0
        %2135 = vmatprep.subr.mxu0 0.0
        %2136 = vmatpush2.msra.mxu0 0.0
        %2137 = vmatprep.subr.mxu0 0.0
        %2138 = vmatpush2.msra.mxu0 0.0
        %2139 = vmatprep.subr.mxu0 0.0
        %2140 = vmatpush2.msra.mxu0 0.0
        %2141 = vmatprep.subr.mxu0 0.0
        %2142 = vmatpush2.msra.mxu0 0.0
        %2143 = vmatprep.mubr.f32.mxu0 0.0
        %v2144 = vand.u32 %v1549, 4294901760
        %2145 = vmatmul.mubr.f32.gmra.mxu0 %v2144
        %v2146 = vpop.f32.mrf.mxu0
        %v2147 = vadd.f32 %v1724, %v2146
        %v2148 = vpop.f32.mrf.mxu0
        %v2149 = vadd.f32 %v1726, %v2148
        %2150 = vmatprep.mubr.f32.mxu0 0.0
        %v2151 = vand.u32 %v1552, 4294901760
        %2152 = vmatmul.mubr.f32.gmra.mxu0 %v2151
        %v2153 = vpop.f32.mrf.mxu0
        %v2154 = vadd.f32 %v1735, %v2153
        %v2155 = vpop.f32.mrf.mxu0
        %v2156 = vadd.f32 %v1737, %v2155
        %2157 = vmatprep.mubr.f32.mxu0 0.0
        %v2158 = vand.u32 %v1555, 4294901760
        %2159 = vmatmul.mubr.f32.gmra.mxu0 %v2158
        %v2160 = vpop.f32.mrf.mxu0
        %v2161 = vadd.f32 %v1746, %v2160
        %v2162 = vpop.f32.mrf.mxu0
        %v2163 = vadd.f32 %v1748, %v2162
        %2164 = vmatprep.mubr.f32.mxu0 0.0
        %v2165 = vand.u32 %v1558, 4294901760
        %2166 = vmatmul.mubr.f32.gmra.mxu0 %v2165
        %v2167 = vpop.f32.mrf.mxu0
        %v2168 = vadd.f32 %v1757, %v2167
        %v2169 = vpop.f32.mrf.mxu0
        %v2170 = vadd.f32 %v1759, %v2169
        %2171 = vmatprep.mubr.f32.mxu0 0.0
        %v2172 = vand.u32 %v1561, 4294901760
        %2173 = vmatmul.mubr.f32.gmra.mxu0 %v2172
        %v2174 = vpop.f32.mrf.mxu0
        %v2175 = vadd.f32 %v1768, %v2174
        %v2176 = vpop.f32.mrf.mxu0
        %v2177 = vadd.f32 %v1770, %v2176
        %2178 = vmatprep.mubr.f32.mxu0 0.0
        %v2179 = vand.u32 %v1564, 4294901760
        %2180 = vmatmul.mubr.f32.gmra.mxu0 %v2179
        %v2181 = vpop.f32.mrf.mxu0
        %v2182 = vadd.f32 %v1779, %v2181
        %v2183 = vpop.f32.mrf.mxu0
        %v2184 = vadd.f32 %v1781, %v2183
        %2185 = vmatprep.mubr.f32.mxu0 0.0
        %v2186 = vand.u32 %v1567, 4294901760
        %2187 = vmatmul.mubr.f32.gmra.mxu0 %v2186
        %v2188 = vpop.f32.mrf.mxu0
        %v2189 = vadd.f32 %v1790, %v2188
        %v2190 = vpop.f32.mrf.mxu0
        %v2191 = vadd.f32 %v1792, %v2190
        %2192 = vmatprep.mubr.f32.mxu0 0.0
        %v2193 = vand.u32 %v1570, 4294901760
        %2194 = vmatmul.mubr.f32.gmra.mxu0 %v2193
        %v2195 = vpop.f32.mrf.mxu0
        %v2196 = vadd.f32 %v1801, %v2195
        %v2197 = vpop.f32.mrf.mxu0
        %v2198 = vadd.f32 %v1803, %v2197
        %2199 = vmatprep.mubr.f32.mxu0 0.0
        %v2200 = vand.u32 %v1573, 4294901760
        %2201 = vmatmul.mubr.f32.gmra.mxu0 %v2200
        %v2202 = vpop.f32.mrf.mxu0
        %v2203 = vadd.f32 %v1812, %v2202
        %v2204 = vpop.f32.mrf.mxu0
        %v2205 = vadd.f32 %v1814, %v2204
        %2206 = vmatprep.mubr.f32.mxu0 0.0
        %v2207 = vand.u32 %v1576, 4294901760
        %2208 = vmatmul.mubr.f32.gmra.mxu0 %v2207
        %v2209 = vpop.f32.mrf.mxu0
        %v2210 = vadd.f32 %v1823, %v2209
        %v2211 = vpop.f32.mrf.mxu0
        %v2212 = vadd.f32 %v1825, %v2211
        %2213 = vmatprep.mubr.f32.mxu0 0.0
        %v2214 = vand.u32 %v1579, 4294901760
        %2215 = vmatmul.mubr.f32.gmra.mxu0 %v2214
        %v2216 = vpop.f32.mrf.mxu0
        %v2217 = vadd.f32 %v1834, %v2216
        %v2218 = vpop.f32.mrf.mxu0
        %v2219 = vadd.f32 %v1836, %v2218
        %2220 = vmatprep.mubr.f32.mxu0 0.0
        %v2221 = vand.u32 %v1582, 4294901760
        %2222 = vmatmul.mubr.f32.gmra.mxu0 %v2221
        %v2223 = vpop.f32.mrf.mxu0
        %v2224 = vadd.f32 %v1845, %v2223
        %v2225 = vpop.f32.mrf.mxu0
        %v2226 = vadd.f32 %v1847, %v2225
        %2227 = vmatprep.mubr.f32.mxu0 0.0
        %v2228 = vand.u32 %v1585, 4294901760
        %2229 = vmatmul.mubr.f32.gmra.mxu0 %v2228
        %v2230 = vpop.f32.mrf.mxu0
        %v2231 = vadd.f32 %v1856, %v2230
        %v2232 = vpop.f32.mrf.mxu0
        %v2233 = vadd.f32 %v1858, %v2232
        %2234 = vmatprep.mubr.f32.mxu0 0.0
        %v2235 = vand.u32 %v1588, 4294901760
        %2236 = vmatmul.mubr.f32.gmra.mxu0 %v2235
        %v2237 = vpop.f32.mrf.mxu0
        %v2238 = vadd.f32 %v1867, %v2237
        %v2239 = vpop.f32.mrf.mxu0
        %v2240 = vadd.f32 %v1869, %v2239
        %2241 = vmatprep.mubr.f32.mxu0 0.0
        %v2242 = vand.u32 %v1591, 4294901760
        %2243 = vmatmul.mubr.f32.gmra.mxu0 %v2242
        %v2244 = vpop.f32.mrf.mxu0
        %v2245 = vadd.f32 %v1878, %v2244
        %v2246 = vpop.f32.mrf.mxu0
        %v2247 = vadd.f32 %v1880, %v2246
        %2248 = vmatprep.mubr.f32.mxu0 0.0
        %v2249 = vand.u32 %v1594, 4294901760
        %2250 = vmatmul.mubr.f32.gmra.mxu0 %v2249
        %v2251 = vpop.f32.mrf.mxu0
        %v2252 = vadd.f32 %v1889, %v2251
        %v2253 = vpop.f32.mrf.mxu0
        %v2254 = vadd.f32 %v1891, %v2253
        %2255 = vmatprep.mubr.f32.mxu0 0.0
        %v2256 = vand.u32 %v1597, 4294901760
        %2257 = vmatmul.mubr.f32.gmra.mxu0 %v2256
        %v2258 = vpop.f32.mrf.mxu0
        %v2259 = vadd.f32 %v1900, %v2258
        %v2260 = vpop.f32.mrf.mxu0
        %v2261 = vadd.f32 %v1902, %v2260
        %2262 = vmatprep.mubr.f32.mxu0 0.0
        %v2263 = vand.u32 %v1600, 4294901760
        %2264 = vmatmul.mubr.f32.gmra.mxu0 %v2263
        %v2265 = vpop.f32.mrf.mxu0
        %v2266 = vadd.f32 %v1911, %v2265
        %v2267 = vpop.f32.mrf.mxu0
        %v2268 = vadd.f32 %v1913, %v2267
        %2269 = vmatprep.mubr.f32.mxu0 0.0
        %v2270 = vand.u32 %v1603, 4294901760
        %2271 = vmatmul.mubr.f32.gmra.mxu0 %v2270
        %v2272 = vpop.f32.mrf.mxu0
        %v2273 = vadd.f32 %v1922, %v2272
        %v2274 = vpop.f32.mrf.mxu0
        %v2275 = vadd.f32 %v1924, %v2274
        %2276 = vmatprep.mubr.f32.mxu0 0.0
        %v2277 = vand.u32 %v1606, 4294901760
        %2278 = vmatmul.mubr.f32.gmra.mxu0 %v2277
        %v2279 = vpop.f32.mrf.mxu0
        %v2280 = vadd.f32 %v1933, %v2279
        %v2281 = vpop.f32.mrf.mxu0
        %v2282 = vadd.f32 %v1935, %v2281
        %2283 = vmatprep.mubr.f32.mxu0 0.0
        %v2284 = vand.u32 %v1609, 4294901760
        %2285 = vmatmul.mubr.f32.gmra.mxu0 %v2284
        %v2286 = vpop.f32.mrf.mxu0
        %v2287 = vadd.f32 %v1944, %v2286
        %v2288 = vpop.f32.mrf.mxu0
        %v2289 = vadd.f32 %v1946, %v2288
        %2290 = vmatprep.mubr.f32.mxu0 0.0
        %v2291 = vand.u32 %v1612, 4294901760
        %2292 = vmatmul.mubr.f32.gmra.mxu0 %v2291
        %v2293 = vpop.f32.mrf.mxu0
        %v2294 = vadd.f32 %v1955, %v2293
        %v2295 = vpop.f32.mrf.mxu0
        %v2296 = vadd.f32 %v1957, %v2295
        %2297 = vmatprep.mubr.f32.mxu0 0.0
        %v2298 = vand.u32 %v1615, 4294901760
        %2299 = vmatmul.mubr.f32.gmra.mxu0 %v2298
        %v2300 = vpop.f32.mrf.mxu0
        %v2301 = vadd.f32 %v1966, %v2300
        %v2302 = vpop.f32.mrf.mxu0
        %v2303 = vadd.f32 %v1968, %v2302
        %2304 = vmatprep.mubr.f32.mxu0 0.0
        %v2305 = vand.u32 %v1618, 4294901760
        %2306 = vmatmul.mubr.f32.gmra.mxu0 %v2305
        %v2307 = vpop.f32.mrf.mxu0
        %v2308 = vadd.f32 %v1977, %v2307
        %v2309 = vpop.f32.mrf.mxu0
        %v2310 = vadd.f32 %v1979, %v2309
        %2311 = vmatprep.mubr.f32.mxu0 0.0
        %v2312 = vand.u32 %v1621, 4294901760
        %2313 = vmatmul.mubr.f32.gmra.mxu0 %v2312
        %v2314 = vpop.f32.mrf.mxu0
        %v2315 = vadd.f32 %v1988, %v2314
        %v2316 = vpop.f32.mrf.mxu0
        %v2317 = vadd.f32 %v1990, %v2316
        %2318 = vmatprep.mubr.f32.mxu0 0.0
        %v2319 = vand.u32 %v1624, 4294901760
        %2320 = vmatmul.mubr.f32.gmra.mxu0 %v2319
        %v2321 = vpop.f32.mrf.mxu0
        %v2322 = vadd.f32 %v1999, %v2321
        %v2323 = vpop.f32.mrf.mxu0
        %v2324 = vadd.f32 %v2001, %v2323
        %2325 = vmatprep.mubr.f32.mxu0 0.0
        %v2326 = vand.u32 %v1627, 4294901760
        %2327 = vmatmul.mubr.f32.gmra.mxu0 %v2326
        %v2328 = vpop.f32.mrf.mxu0
        %v2329 = vadd.f32 %v2010, %v2328
        %v2330 = vpop.f32.mrf.mxu0
        %v2331 = vadd.f32 %v2012, %v2330
        %2332 = vmatprep.mubr.f32.mxu0 0.0
        %v2333 = vand.u32 %v1630, 4294901760
        %2334 = vmatmul.mubr.f32.gmra.mxu0 %v2333
        %v2335 = vpop.f32.mrf.mxu0
        %v2336 = vadd.f32 %v2021, %v2335
        %v2337 = vpop.f32.mrf.mxu0
        %v2338 = vadd.f32 %v2023, %v2337
        %2339 = vmatprep.mubr.f32.mxu0 0.0
        %v2340 = vand.u32 %v1633, 4294901760
        %2341 = vmatmul.mubr.f32.gmra.mxu0 %v2340
        %v2342 = vpop.f32.mrf.mxu0
        %v2343 = vadd.f32 %v2032, %v2342
        %v2344 = vpop.f32.mrf.mxu0
        %v2345 = vadd.f32 %v2034, %v2344
        %2346 = vmatprep.mubr.f32.mxu0 0.0
        %v2347 = vand.u32 %v1636, 4294901760
        %2348 = vmatmul.mubr.f32.gmra.mxu0 %v2347
        %v2349 = vpop.f32.mrf.mxu0
        %v2350 = vadd.f32 %v2043, %v2349
        %v2351 = vpop.f32.mrf.mxu0
        %v2352 = vadd.f32 %v2045, %v2351
        %2353 = vmatprep.mubr.f32.mxu0 0.0
        %v2354 = vand.u32 %v1639, 4294901760
        %2355 = vmatmul.mubr.f32.gmra.mxu0 %v2354
        %v2356 = vpop.f32.mrf.mxu0
        %v2357 = vadd.f32 %v2054, %v2356
        %v2358 = vpop.f32.mrf.mxu0
        %v2359 = vadd.f32 %v2056, %v2358
        %2360 = vmatprep.mubr.f32.mxu0 0.0
        %v2361 = vand.u32 %v1642, 4294901760
        %2362 = vmatmul.mubr.f32.gmra.mxu0 %v2361
        %v2363 = vpop.f32.mrf.mxu0
        %v2364 = vadd.f32 %v2065, %v2363
        %v2365 = vpop.f32.mrf.mxu0
        %v2366 = vadd.f32 %v2067, %v2365
        %2367 = vdwg.mxu0
        %2368 = vmatprep.subr.mxu0 0.0
        %2369 = vmatpush1.msra.mxu0 0.0
        %2370 = vmatprep.subr.mxu0 0.0
        %2371 = vmatpush1.msra.mxu0 0.0
        %2372 = vmatprep.subr.mxu0 0.0
        %2373 = vmatpush1.msra.mxu0 0.0
        %2374 = vmatprep.subr.mxu0 0.0
        %2375 = vmatpush1.msra.mxu0 0.0
        %2376 = vmatprep.subr.mxu0 0.0
        %2377 = vmatpush1.msra.mxu0 0.0
        %2378 = vmatprep.subr.mxu0 0.0
        %2379 = vmatpush1.msra.mxu0 0.0
        %2380 = vmatprep.subr.mxu0 0.0
        %2381 = vmatpush1.msra.mxu0 0.0
        %2382 = vmatprep.subr.mxu0 0.0
        %2383 = vmatpush1.msra.mxu0 0.0
        %2384 = vmatprep.subr.mxu0 0.0
        %2385 = vmatpush1.msra.mxu0 0.0
        %2386 = vmatprep.subr.mxu0 0.0
        %2387 = vmatpush1.msra.mxu0 0.0
        %2388 = vmatprep.subr.mxu0 0.0
        %2389 = vmatpush1.msra.mxu0 0.0
        %2390 = vmatprep.subr.mxu0 0.0
        %2391 = vmatpush1.msra.mxu0 0.0
        %2392 = vmatprep.subr.mxu0 0.0
        %2393 = vmatpush1.msra.mxu0 0.0
        %2394 = vmatprep.subr.mxu0 0.0
        %2395 = vmatpush1.msra.mxu0 0.0
        %2396 = vmatprep.subr.mxu0 0.0
        %2397 = vmatpush1.msra.mxu0 0.0
        %v2398 = vand.u32 %v1648, 4294901760
        %v2399 = vsub.f32 %v1648, %v2398
        %2400 = vmatprep.subr.mxu0 %v2399
        %v2401 = vand.u32 %v1645, 4294901760
        %v2402 = vsub.f32 %v1645, %v2401
        %2403 = vmatpush1.msra.mxu0 %v2402
        %2404 = vmatprep.subr.mxu0 0.0
        %2405 = vmatpush2.msra.mxu0 0.0
        %2406 = vmatprep.subr.mxu0 0.0
        %2407 = vmatpush2.msra.mxu0 0.0
        %2408 = vmatprep.subr.mxu0 0.0
        %2409 = vmatpush2.msra.mxu0 0.0
        %2410 = vmatprep.subr.mxu0 0.0
        %2411 = vmatpush2.msra.mxu0 0.0
        %2412 = vmatprep.subr.mxu0 0.0
        %2413 = vmatpush2.msra.mxu0 0.0
        %2414 = vmatprep.subr.mxu0 0.0
        %2415 = vmatpush2.msra.mxu0 0.0
        %2416 = vmatprep.subr.mxu0 0.0
        %2417 = vmatpush2.msra.mxu0 0.0
        %2418 = vmatprep.subr.mxu0 0.0
        %2419 = vmatpush2.msra.mxu0 0.0
        %2420 = vmatprep.subr.mxu0 0.0
        %2421 = vmatpush2.msra.mxu0 0.0
        %2422 = vmatprep.subr.mxu0 0.0
        %2423 = vmatpush2.msra.mxu0 0.0
        %2424 = vmatprep.subr.mxu0 0.0
        %2425 = vmatpush2.msra.mxu0 0.0
        %2426 = vmatprep.subr.mxu0 0.0
        %2427 = vmatpush2.msra.mxu0 0.0
        %2428 = vmatprep.subr.mxu0 0.0
        %2429 = vmatpush2.msra.mxu0 0.0
        %2430 = vmatprep.subr.mxu0 0.0
        %2431 = vmatpush2.msra.mxu0 0.0
        %2432 = vmatprep.subr.mxu0 0.0
        %2433 = vmatpush2.msra.mxu0 0.0
        %2434 = vmatprep.subr.mxu0 0.0
        %2435 = vmatpush2.msra.mxu0 0.0
        %2436 = vmatprep.mubr.f32.mxu0 0.0
        %v2437 = vand.u32 %v1549, 4294901760
        %v2438 = vsub.f32 %v1549, %v2437
        %2439 = vmatmul.mubr.f32.gmra.mxu0 %v2438
        %v2440 = vpop.f32.mrf.mxu0
        %v2441 = vadd.f32 %v2147, %v2440
        %v2442 = vpop.f32.mrf.mxu0
        %v2443 = vadd.f32 %v2149, %v2442
        %2444 = vmatprep.mubr.f32.mxu0 0.0
        %v2445 = vand.u32 %v1552, 4294901760
        %v2446 = vsub.f32 %v1552, %v2445
        %2447 = vmatmul.mubr.f32.gmra.mxu0 %v2446
        %v2448 = vpop.f32.mrf.mxu0
        %v2449 = vadd.f32 %v2154, %v2448
        %v2450 = vpop.f32.mrf.mxu0
        %v2451 = vadd.f32 %v2156, %v2450
        %2452 = vmatprep.mubr.f32.mxu0 0.0
        %v2453 = vand.u32 %v1555, 4294901760
        %v2454 = vsub.f32 %v1555, %v2453
        %2455 = vmatmul.mubr.f32.gmra.mxu0 %v2454
        %v2456 = vpop.f32.mrf.mxu0
        %v2457 = vadd.f32 %v2161, %v2456
        %v2458 = vpop.f32.mrf.mxu0
        %v2459 = vadd.f32 %v2163, %v2458
        %2460 = vmatprep.mubr.f32.mxu0 0.0
        %v2461 = vand.u32 %v1558, 4294901760
        %v2462 = vsub.f32 %v1558, %v2461
        %2463 = vmatmul.mubr.f32.gmra.mxu0 %v2462
        %v2464 = vpop.f32.mrf.mxu0
        %v2465 = vadd.f32 %v2168, %v2464
        %v2466 = vpop.f32.mrf.mxu0
        %v2467 = vadd.f32 %v2170, %v2466
        %2468 = vmatprep.mubr.f32.mxu0 0.0
        %v2469 = vand.u32 %v1561, 4294901760
        %v2470 = vsub.f32 %v1561, %v2469
        %2471 = vmatmul.mubr.f32.gmra.mxu0 %v2470
        %v2472 = vpop.f32.mrf.mxu0
        %v2473 = vadd.f32 %v2175, %v2472
        %v2474 = vpop.f32.mrf.mxu0
        %v2475 = vadd.f32 %v2177, %v2474
        %2476 = vmatprep.mubr.f32.mxu0 0.0
        %v2477 = vand.u32 %v1564, 4294901760
        %v2478 = vsub.f32 %v1564, %v2477
        %2479 = vmatmul.mubr.f32.gmra.mxu0 %v2478
        %v2480 = vpop.f32.mrf.mxu0
        %v2481 = vadd.f32 %v2182, %v2480
        %v2482 = vpop.f32.mrf.mxu0
        %v2483 = vadd.f32 %v2184, %v2482
        %2484 = vmatprep.mubr.f32.mxu0 0.0
        %v2485 = vand.u32 %v1567, 4294901760
        %v2486 = vsub.f32 %v1567, %v2485
        %2487 = vmatmul.mubr.f32.gmra.mxu0 %v2486
        %v2488 = vpop.f32.mrf.mxu0
        %v2489 = vadd.f32 %v2189, %v2488
        %v2490 = vpop.f32.mrf.mxu0
        %v2491 = vadd.f32 %v2191, %v2490
        %2492 = vmatprep.mubr.f32.mxu0 0.0
        %v2493 = vand.u32 %v1570, 4294901760
        %v2494 = vsub.f32 %v1570, %v2493
        %2495 = vmatmul.mubr.f32.gmra.mxu0 %v2494
        %v2496 = vpop.f32.mrf.mxu0
        %v2497 = vadd.f32 %v2196, %v2496
        %v2498 = vpop.f32.mrf.mxu0
        %v2499 = vadd.f32 %v2198, %v2498
        %2500 = vmatprep.mubr.f32.mxu0 0.0
        %v2501 = vand.u32 %v1573, 4294901760
        %v2502 = vsub.f32 %v1573, %v2501
        %2503 = vmatmul.mubr.f32.gmra.mxu0 %v2502
        %v2504 = vpop.f32.mrf.mxu0
        %v2505 = vadd.f32 %v2203, %v2504
        %v2506 = vpop.f32.mrf.mxu0
        %v2507 = vadd.f32 %v2205, %v2506
        %2508 = vmatprep.mubr.f32.mxu0 0.0
        %v2509 = vand.u32 %v1576, 4294901760
        %v2510 = vsub.f32 %v1576, %v2509
        %2511 = vmatmul.mubr.f32.gmra.mxu0 %v2510
        %v2512 = vpop.f32.mrf.mxu0
        %v2513 = vadd.f32 %v2210, %v2512
        %v2514 = vpop.f32.mrf.mxu0
        %v2515 = vadd.f32 %v2212, %v2514
        %2516 = vmatprep.mubr.f32.mxu0 0.0
        %v2517 = vand.u32 %v1579, 4294901760
        %v2518 = vsub.f32 %v1579, %v2517
        %2519 = vmatmul.mubr.f32.gmra.mxu0 %v2518
        %v2520 = vpop.f32.mrf.mxu0
        %v2521 = vadd.f32 %v2217, %v2520
        %v2522 = vpop.f32.mrf.mxu0
        %v2523 = vadd.f32 %v2219, %v2522
        %2524 = vmatprep.mubr.f32.mxu0 0.0
        %v2525 = vand.u32 %v1582, 4294901760
        %v2526 = vsub.f32 %v1582, %v2525
        %2527 = vmatmul.mubr.f32.gmra.mxu0 %v2526
        %v2528 = vpop.f32.mrf.mxu0
        %v2529 = vadd.f32 %v2224, %v2528
        %v2530 = vpop.f32.mrf.mxu0
        %v2531 = vadd.f32 %v2226, %v2530
        %2532 = vmatprep.mubr.f32.mxu0 0.0
        %v2533 = vand.u32 %v1585, 4294901760
        %v2534 = vsub.f32 %v1585, %v2533
        %2535 = vmatmul.mubr.f32.gmra.mxu0 %v2534
        %v2536 = vpop.f32.mrf.mxu0
        %v2537 = vadd.f32 %v2231, %v2536
        %v2538 = vpop.f32.mrf.mxu0
        %v2539 = vadd.f32 %v2233, %v2538
        %2540 = vmatprep.mubr.f32.mxu0 0.0
        %v2541 = vand.u32 %v1588, 4294901760
        %v2542 = vsub.f32 %v1588, %v2541
        %2543 = vmatmul.mubr.f32.gmra.mxu0 %v2542
        %v2544 = vpop.f32.mrf.mxu0
        %v2545 = vadd.f32 %v2238, %v2544
        %v2546 = vpop.f32.mrf.mxu0
        %v2547 = vadd.f32 %v2240, %v2546
        %2548 = vmatprep.mubr.f32.mxu0 0.0
        %v2549 = vand.u32 %v1591, 4294901760
        %v2550 = vsub.f32 %v1591, %v2549
        %2551 = vmatmul.mubr.f32.gmra.mxu0 %v2550
        %v2552 = vpop.f32.mrf.mxu0
        %v2553 = vadd.f32 %v2245, %v2552
        %v2554 = vpop.f32.mrf.mxu0
        %v2555 = vadd.f32 %v2247, %v2554
        %2556 = vmatprep.mubr.f32.mxu0 0.0
        %v2557 = vand.u32 %v1594, 4294901760
        %v2558 = vsub.f32 %v1594, %v2557
        %2559 = vmatmul.mubr.f32.gmra.mxu0 %v2558
        %v2560 = vpop.f32.mrf.mxu0
        %v2561 = vadd.f32 %v2252, %v2560
        %v2562 = vpop.f32.mrf.mxu0
        %v2563 = vadd.f32 %v2254, %v2562
        %2564 = vmatprep.mubr.f32.mxu0 0.0
        %v2565 = vand.u32 %v1597, 4294901760
        %v2566 = vsub.f32 %v1597, %v2565
        %2567 = vmatmul.mubr.f32.gmra.mxu0 %v2566
        %v2568 = vpop.f32.mrf.mxu0
        %v2569 = vadd.f32 %v2259, %v2568
        %v2570 = vpop.f32.mrf.mxu0
        %v2571 = vadd.f32 %v2261, %v2570
        %2572 = vmatprep.mubr.f32.mxu0 0.0
        %v2573 = vand.u32 %v1600, 4294901760
        %v2574 = vsub.f32 %v1600, %v2573
        %2575 = vmatmul.mubr.f32.gmra.mxu0 %v2574
        %v2576 = vpop.f32.mrf.mxu0
        %v2577 = vadd.f32 %v2266, %v2576
        %v2578 = vpop.f32.mrf.mxu0
        %v2579 = vadd.f32 %v2268, %v2578
        %2580 = vmatprep.mubr.f32.mxu0 0.0
        %v2581 = vand.u32 %v1603, 4294901760
        %v2582 = vsub.f32 %v1603, %v2581
        %2583 = vmatmul.mubr.f32.gmra.mxu0 %v2582
        %v2584 = vpop.f32.mrf.mxu0
        %v2585 = vadd.f32 %v2273, %v2584
        %v2586 = vpop.f32.mrf.mxu0
        %v2587 = vadd.f32 %v2275, %v2586
        %2588 = vmatprep.mubr.f32.mxu0 0.0
        %v2589 = vand.u32 %v1606, 4294901760
        %v2590 = vsub.f32 %v1606, %v2589
        %2591 = vmatmul.mubr.f32.gmra.mxu0 %v2590
        %v2592 = vpop.f32.mrf.mxu0
        %v2593 = vadd.f32 %v2280, %v2592
        %v2594 = vpop.f32.mrf.mxu0
        %v2595 = vadd.f32 %v2282, %v2594
        %2596 = vmatprep.mubr.f32.mxu0 0.0
        %v2597 = vand.u32 %v1609, 4294901760
        %v2598 = vsub.f32 %v1609, %v2597
        %2599 = vmatmul.mubr.f32.gmra.mxu0 %v2598
        %v2600 = vpop.f32.mrf.mxu0
        %v2601 = vadd.f32 %v2287, %v2600
        %v2602 = vpop.f32.mrf.mxu0
        %v2603 = vadd.f32 %v2289, %v2602
        %2604 = vmatprep.mubr.f32.mxu0 0.0
        %v2605 = vand.u32 %v1612, 4294901760
        %v2606 = vsub.f32 %v1612, %v2605
        %2607 = vmatmul.mubr.f32.gmra.mxu0 %v2606
        %v2608 = vpop.f32.mrf.mxu0
        %v2609 = vadd.f32 %v2294, %v2608
        %v2610 = vpop.f32.mrf.mxu0
        %v2611 = vadd.f32 %v2296, %v2610
        %2612 = vmatprep.mubr.f32.mxu0 0.0
        %v2613 = vand.u32 %v1615, 4294901760
        %v2614 = vsub.f32 %v1615, %v2613
        %2615 = vmatmul.mubr.f32.gmra.mxu0 %v2614
        %v2616 = vpop.f32.mrf.mxu0
        %v2617 = vadd.f32 %v2301, %v2616
        %v2618 = vpop.f32.mrf.mxu0
        %v2619 = vadd.f32 %v2303, %v2618
        %2620 = vmatprep.mubr.f32.mxu0 0.0
        %v2621 = vand.u32 %v1618, 4294901760
        %v2622 = vsub.f32 %v1618, %v2621
        %2623 = vmatmul.mubr.f32.gmra.mxu0 %v2622
        %v2624 = vpop.f32.mrf.mxu0
        %v2625 = vadd.f32 %v2308, %v2624
        %v2626 = vpop.f32.mrf.mxu0
        %v2627 = vadd.f32 %v2310, %v2626
        %2628 = vmatprep.mubr.f32.mxu0 0.0
        %v2629 = vand.u32 %v1621, 4294901760
        %v2630 = vsub.f32 %v1621, %v2629
        %2631 = vmatmul.mubr.f32.gmra.mxu0 %v2630
        %v2632 = vpop.f32.mrf.mxu0
        %v2633 = vadd.f32 %v2315, %v2632
        %v2634 = vpop.f32.mrf.mxu0
        %v2635 = vadd.f32 %v2317, %v2634
        %2636 = vmatprep.mubr.f32.mxu0 0.0
        %v2637 = vand.u32 %v1624, 4294901760
        %v2638 = vsub.f32 %v1624, %v2637
        %2639 = vmatmul.mubr.f32.gmra.mxu0 %v2638
        %v2640 = vpop.f32.mrf.mxu0
        %v2641 = vadd.f32 %v2322, %v2640
        %v2642 = vpop.f32.mrf.mxu0
        %v2643 = vadd.f32 %v2324, %v2642
        %2644 = vmatprep.mubr.f32.mxu0 0.0
        %v2645 = vand.u32 %v1627, 4294901760
        %v2646 = vsub.f32 %v1627, %v2645
        %2647 = vmatmul.mubr.f32.gmra.mxu0 %v2646
        %v2648 = vpop.f32.mrf.mxu0
        %v2649 = vadd.f32 %v2329, %v2648
        %v2650 = vpop.f32.mrf.mxu0
        %v2651 = vadd.f32 %v2331, %v2650
        %2652 = vmatprep.mubr.f32.mxu0 0.0
        %v2653 = vand.u32 %v1630, 4294901760
        %v2654 = vsub.f32 %v1630, %v2653
        %2655 = vmatmul.mubr.f32.gmra.mxu0 %v2654
        %v2656 = vpop.f32.mrf.mxu0
        %v2657 = vadd.f32 %v2336, %v2656
        %v2658 = vpop.f32.mrf.mxu0
        %v2659 = vadd.f32 %v2338, %v2658
        %2660 = vmatprep.mubr.f32.mxu0 0.0
        %v2661 = vand.u32 %v1633, 4294901760
        %v2662 = vsub.f32 %v1633, %v2661
        %2663 = vmatmul.mubr.f32.gmra.mxu0 %v2662
        %v2664 = vpop.f32.mrf.mxu0
        %v2665 = vadd.f32 %v2343, %v2664
        %v2666 = vpop.f32.mrf.mxu0
        %v2667 = vadd.f32 %v2345, %v2666
        %2668 = vmatprep.mubr.f32.mxu0 0.0
        %v2669 = vand.u32 %v1636, 4294901760
        %v2670 = vsub.f32 %v1636, %v2669
        %2671 = vmatmul.mubr.f32.gmra.mxu0 %v2670
        %v2672 = vpop.f32.mrf.mxu0
        %v2673 = vadd.f32 %v2350, %v2672
        %v2674 = vpop.f32.mrf.mxu0
        %v2675 = vadd.f32 %v2352, %v2674
        %2676 = vmatprep.mubr.f32.mxu0 0.0
        %v2677 = vand.u32 %v1639, 4294901760
        %v2678 = vsub.f32 %v1639, %v2677
        %2679 = vmatmul.mubr.f32.gmra.mxu0 %v2678
        %v2680 = vpop.f32.mrf.mxu0
        %v2681 = vadd.f32 %v2357, %v2680
        %v2682 = vpop.f32.mrf.mxu0
        %v2683 = vadd.f32 %v2359, %v2682
        %2684 = vmatprep.mubr.f32.mxu0 0.0
        %v2685 = vand.u32 %v1642, 4294901760
        %v2686 = vsub.f32 %v1642, %v2685
        %2687 = vmatmul.mubr.f32.gmra.mxu0 %v2686
        %v2688 = vpop.f32.mrf.mxu0
        %v2689 = vadd.f32 %v2364, %v2688
        %v2690 = vpop.f32.mrf.mxu0
        %v2691 = vadd.f32 %v2366, %v2690
        %2692 = vdwg.mxu0
        %2693 = vmatprep.subr.mxu0 0.0
        %2694 = vmatpush1.msra.mxu0 0.0
        %2695 = vmatprep.subr.mxu0 0.0
        %2696 = vmatpush1.msra.mxu0 0.0
        %2697 = vmatprep.subr.mxu0 0.0
        %2698 = vmatpush1.msra.mxu0 0.0
        %2699 = vmatprep.subr.mxu0 0.0
        %2700 = vmatpush1.msra.mxu0 0.0
        %2701 = vmatprep.subr.mxu0 0.0
        %2702 = vmatpush1.msra.mxu0 0.0
        %2703 = vmatprep.subr.mxu0 0.0
        %2704 = vmatpush1.msra.mxu0 0.0
        %2705 = vmatprep.subr.mxu0 0.0
        %2706 = vmatpush1.msra.mxu0 0.0
        %2707 = vmatprep.subr.mxu0 0.0
        %2708 = vmatpush1.msra.mxu0 0.0
        %2709 = vmatprep.subr.mxu0 0.0
        %2710 = vmatpush1.msra.mxu0 0.0
        %2711 = vmatprep.subr.mxu0 0.0
        %2712 = vmatpush1.msra.mxu0 0.0
        %2713 = vmatprep.subr.mxu0 0.0
        %2714 = vmatpush1.msra.mxu0 0.0
        %2715 = vmatprep.subr.mxu0 0.0
        %2716 = vmatpush1.msra.mxu0 0.0
        %2717 = vmatprep.subr.mxu0 0.0
        %2718 = vmatpush1.msra.mxu0 0.0
        %2719 = vmatprep.subr.mxu0 0.0
        %2720 = vmatpush1.msra.mxu0 0.0
        %2721 = vmatprep.subr.mxu0 0.0
        %2722 = vmatpush1.msra.mxu0 0.0
        %v2723 = vand.u32 %v1648, 4294901760
        %2724 = vmatprep.subr.mxu0 %v2723
        %v2725 = vand.u32 %v1645, 4294901760
        %2726 = vmatpush1.msra.mxu0 %v2725
        %2727 = vmatprep.subr.mxu0 0.0
        %2728 = vmatpush2.msra.mxu0 0.0
        %2729 = vmatprep.subr.mxu0 0.0
        %2730 = vmatpush2.msra.mxu0 0.0
        %2731 = vmatprep.subr.mxu0 0.0
        %2732 = vmatpush2.msra.mxu0 0.0
        %2733 = vmatprep.subr.mxu0 0.0
        %2734 = vmatpush2.msra.mxu0 0.0
        %2735 = vmatprep.subr.mxu0 0.0
        %2736 = vmatpush2.msra.mxu0 0.0
        %2737 = vmatprep.subr.mxu0 0.0
        %2738 = vmatpush2.msra.mxu0 0.0
        %2739 = vmatprep.subr.mxu0 0.0
        %2740 = vmatpush2.msra.mxu0 0.0
        %2741 = vmatprep.subr.mxu0 0.0
        %2742 = vmatpush2.msra.mxu0 0.0
        %2743 = vmatprep.subr.mxu0 0.0
        %2744 = vmatpush2.msra.mxu0 0.0
        %2745 = vmatprep.subr.mxu0 0.0
        %2746 = vmatpush2.msra.mxu0 0.0
        %2747 = vmatprep.subr.mxu0 0.0
        %2748 = vmatpush2.msra.mxu0 0.0
        %2749 = vmatprep.subr.mxu0 0.0
        %2750 = vmatpush2.msra.mxu0 0.0
        %2751 = vmatprep.subr.mxu0 0.0
        %2752 = vmatpush2.msra.mxu0 0.0
        %2753 = vmatprep.subr.mxu0 0.0
        %2754 = vmatpush2.msra.mxu0 0.0
        %2755 = vmatprep.subr.mxu0 0.0
        %2756 = vmatpush2.msra.mxu0 0.0
        %2757 = vmatprep.subr.mxu0 0.0
        %2758 = vmatpush2.msra.mxu0 0.0
        %2759 = vmatprep.mubr.f32.mxu0 0.0
        %v2760 = vand.u32 %v1549, 4294901760
        %v2761 = vsub.f32 %v1549, %v2760
        %v2762 = vand.u32 %v2761, 4294901760
        %2763 = vmatmul.mubr.f32.gmra.mxu0 %v2762
        %v2764 = vpop.f32.mrf.mxu0
        %v2765 = vadd.f32 %v2441, %v2764
        %v2766 = vpop.f32.mrf.mxu0
        %v2767 = vadd.f32 %v2443, %v2766
        %2768 = vmatprep.mubr.f32.mxu0 0.0
        %v2769 = vand.u32 %v1552, 4294901760
        %v2770 = vsub.f32 %v1552, %v2769
        %v2771 = vand.u32 %v2770, 4294901760
        %2772 = vmatmul.mubr.f32.gmra.mxu0 %v2771
        %v2773 = vpop.f32.mrf.mxu0
        %v2774 = vadd.f32 %v2449, %v2773
        %v2775 = vpop.f32.mrf.mxu0
        %v2776 = vadd.f32 %v2451, %v2775
        %2777 = vmatprep.mubr.f32.mxu0 0.0
        %v2778 = vand.u32 %v1555, 4294901760
        %v2779 = vsub.f32 %v1555, %v2778
        %v2780 = vand.u32 %v2779, 4294901760
        %2781 = vmatmul.mubr.f32.gmra.mxu0 %v2780
        %v2782 = vpop.f32.mrf.mxu0
        %v2783 = vadd.f32 %v2457, %v2782
        %v2784 = vpop.f32.mrf.mxu0
        %v2785 = vadd.f32 %v2459, %v2784
        %2786 = vmatprep.mubr.f32.mxu0 0.0
        %v2787 = vand.u32 %v1558, 4294901760
        %v2788 = vsub.f32 %v1558, %v2787
        %v2789 = vand.u32 %v2788, 4294901760
        %2790 = vmatmul.mubr.f32.gmra.mxu0 %v2789
        %v2791 = vpop.f32.mrf.mxu0
        %v2792 = vadd.f32 %v2465, %v2791
        %v2793 = vpop.f32.mrf.mxu0
        %v2794 = vadd.f32 %v2467, %v2793
        %2795 = vmatprep.mubr.f32.mxu0 0.0
        %v2796 = vand.u32 %v1561, 4294901760
        %v2797 = vsub.f32 %v1561, %v2796
        %v2798 = vand.u32 %v2797, 4294901760
        %2799 = vmatmul.mubr.f32.gmra.mxu0 %v2798
        %v2800 = vpop.f32.mrf.mxu0
        %v2801 = vadd.f32 %v2473, %v2800
        %v2802 = vpop.f32.mrf.mxu0
        %v2803 = vadd.f32 %v2475, %v2802
        %2804 = vmatprep.mubr.f32.mxu0 0.0
        %v2805 = vand.u32 %v1564, 4294901760
        %v2806 = vsub.f32 %v1564, %v2805
        %v2807 = vand.u32 %v2806, 4294901760
        %2808 = vmatmul.mubr.f32.gmra.mxu0 %v2807
        %v2809 = vpop.f32.mrf.mxu0
        %v2810 = vadd.f32 %v2481, %v2809
        %v2811 = vpop.f32.mrf.mxu0
        %v2812 = vadd.f32 %v2483, %v2811
        %2813 = vmatprep.mubr.f32.mxu0 0.0
        %v2814 = vand.u32 %v1567, 4294901760
        %v2815 = vsub.f32 %v1567, %v2814
        %v2816 = vand.u32 %v2815, 4294901760
        %2817 = vmatmul.mubr.f32.gmra.mxu0 %v2816
        %v2818 = vpop.f32.mrf.mxu0
        %v2819 = vadd.f32 %v2489, %v2818
        %v2820 = vpop.f32.mrf.mxu0
        %v2821 = vadd.f32 %v2491, %v2820
        %2822 = vmatprep.mubr.f32.mxu0 0.0
        %v2823 = vand.u32 %v1570, 4294901760
        %v2824 = vsub.f32 %v1570, %v2823
        %v2825 = vand.u32 %v2824, 4294901760
        %2826 = vmatmul.mubr.f32.gmra.mxu0 %v2825
        %v2827 = vpop.f32.mrf.mxu0
        %v2828 = vadd.f32 %v2497, %v2827
        %v2829 = vpop.f32.mrf.mxu0
        %v2830 = vadd.f32 %v2499, %v2829
        %2831 = vmatprep.mubr.f32.mxu0 0.0
        %v2832 = vand.u32 %v1573, 4294901760
        %v2833 = vsub.f32 %v1573, %v2832
        %v2834 = vand.u32 %v2833, 4294901760
        %2835 = vmatmul.mubr.f32.gmra.mxu0 %v2834
        %v2836 = vpop.f32.mrf.mxu0
        %v2837 = vadd.f32 %v2505, %v2836
        %v2838 = vpop.f32.mrf.mxu0
        %v2839 = vadd.f32 %v2507, %v2838
        %2840 = vmatprep.mubr.f32.mxu0 0.0
        %v2841 = vand.u32 %v1576, 4294901760
        %v2842 = vsub.f32 %v1576, %v2841
        %v2843 = vand.u32 %v2842, 4294901760
        %2844 = vmatmul.mubr.f32.gmra.mxu0 %v2843
        %v2845 = vpop.f32.mrf.mxu0
        %v2846 = vadd.f32 %v2513, %v2845
        %v2847 = vpop.f32.mrf.mxu0
        %v2848 = vadd.f32 %v2515, %v2847
        %2849 = vmatprep.mubr.f32.mxu0 0.0
        %v2850 = vand.u32 %v1579, 4294901760
        %v2851 = vsub.f32 %v1579, %v2850
        %v2852 = vand.u32 %v2851, 4294901760
        %2853 = vmatmul.mubr.f32.gmra.mxu0 %v2852
        %v2854 = vpop.f32.mrf.mxu0
        %v2855 = vadd.f32 %v2521, %v2854
        %v2856 = vpop.f32.mrf.mxu0
        %v2857 = vadd.f32 %v2523, %v2856
        %2858 = vmatprep.mubr.f32.mxu0 0.0
        %v2859 = vand.u32 %v1582, 4294901760
        %v2860 = vsub.f32 %v1582, %v2859
        %v2861 = vand.u32 %v2860, 4294901760
        %2862 = vmatmul.mubr.f32.gmra.mxu0 %v2861
        %v2863 = vpop.f32.mrf.mxu0
        %v2864 = vadd.f32 %v2529, %v2863
        %v2865 = vpop.f32.mrf.mxu0
        %v2866 = vadd.f32 %v2531, %v2865
        %2867 = vmatprep.mubr.f32.mxu0 0.0
        %v2868 = vand.u32 %v1585, 4294901760
        %v2869 = vsub.f32 %v1585, %v2868
        %v2870 = vand.u32 %v2869, 4294901760
        %2871 = vmatmul.mubr.f32.gmra.mxu0 %v2870
        %v2872 = vpop.f32.mrf.mxu0
        %v2873 = vadd.f32 %v2537, %v2872
        %v2874 = vpop.f32.mrf.mxu0
        %v2875 = vadd.f32 %v2539, %v2874
        %2876 = vmatprep.mubr.f32.mxu0 0.0
        %v2877 = vand.u32 %v1588, 4294901760
        %v2878 = vsub.f32 %v1588, %v2877
        %v2879 = vand.u32 %v2878, 4294901760
        %2880 = vmatmul.mubr.f32.gmra.mxu0 %v2879
        %v2881 = vpop.f32.mrf.mxu0
        %v2882 = vadd.f32 %v2545, %v2881
        %v2883 = vpop.f32.mrf.mxu0
        %v2884 = vadd.f32 %v2547, %v2883
        %2885 = vmatprep.mubr.f32.mxu0 0.0
        %v2886 = vand.u32 %v1591, 4294901760
        %v2887 = vsub.f32 %v1591, %v2886
        %v2888 = vand.u32 %v2887, 4294901760
        %2889 = vmatmul.mubr.f32.gmra.mxu0 %v2888
        %v2890 = vpop.f32.mrf.mxu0
        %v2891 = vadd.f32 %v2553, %v2890
        %v2892 = vpop.f32.mrf.mxu0
        %v2893 = vadd.f32 %v2555, %v2892
        %2894 = vmatprep.mubr.f32.mxu0 0.0
        %v2895 = vand.u32 %v1594, 4294901760
        %v2896 = vsub.f32 %v1594, %v2895
        %v2897 = vand.u32 %v2896, 4294901760
        %2898 = vmatmul.mubr.f32.gmra.mxu0 %v2897
        %v2899 = vpop.f32.mrf.mxu0
        %v2900 = vadd.f32 %v2561, %v2899
        %v2901 = vpop.f32.mrf.mxu0
        %v2902 = vadd.f32 %v2563, %v2901
        %2903 = vmatprep.mubr.f32.mxu0 0.0
        %v2904 = vand.u32 %v1597, 4294901760
        %v2905 = vsub.f32 %v1597, %v2904
        %v2906 = vand.u32 %v2905, 4294901760
        %2907 = vmatmul.mubr.f32.gmra.mxu0 %v2906
        %v2908 = vpop.f32.mrf.mxu0
        %v2909 = vadd.f32 %v2569, %v2908
        %v2910 = vpop.f32.mrf.mxu0
        %v2911 = vadd.f32 %v2571, %v2910
        %2912 = vmatprep.mubr.f32.mxu0 0.0
        %v2913 = vand.u32 %v1600, 4294901760
        %v2914 = vsub.f32 %v1600, %v2913
        %v2915 = vand.u32 %v2914, 4294901760
        %2916 = vmatmul.mubr.f32.gmra.mxu0 %v2915
        %v2917 = vpop.f32.mrf.mxu0
        %v2918 = vadd.f32 %v2577, %v2917
        %v2919 = vpop.f32.mrf.mxu0
        %v2920 = vadd.f32 %v2579, %v2919
        %2921 = vmatprep.mubr.f32.mxu0 0.0
        %v2922 = vand.u32 %v1603, 4294901760
        %v2923 = vsub.f32 %v1603, %v2922
        %v2924 = vand.u32 %v2923, 4294901760
        %2925 = vmatmul.mubr.f32.gmra.mxu0 %v2924
        %v2926 = vpop.f32.mrf.mxu0
        %v2927 = vadd.f32 %v2585, %v2926
        %v2928 = vpop.f32.mrf.mxu0
        %v2929 = vadd.f32 %v2587, %v2928
        %2930 = vmatprep.mubr.f32.mxu0 0.0
        %v2931 = vand.u32 %v1606, 4294901760
        %v2932 = vsub.f32 %v1606, %v2931
        %v2933 = vand.u32 %v2932, 4294901760
        %2934 = vmatmul.mubr.f32.gmra.mxu0 %v2933
        %v2935 = vpop.f32.mrf.mxu0
        %v2936 = vadd.f32 %v2593, %v2935
        %v2937 = vpop.f32.mrf.mxu0
        %v2938 = vadd.f32 %v2595, %v2937
        %2939 = vmatprep.mubr.f32.mxu0 0.0
        %v2940 = vand.u32 %v1609, 4294901760
        %v2941 = vsub.f32 %v1609, %v2940
        %v2942 = vand.u32 %v2941, 4294901760
        %2943 = vmatmul.mubr.f32.gmra.mxu0 %v2942
        %v2944 = vpop.f32.mrf.mxu0
        %v2945 = vadd.f32 %v2601, %v2944
        %v2946 = vpop.f32.mrf.mxu0
        %v2947 = vadd.f32 %v2603, %v2946
        %2948 = vmatprep.mubr.f32.mxu0 0.0
        %v2949 = vand.u32 %v1612, 4294901760
        %v2950 = vsub.f32 %v1612, %v2949
        %v2951 = vand.u32 %v2950, 4294901760
        %2952 = vmatmul.mubr.f32.gmra.mxu0 %v2951
        %v2953 = vpop.f32.mrf.mxu0
        %v2954 = vadd.f32 %v2609, %v2953
        %v2955 = vpop.f32.mrf.mxu0
        %v2956 = vadd.f32 %v2611, %v2955
        %2957 = vmatprep.mubr.f32.mxu0 0.0
        %v2958 = vand.u32 %v1615, 4294901760
        %v2959 = vsub.f32 %v1615, %v2958
        %v2960 = vand.u32 %v2959, 4294901760
        %2961 = vmatmul.mubr.f32.gmra.mxu0 %v2960
        %v2962 = vpop.f32.mrf.mxu0
        %v2963 = vadd.f32 %v2617, %v2962
        %v2964 = vpop.f32.mrf.mxu0
        %v2965 = vadd.f32 %v2619, %v2964
        %2966 = vmatprep.mubr.f32.mxu0 0.0
        %v2967 = vand.u32 %v1618, 4294901760
        %v2968 = vsub.f32 %v1618, %v2967
        %v2969 = vand.u32 %v2968, 4294901760
        %2970 = vmatmul.mubr.f32.gmra.mxu0 %v2969
        %v2971 = vpop.f32.mrf.mxu0
        %v2972 = vadd.f32 %v2625, %v2971
        %v2973 = vpop.f32.mrf.mxu0
        %v2974 = vadd.f32 %v2627, %v2973
        %2975 = vmatprep.mubr.f32.mxu0 0.0
        %v2976 = vand.u32 %v1621, 4294901760
        %v2977 = vsub.f32 %v1621, %v2976
        %v2978 = vand.u32 %v2977, 4294901760
        %2979 = vmatmul.mubr.f32.gmra.mxu0 %v2978
        %v2980 = vpop.f32.mrf.mxu0
        %v2981 = vadd.f32 %v2633, %v2980
        %v2982 = vpop.f32.mrf.mxu0
        %v2983 = vadd.f32 %v2635, %v2982
        %2984 = vmatprep.mubr.f32.mxu0 0.0
        %v2985 = vand.u32 %v1624, 4294901760
        %v2986 = vsub.f32 %v1624, %v2985
        %v2987 = vand.u32 %v2986, 4294901760
        %2988 = vmatmul.mubr.f32.gmra.mxu0 %v2987
        %v2989 = vpop.f32.mrf.mxu0
        %v2990 = vadd.f32 %v2641, %v2989
        %v2991 = vpop.f32.mrf.mxu0
        %v2992 = vadd.f32 %v2643, %v2991
        %2993 = vmatprep.mubr.f32.mxu0 0.0
        %v2994 = vand.u32 %v1627, 4294901760
        %v2995 = vsub.f32 %v1627, %v2994
        %v2996 = vand.u32 %v2995, 4294901760
        %2997 = vmatmul.mubr.f32.gmra.mxu0 %v2996
        %v2998 = vpop.f32.mrf.mxu0
        %v2999 = vadd.f32 %v2649, %v2998
        %v3000 = vpop.f32.mrf.mxu0
        %v3001 = vadd.f32 %v2651, %v3000
        %3002 = vmatprep.mubr.f32.mxu0 0.0
        %v3003 = vand.u32 %v1630, 4294901760
        %v3004 = vsub.f32 %v1630, %v3003
        %v3005 = vand.u32 %v3004, 4294901760
        %3006 = vmatmul.mubr.f32.gmra.mxu0 %v3005
        %v3007 = vpop.f32.mrf.mxu0
        %v3008 = vadd.f32 %v2657, %v3007
        %v3009 = vpop.f32.mrf.mxu0
        %v3010 = vadd.f32 %v2659, %v3009
        %3011 = vmatprep.mubr.f32.mxu0 0.0
        %v3012 = vand.u32 %v1633, 4294901760
        %v3013 = vsub.f32 %v1633, %v3012
        %v3014 = vand.u32 %v3013, 4294901760
        %3015 = vmatmul.mubr.f32.gmra.mxu0 %v3014
        %v3016 = vpop.f32.mrf.mxu0
        %v3017 = vadd.f32 %v2665, %v3016
        %v3018 = vpop.f32.mrf.mxu0
        %v3019 = vadd.f32 %v2667, %v3018
        %3020 = vmatprep.mubr.f32.mxu0 0.0
        %v3021 = vand.u32 %v1636, 4294901760
        %v3022 = vsub.f32 %v1636, %v3021
        %v3023 = vand.u32 %v3022, 4294901760
        %3024 = vmatmul.mubr.f32.gmra.mxu0 %v3023
        %v3025 = vpop.f32.mrf.mxu0
        %v3026 = vadd.f32 %v2673, %v3025
        %v3027 = vpop.f32.mrf.mxu0
        %v3028 = vadd.f32 %v2675, %v3027
        %3029 = vmatprep.mubr.f32.mxu0 0.0
        %v3030 = vand.u32 %v1639, 4294901760
        %v3031 = vsub.f32 %v1639, %v3030
        %v3032 = vand.u32 %v3031, 4294901760
        %3033 = vmatmul.mubr.f32.gmra.mxu0 %v3032
        %v3034 = vpop.f32.mrf.mxu0
        %v3035 = vadd.f32 %v2681, %v3034
        %v3036 = vpop.f32.mrf.mxu0
        %v3037 = vadd.f32 %v2683, %v3036
        %3038 = vmatprep.mubr.f32.mxu0 0.0
        %v3039 = vand.u32 %v1642, 4294901760
        %v3040 = vsub.f32 %v1642, %v3039
        %v3041 = vand.u32 %v3040, 4294901760
        %3042 = vmatmul.mubr.f32.gmra.mxu0 %v3041
        %v3043 = vpop.f32.mrf.mxu0
        %v3044 = vadd.f32 %v2689, %v3043
        %v3045 = vpop.f32.mrf.mxu0
        %v3046 = vadd.f32 %v2691, %v3045
        %3047 = vdwg.mxu0
        %3048 = vmatprep.subr.mxu0 0.0
        %3049 = vmatpush1.msra.mxu0 0.0
        %3050 = vmatprep.subr.mxu0 0.0
        %3051 = vmatpush1.msra.mxu0 0.0
        %3052 = vmatprep.subr.mxu0 0.0
        %3053 = vmatpush1.msra.mxu0 0.0
        %3054 = vmatprep.subr.mxu0 0.0
        %3055 = vmatpush1.msra.mxu0 0.0
        %3056 = vmatprep.subr.mxu0 0.0
        %3057 = vmatpush1.msra.mxu0 0.0
        %3058 = vmatprep.subr.mxu0 0.0
        %3059 = vmatpush1.msra.mxu0 0.0
        %3060 = vmatprep.subr.mxu0 0.0
        %3061 = vmatpush1.msra.mxu0 0.0
        %3062 = vmatprep.subr.mxu0 0.0
        %3063 = vmatpush1.msra.mxu0 0.0
        %3064 = vmatprep.subr.mxu0 0.0
        %3065 = vmatpush1.msra.mxu0 0.0
        %3066 = vmatprep.subr.mxu0 0.0
        %3067 = vmatpush1.msra.mxu0 0.0
        %3068 = vmatprep.subr.mxu0 0.0
        %3069 = vmatpush1.msra.mxu0 0.0
        %3070 = vmatprep.subr.mxu0 0.0
        %3071 = vmatpush1.msra.mxu0 0.0
        %3072 = vmatprep.subr.mxu0 0.0
        %3073 = vmatpush1.msra.mxu0 0.0
        %3074 = vmatprep.subr.mxu0 0.0
        %3075 = vmatpush1.msra.mxu0 0.0
        %3076 = vmatprep.subr.mxu0 0.0
        %3077 = vmatpush1.msra.mxu0 0.0
        %v3078 = vand.u32 %v1648, 4294901760
        %v3079 = vsub.f32 %v1648, %v3078
        %v3080 = vand.u32 %v3079, 4294901760
        %3081 = vmatprep.subr.mxu0 %v3080
        %v3082 = vand.u32 %v1645, 4294901760
        %v3083 = vsub.f32 %v1645, %v3082
        %v3084 = vand.u32 %v3083, 4294901760
        %3085 = vmatpush1.msra.mxu0 %v3084
        %3086 = vmatprep.subr.mxu0 0.0
        %3087 = vmatpush2.msra.mxu0 0.0
        %3088 = vmatprep.subr.mxu0 0.0
        %3089 = vmatpush2.msra.mxu0 0.0
        %3090 = vmatprep.subr.mxu0 0.0
        %3091 = vmatpush2.msra.mxu0 0.0
        %3092 = vmatprep.subr.mxu0 0.0
        %3093 = vmatpush2.msra.mxu0 0.0
        %3094 = vmatprep.subr.mxu0 0.0
        %3095 = vmatpush2.msra.mxu0 0.0
        %3096 = vmatprep.subr.mxu0 0.0
        %3097 = vmatpush2.msra.mxu0 0.0
        %3098 = vmatprep.subr.mxu0 0.0
        %3099 = vmatpush2.msra.mxu0 0.0
        %3100 = vmatprep.subr.mxu0 0.0
        %3101 = vmatpush2.msra.mxu0 0.0
        %3102 = vmatprep.subr.mxu0 0.0
        %3103 = vmatpush2.msra.mxu0 0.0
        %3104 = vmatprep.subr.mxu0 0.0
        %3105 = vmatpush2.msra.mxu0 0.0
        %3106 = vmatprep.subr.mxu0 0.0
        %3107 = vmatpush2.msra.mxu0 0.0
        %3108 = vmatprep.subr.mxu0 0.0
        %3109 = vmatpush2.msra.mxu0 0.0
        %3110 = vmatprep.subr.mxu0 0.0
        %3111 = vmatpush2.msra.mxu0 0.0
        %3112 = vmatprep.subr.mxu0 0.0
        %3113 = vmatpush2.msra.mxu0 0.0
        %3114 = vmatprep.subr.mxu0 0.0
        %3115 = vmatpush2.msra.mxu0 0.0
        %3116 = vmatprep.subr.mxu0 0.0
        %3117 = vmatpush2.msra.mxu0 0.0
        %3118 = vmatprep.mubr.f32.mxu0 0.0
        %v3119 = vand.u32 %v1549, 4294901760
        %3120 = vmatmul.mubr.f32.gmra.mxu0 %v3119
        %v3121 = vpop.f32.mrf.mxu0
        %v3122 = vadd.f32 %v2765, %v3121
        %v3123 = vpop.f32.mrf.mxu0
        %v3124 = vadd.f32 %v2767, %v3123
        %3125 = vmatprep.mubr.f32.mxu0 0.0
        %v3126 = vand.u32 %v1552, 4294901760
        %3127 = vmatmul.mubr.f32.gmra.mxu0 %v3126
        %v3128 = vpop.f32.mrf.mxu0
        %v3129 = vadd.f32 %v2774, %v3128
        %v3130 = vpop.f32.mrf.mxu0
        %v3131 = vadd.f32 %v2776, %v3130
        %3132 = vmatprep.mubr.f32.mxu0 0.0
        %v3133 = vand.u32 %v1555, 4294901760
        %3134 = vmatmul.mubr.f32.gmra.mxu0 %v3133
        %v3135 = vpop.f32.mrf.mxu0
        %v3136 = vadd.f32 %v2783, %v3135
        %v3137 = vpop.f32.mrf.mxu0
        %v3138 = vadd.f32 %v2785, %v3137
        %3139 = vmatprep.mubr.f32.mxu0 0.0
        %v3140 = vand.u32 %v1558, 4294901760
        %3141 = vmatmul.mubr.f32.gmra.mxu0 %v3140
        %v3142 = vpop.f32.mrf.mxu0
        %v3143 = vadd.f32 %v2792, %v3142
        %v3144 = vpop.f32.mrf.mxu0
        %v3145 = vadd.f32 %v2794, %v3144
        %3146 = vmatprep.mubr.f32.mxu0 0.0
        %v3147 = vand.u32 %v1561, 4294901760
        %3148 = vmatmul.mubr.f32.gmra.mxu0 %v3147
        %v3149 = vpop.f32.mrf.mxu0
        %v3150 = vadd.f32 %v2801, %v3149
        %v3151 = vpop.f32.mrf.mxu0
        %v3152 = vadd.f32 %v2803, %v3151
        %3153 = vmatprep.mubr.f32.mxu0 0.0
        %v3154 = vand.u32 %v1564, 4294901760
        %3155 = vmatmul.mubr.f32.gmra.mxu0 %v3154
        %v3156 = vpop.f32.mrf.mxu0
        %v3157 = vadd.f32 %v2810, %v3156
        %v3158 = vpop.f32.mrf.mxu0
        %v3159 = vadd.f32 %v2812, %v3158
        %3160 = vmatprep.mubr.f32.mxu0 0.0
        %v3161 = vand.u32 %v1567, 4294901760
        %3162 = vmatmul.mubr.f32.gmra.mxu0 %v3161
        %v3163 = vpop.f32.mrf.mxu0
        %v3164 = vadd.f32 %v2819, %v3163
        %v3165 = vpop.f32.mrf.mxu0
        %v3166 = vadd.f32 %v2821, %v3165
        %3167 = vmatprep.mubr.f32.mxu0 0.0
        %v3168 = vand.u32 %v1570, 4294901760
        %3169 = vmatmul.mubr.f32.gmra.mxu0 %v3168
        %v3170 = vpop.f32.mrf.mxu0
        %v3171 = vadd.f32 %v2828, %v3170
        %v3172 = vpop.f32.mrf.mxu0
        %v3173 = vadd.f32 %v2830, %v3172
        %3174 = vmatprep.mubr.f32.mxu0 0.0
        %v3175 = vand.u32 %v1573, 4294901760
        %3176 = vmatmul.mubr.f32.gmra.mxu0 %v3175
        %v3177 = vpop.f32.mrf.mxu0
        %v3178 = vadd.f32 %v2837, %v3177
        %v3179 = vpop.f32.mrf.mxu0
        %v3180 = vadd.f32 %v2839, %v3179
        %3181 = vmatprep.mubr.f32.mxu0 0.0
        %v3182 = vand.u32 %v1576, 4294901760
        %3183 = vmatmul.mubr.f32.gmra.mxu0 %v3182
        %v3184 = vpop.f32.mrf.mxu0
        %v3185 = vadd.f32 %v2846, %v3184
        %v3186 = vpop.f32.mrf.mxu0
        %v3187 = vadd.f32 %v2848, %v3186
        %3188 = vmatprep.mubr.f32.mxu0 0.0
        %v3189 = vand.u32 %v1579, 4294901760
        %3190 = vmatmul.mubr.f32.gmra.mxu0 %v3189
        %v3191 = vpop.f32.mrf.mxu0
        %v3192 = vadd.f32 %v2855, %v3191
        %v3193 = vpop.f32.mrf.mxu0
        %v3194 = vadd.f32 %v2857, %v3193
        %3195 = vmatprep.mubr.f32.mxu0 0.0
        %v3196 = vand.u32 %v1582, 4294901760
        %3197 = vmatmul.mubr.f32.gmra.mxu0 %v3196
        %v3198 = vpop.f32.mrf.mxu0
        %v3199 = vadd.f32 %v2864, %v3198
        %v3200 = vpop.f32.mrf.mxu0
        %v3201 = vadd.f32 %v2866, %v3200
        %3202 = vmatprep.mubr.f32.mxu0 0.0
        %v3203 = vand.u32 %v1585, 4294901760
        %3204 = vmatmul.mubr.f32.gmra.mxu0 %v3203
        %v3205 = vpop.f32.mrf.mxu0
        %v3206 = vadd.f32 %v2873, %v3205
        %v3207 = vpop.f32.mrf.mxu0
        %v3208 = vadd.f32 %v2875, %v3207
        %3209 = vmatprep.mubr.f32.mxu0 0.0
        %v3210 = vand.u32 %v1588, 4294901760
        %3211 = vmatmul.mubr.f32.gmra.mxu0 %v3210
        %v3212 = vpop.f32.mrf.mxu0
        %v3213 = vadd.f32 %v2882, %v3212
        %v3214 = vpop.f32.mrf.mxu0
        %v3215 = vadd.f32 %v2884, %v3214
        %3216 = vmatprep.mubr.f32.mxu0 0.0
        %v3217 = vand.u32 %v1591, 4294901760
        %3218 = vmatmul.mubr.f32.gmra.mxu0 %v3217
        %v3219 = vpop.f32.mrf.mxu0
        %v3220 = vadd.f32 %v2891, %v3219
        %v3221 = vpop.f32.mrf.mxu0
        %v3222 = vadd.f32 %v2893, %v3221
        %3223 = vmatprep.mubr.f32.mxu0 0.0
        %v3224 = vand.u32 %v1594, 4294901760
        %3225 = vmatmul.mubr.f32.gmra.mxu0 %v3224
        %v3226 = vpop.f32.mrf.mxu0
        %v3227 = vadd.f32 %v2900, %v3226
        %v3228 = vpop.f32.mrf.mxu0
        %v3229 = vadd.f32 %v2902, %v3228
        %3230 = vmatprep.mubr.f32.mxu0 0.0
        %v3231 = vand.u32 %v1597, 4294901760
        %3232 = vmatmul.mubr.f32.gmra.mxu0 %v3231
        %v3233 = vpop.f32.mrf.mxu0
        %v3234 = vadd.f32 %v2909, %v3233
        %v3235 = vpop.f32.mrf.mxu0
        %v3236 = vadd.f32 %v2911, %v3235
        %3237 = vmatprep.mubr.f32.mxu0 0.0
        %v3238 = vand.u32 %v1600, 4294901760
        %3239 = vmatmul.mubr.f32.gmra.mxu0 %v3238
        %v3240 = vpop.f32.mrf.mxu0
        %v3241 = vadd.f32 %v2918, %v3240
        %v3242 = vpop.f32.mrf.mxu0
        %v3243 = vadd.f32 %v2920, %v3242
        %3244 = vmatprep.mubr.f32.mxu0 0.0
        %v3245 = vand.u32 %v1603, 4294901760
        %3246 = vmatmul.mubr.f32.gmra.mxu0 %v3245
        %v3247 = vpop.f32.mrf.mxu0
        %v3248 = vadd.f32 %v2927, %v3247
        %v3249 = vpop.f32.mrf.mxu0
        %v3250 = vadd.f32 %v2929, %v3249
        %3251 = vmatprep.mubr.f32.mxu0 0.0
        %v3252 = vand.u32 %v1606, 4294901760
        %3253 = vmatmul.mubr.f32.gmra.mxu0 %v3252
        %v3254 = vpop.f32.mrf.mxu0
        %v3255 = vadd.f32 %v2936, %v3254
        %v3256 = vpop.f32.mrf.mxu0
        %v3257 = vadd.f32 %v2938, %v3256
        %3258 = vmatprep.mubr.f32.mxu0 0.0
        %v3259 = vand.u32 %v1609, 4294901760
        %3260 = vmatmul.mubr.f32.gmra.mxu0 %v3259
        %v3261 = vpop.f32.mrf.mxu0
        %v3262 = vadd.f32 %v2945, %v3261
        %v3263 = vpop.f32.mrf.mxu0
        %v3264 = vadd.f32 %v2947, %v3263
        %3265 = vmatprep.mubr.f32.mxu0 0.0
        %v3266 = vand.u32 %v1612, 4294901760
        %3267 = vmatmul.mubr.f32.gmra.mxu0 %v3266
        %v3268 = vpop.f32.mrf.mxu0
        %v3269 = vadd.f32 %v2954, %v3268
        %v3270 = vpop.f32.mrf.mxu0
        %v3271 = vadd.f32 %v2956, %v3270
        %3272 = vmatprep.mubr.f32.mxu0 0.0
        %v3273 = vand.u32 %v1615, 4294901760
        %3274 = vmatmul.mubr.f32.gmra.mxu0 %v3273
        %v3275 = vpop.f32.mrf.mxu0
        %v3276 = vadd.f32 %v2963, %v3275
        %v3277 = vpop.f32.mrf.mxu0
        %v3278 = vadd.f32 %v2965, %v3277
        %3279 = vmatprep.mubr.f32.mxu0 0.0
        %v3280 = vand.u32 %v1618, 4294901760
        %3281 = vmatmul.mubr.f32.gmra.mxu0 %v3280
        %v3282 = vpop.f32.mrf.mxu0
        %v3283 = vadd.f32 %v2972, %v3282
        %v3284 = vpop.f32.mrf.mxu0
        %v3285 = vadd.f32 %v2974, %v3284
        %3286 = vmatprep.mubr.f32.mxu0 0.0
        %v3287 = vand.u32 %v1621, 4294901760
        %3288 = vmatmul.mubr.f32.gmra.mxu0 %v3287
        %v3289 = vpop.f32.mrf.mxu0
        %v3290 = vadd.f32 %v2981, %v3289
        %v3291 = vpop.f32.mrf.mxu0
        %v3292 = vadd.f32 %v2983, %v3291
        %3293 = vmatprep.mubr.f32.mxu0 0.0
        %v3294 = vand.u32 %v1624, 4294901760
        %3295 = vmatmul.mubr.f32.gmra.mxu0 %v3294
        %v3296 = vpop.f32.mrf.mxu0
        %v3297 = vadd.f32 %v2990, %v3296
        %v3298 = vpop.f32.mrf.mxu0
        %v3299 = vadd.f32 %v2992, %v3298
        %3300 = vmatprep.mubr.f32.mxu0 0.0
        %v3301 = vand.u32 %v1627, 4294901760
        %3302 = vmatmul.mubr.f32.gmra.mxu0 %v3301
        %v3303 = vpop.f32.mrf.mxu0
        %v3304 = vadd.f32 %v2999, %v3303
        %v3305 = vpop.f32.mrf.mxu0
        %v3306 = vadd.f32 %v3001, %v3305
        %3307 = vmatprep.mubr.f32.mxu0 0.0
        %v3308 = vand.u32 %v1630, 4294901760
        %3309 = vmatmul.mubr.f32.gmra.mxu0 %v3308
        %v3310 = vpop.f32.mrf.mxu0
        %v3311 = vadd.f32 %v3008, %v3310
        %v3312 = vpop.f32.mrf.mxu0
        %v3313 = vadd.f32 %v3010, %v3312
        %3314 = vmatprep.mubr.f32.mxu0 0.0
        %v3315 = vand.u32 %v1633, 4294901760
        %3316 = vmatmul.mubr.f32.gmra.mxu0 %v3315
        %v3317 = vpop.f32.mrf.mxu0
        %v3318 = vadd.f32 %v3017, %v3317
        %v3319 = vpop.f32.mrf.mxu0
        %v3320 = vadd.f32 %v3019, %v3319
        %3321 = vmatprep.mubr.f32.mxu0 0.0
        %v3322 = vand.u32 %v1636, 4294901760
        %3323 = vmatmul.mubr.f32.gmra.mxu0 %v3322
        %v3324 = vpop.f32.mrf.mxu0
        %v3325 = vadd.f32 %v3026, %v3324
        %v3326 = vpop.f32.mrf.mxu0
        %v3327 = vadd.f32 %v3028, %v3326
        %3328 = vmatprep.mubr.f32.mxu0 0.0
        %v3329 = vand.u32 %v1639, 4294901760
        %3330 = vmatmul.mubr.f32.gmra.mxu0 %v3329
        %v3331 = vpop.f32.mrf.mxu0
        %v3332 = vadd.f32 %v3035, %v3331
        %v3333 = vpop.f32.mrf.mxu0
        %v3334 = vadd.f32 %v3037, %v3333
        %3335 = vmatprep.mubr.f32.mxu0 0.0
        %v3336 = vand.u32 %v1642, 4294901760
        %3337 = vmatmul.mubr.f32.gmra.mxu0 %v3336
        %v3338 = vpop.f32.mrf.mxu0
        %v3339 = vadd.f32 %v3044, %v3338
        %v3340 = vpop.f32.mrf.mxu0
        %v3341 = vadd.f32 %v3046, %v3340
        %3342 = vdwg.mxu0
        %3343 = vmatprep.subr.mxu0 0.0
        %3344 = vmatpush1.msra.mxu0 0.0
        %3345 = vmatprep.subr.mxu0 0.0
        %3346 = vmatpush1.msra.mxu0 0.0
        %3347 = vmatprep.subr.mxu0 0.0
        %3348 = vmatpush1.msra.mxu0 0.0
        %3349 = vmatprep.subr.mxu0 0.0
        %3350 = vmatpush1.msra.mxu0 0.0
        %3351 = vmatprep.subr.mxu0 0.0
        %3352 = vmatpush1.msra.mxu0 0.0
        %3353 = vmatprep.subr.mxu0 0.0
        %3354 = vmatpush1.msra.mxu0 0.0
        %3355 = vmatprep.subr.mxu0 0.0
        %3356 = vmatpush1.msra.mxu0 0.0
        %3357 = vmatprep.subr.mxu0 0.0
        %3358 = vmatpush1.msra.mxu0 0.0
        %3359 = vmatprep.subr.mxu0 0.0
        %3360 = vmatpush1.msra.mxu0 0.0
        %3361 = vmatprep.subr.mxu0 0.0
        %3362 = vmatpush1.msra.mxu0 0.0
        %3363 = vmatprep.subr.mxu0 0.0
        %3364 = vmatpush1.msra.mxu0 0.0
        %3365 = vmatprep.subr.mxu0 0.0
        %3366 = vmatpush1.msra.mxu0 0.0
        %3367 = vmatprep.subr.mxu0 0.0
        %3368 = vmatpush1.msra.mxu0 0.0
        %3369 = vmatprep.subr.mxu0 0.0
        %3370 = vmatpush1.msra.mxu0 0.0
        %3371 = vmatprep.subr.mxu0 0.0
        %3372 = vmatpush1.msra.mxu0 0.0
        %v3373 = vand.u32 %v1648, 4294901760
        %3374 = vmatprep.subr.mxu0 %v3373
        %v3375 = vand.u32 %v1645, 4294901760
        %3376 = vmatpush1.msra.mxu0 %v3375
        %3377 = vmatprep.subr.mxu0 0.0
        %3378 = vmatpush2.msra.mxu0 0.0
        %3379 = vmatprep.subr.mxu0 0.0
        %3380 = vmatpush2.msra.mxu0 0.0
        %3381 = vmatprep.subr.mxu0 0.0
        %3382 = vmatpush2.msra.mxu0 0.0
        %3383 = vmatprep.subr.mxu0 0.0
        %3384 = vmatpush2.msra.mxu0 0.0
        %3385 = vmatprep.subr.mxu0 0.0
        %3386 = vmatpush2.msra.mxu0 0.0
        %3387 = vmatprep.subr.mxu0 0.0
        %3388 = vmatpush2.msra.mxu0 0.0
        %3389 = vmatprep.subr.mxu0 0.0
        %3390 = vmatpush2.msra.mxu0 0.0
        %3391 = vmatprep.subr.mxu0 0.0
        %3392 = vmatpush2.msra.mxu0 0.0
        %3393 = vmatprep.subr.mxu0 0.0
        %3394 = vmatpush2.msra.mxu0 0.0
        %3395 = vmatprep.subr.mxu0 0.0
        %3396 = vmatpush2.msra.mxu0 0.0
        %3397 = vmatprep.subr.mxu0 0.0
        %3398 = vmatpush2.msra.mxu0 0.0
        %3399 = vmatprep.subr.mxu0 0.0
        %3400 = vmatpush2.msra.mxu0 0.0
        %3401 = vmatprep.subr.mxu0 0.0
        %3402 = vmatpush2.msra.mxu0 0.0
        %3403 = vmatprep.subr.mxu0 0.0
        %3404 = vmatpush2.msra.mxu0 0.0
        %3405 = vmatprep.subr.mxu0 0.0
        %3406 = vmatpush2.msra.mxu0 0.0
        %3407 = vmatprep.subr.mxu0 0.0
        %3408 = vmatpush2.msra.mxu0 0.0
        %3409 = vmatprep.mubr.f32.mxu0 0.0
        %v3410 = vand.u32 %v1549, 4294901760
        %3411 = vmatmul.mubr.f32.gmra.mxu0 %v3410
        %v3412 = vpop.f32.mrf.mxu0
        %v3413 = vadd.f32 %v3122, %v3412
        %v3414 = vpop.f32.mrf.mxu0
        %v3415 = vadd.f32 %v3124, %v3414
        %3416 = vmatprep.mubr.f32.mxu0 0.0
        %v3417 = vand.u32 %v1552, 4294901760
        %3418 = vmatmul.mubr.f32.gmra.mxu0 %v3417
        %v3419 = vpop.f32.mrf.mxu0
        %v3420 = vadd.f32 %v3129, %v3419
        %v3421 = vpop.f32.mrf.mxu0
        %v3422 = vadd.f32 %v3131, %v3421
        %3423 = vmatprep.mubr.f32.mxu0 0.0
        %v3424 = vand.u32 %v1555, 4294901760
        %3425 = vmatmul.mubr.f32.gmra.mxu0 %v3424
        %v3426 = vpop.f32.mrf.mxu0
        %v3427 = vadd.f32 %v3136, %v3426
        %v3428 = vpop.f32.mrf.mxu0
        %v3429 = vadd.f32 %v3138, %v3428
        %3430 = vmatprep.mubr.f32.mxu0 0.0
        %v3431 = vand.u32 %v1558, 4294901760
        %3432 = vmatmul.mubr.f32.gmra.mxu0 %v3431
        %v3433 = vpop.f32.mrf.mxu0
        %v3434 = vadd.f32 %v3143, %v3433
        %v3435 = vpop.f32.mrf.mxu0
        %v3436 = vadd.f32 %v3145, %v3435
        %3437 = vmatprep.mubr.f32.mxu0 0.0
        %v3438 = vand.u32 %v1561, 4294901760
        %3439 = vmatmul.mubr.f32.gmra.mxu0 %v3438
        %v3440 = vpop.f32.mrf.mxu0
        %v3441 = vadd.f32 %v3150, %v3440
        %v3442 = vpop.f32.mrf.mxu0
        %v3443 = vadd.f32 %v3152, %v3442
        %3444 = vmatprep.mubr.f32.mxu0 0.0
        %v3445 = vand.u32 %v1564, 4294901760
        %3446 = vmatmul.mubr.f32.gmra.mxu0 %v3445
        %v3447 = vpop.f32.mrf.mxu0
        %v3448 = vadd.f32 %v3157, %v3447
        %v3449 = vpop.f32.mrf.mxu0
        %v3450 = vadd.f32 %v3159, %v3449
        %3451 = vmatprep.mubr.f32.mxu0 0.0
        %v3452 = vand.u32 %v1567, 4294901760
        %3453 = vmatmul.mubr.f32.gmra.mxu0 %v3452
        %v3454 = vpop.f32.mrf.mxu0
        %v3455 = vadd.f32 %v3164, %v3454
        %v3456 = vpop.f32.mrf.mxu0
        %v3457 = vadd.f32 %v3166, %v3456
        %3458 = vmatprep.mubr.f32.mxu0 0.0
        %v3459 = vand.u32 %v1570, 4294901760
        %3460 = vmatmul.mubr.f32.gmra.mxu0 %v3459
        %v3461 = vpop.f32.mrf.mxu0
        %v3462 = vadd.f32 %v3171, %v3461
        %v3463 = vpop.f32.mrf.mxu0
        %v3464 = vadd.f32 %v3173, %v3463
        %3465 = vmatprep.mubr.f32.mxu0 0.0
        %v3466 = vand.u32 %v1573, 4294901760
        %3467 = vmatmul.mubr.f32.gmra.mxu0 %v3466
        %v3468 = vpop.f32.mrf.mxu0
        %v3469 = vadd.f32 %v3178, %v3468
        %v3470 = vpop.f32.mrf.mxu0
        %v3471 = vadd.f32 %v3180, %v3470
        %3472 = vmatprep.mubr.f32.mxu0 0.0
        %v3473 = vand.u32 %v1576, 4294901760
        %3474 = vmatmul.mubr.f32.gmra.mxu0 %v3473
        %v3475 = vpop.f32.mrf.mxu0
        %v3476 = vadd.f32 %v3185, %v3475
        %v3477 = vpop.f32.mrf.mxu0
        %v3478 = vadd.f32 %v3187, %v3477
        %3479 = vmatprep.mubr.f32.mxu0 0.0
        %v3480 = vand.u32 %v1579, 4294901760
        %3481 = vmatmul.mubr.f32.gmra.mxu0 %v3480
        %v3482 = vpop.f32.mrf.mxu0
        %v3483 = vadd.f32 %v3192, %v3482
        %v3484 = vpop.f32.mrf.mxu0
        %v3485 = vadd.f32 %v3194, %v3484
        %3486 = vmatprep.mubr.f32.mxu0 0.0
        %v3487 = vand.u32 %v1582, 4294901760
        %3488 = vmatmul.mubr.f32.gmra.mxu0 %v3487
        %v3489 = vpop.f32.mrf.mxu0
        %v3490 = vadd.f32 %v3199, %v3489
        %v3491 = vpop.f32.mrf.mxu0
        %v3492 = vadd.f32 %v3201, %v3491
        %3493 = vmatprep.mubr.f32.mxu0 0.0
        %v3494 = vand.u32 %v1585, 4294901760
        %3495 = vmatmul.mubr.f32.gmra.mxu0 %v3494
        %v3496 = vpop.f32.mrf.mxu0
        %v3497 = vadd.f32 %v3206, %v3496
        %v3498 = vpop.f32.mrf.mxu0
        %v3499 = vadd.f32 %v3208, %v3498
        %3500 = vmatprep.mubr.f32.mxu0 0.0
        %v3501 = vand.u32 %v1588, 4294901760
        %3502 = vmatmul.mubr.f32.gmra.mxu0 %v3501
        %v3503 = vpop.f32.mrf.mxu0
        %v3504 = vadd.f32 %v3213, %v3503
        %v3505 = vpop.f32.mrf.mxu0
        %v3506 = vadd.f32 %v3215, %v3505
        %3507 = vmatprep.mubr.f32.mxu0 0.0
        %v3508 = vand.u32 %v1591, 4294901760
        %3509 = vmatmul.mubr.f32.gmra.mxu0 %v3508
        %v3510 = vpop.f32.mrf.mxu0
        %v3511 = vadd.f32 %v3220, %v3510
        %v3512 = vpop.f32.mrf.mxu0
        %v3513 = vadd.f32 %v3222, %v3512
        %3514 = vmatprep.mubr.f32.mxu0 0.0
        %v3515 = vand.u32 %v1594, 4294901760
        %3516 = vmatmul.mubr.f32.gmra.mxu0 %v3515
        %v3517 = vpop.f32.mrf.mxu0
        %v3518 = vadd.f32 %v3227, %v3517
        %v3519 = vpop.f32.mrf.mxu0
        %v3520 = vadd.f32 %v3229, %v3519
        %3521 = vmatprep.mubr.f32.mxu0 0.0
        %v3522 = vand.u32 %v1597, 4294901760
        %3523 = vmatmul.mubr.f32.gmra.mxu0 %v3522
        %v3524 = vpop.f32.mrf.mxu0
        %v3525 = vadd.f32 %v3234, %v3524
        %v3526 = vpop.f32.mrf.mxu0
        %v3527 = vadd.f32 %v3236, %v3526
        %3528 = vmatprep.mubr.f32.mxu0 0.0
        %v3529 = vand.u32 %v1600, 4294901760
        %3530 = vmatmul.mubr.f32.gmra.mxu0 %v3529
        %v3531 = vpop.f32.mrf.mxu0
        %v3532 = vadd.f32 %v3241, %v3531
        %v3533 = vpop.f32.mrf.mxu0
        %v3534 = vadd.f32 %v3243, %v3533
        %3535 = vmatprep.mubr.f32.mxu0 0.0
        %v3536 = vand.u32 %v1603, 4294901760
        %3537 = vmatmul.mubr.f32.gmra.mxu0 %v3536
        %v3538 = vpop.f32.mrf.mxu0
        %v3539 = vadd.f32 %v3248, %v3538
        %v3540 = vpop.f32.mrf.mxu0
        %v3541 = vadd.f32 %v3250, %v3540
        %3542 = vmatprep.mubr.f32.mxu0 0.0
        %v3543 = vand.u32 %v1606, 4294901760
        %3544 = vmatmul.mubr.f32.gmra.mxu0 %v3543
        %v3545 = vpop.f32.mrf.mxu0
        %v3546 = vadd.f32 %v3255, %v3545
        %v3547 = vpop.f32.mrf.mxu0
        %v3548 = vadd.f32 %v3257, %v3547
        %3549 = vmatprep.mubr.f32.mxu0 0.0
        %v3550 = vand.u32 %v1609, 4294901760
        %3551 = vmatmul.mubr.f32.gmra.mxu0 %v3550
        %v3552 = vpop.f32.mrf.mxu0
        %v3553 = vadd.f32 %v3262, %v3552
        %v3554 = vpop.f32.mrf.mxu0
        %v3555 = vadd.f32 %v3264, %v3554
        %3556 = vmatprep.mubr.f32.mxu0 0.0
        %v3557 = vand.u32 %v1612, 4294901760
        %3558 = vmatmul.mubr.f32.gmra.mxu0 %v3557
        %v3559 = vpop.f32.mrf.mxu0
        %v3560 = vadd.f32 %v3269, %v3559
        %v3561 = vpop.f32.mrf.mxu0
        %v3562 = vadd.f32 %v3271, %v3561
        %3563 = vmatprep.mubr.f32.mxu0 0.0
        %v3564 = vand.u32 %v1615, 4294901760
        %3565 = vmatmul.mubr.f32.gmra.mxu0 %v3564
        %v3566 = vpop.f32.mrf.mxu0
        %v3567 = vadd.f32 %v3276, %v3566
        %v3568 = vpop.f32.mrf.mxu0
        %v3569 = vadd.f32 %v3278, %v3568
        %3570 = vmatprep.mubr.f32.mxu0 0.0
        %v3571 = vand.u32 %v1618, 4294901760
        %3572 = vmatmul.mubr.f32.gmra.mxu0 %v3571
        %v3573 = vpop.f32.mrf.mxu0
        %v3574 = vadd.f32 %v3283, %v3573
        %v3575 = vpop.f32.mrf.mxu0
        %v3576 = vadd.f32 %v3285, %v3575
        %3577 = vmatprep.mubr.f32.mxu0 0.0
        %v3578 = vand.u32 %v1621, 4294901760
        %3579 = vmatmul.mubr.f32.gmra.mxu0 %v3578
        %v3580 = vpop.f32.mrf.mxu0
        %v3581 = vadd.f32 %v3290, %v3580
        %v3582 = vpop.f32.mrf.mxu0
        %v3583 = vadd.f32 %v3292, %v3582
        %3584 = vmatprep.mubr.f32.mxu0 0.0
        %v3585 = vand.u32 %v1624, 4294901760
        %3586 = vmatmul.mubr.f32.gmra.mxu0 %v3585
        %v3587 = vpop.f32.mrf.mxu0
        %v3588 = vadd.f32 %v3297, %v3587
        %v3589 = vpop.f32.mrf.mxu0
        %v3590 = vadd.f32 %v3299, %v3589
        %3591 = vmatprep.mubr.f32.mxu0 0.0
        %v3592 = vand.u32 %v1627, 4294901760
        %3593 = vmatmul.mubr.f32.gmra.mxu0 %v3592
        %v3594 = vpop.f32.mrf.mxu0
        %v3595 = vadd.f32 %v3304, %v3594
        %v3596 = vpop.f32.mrf.mxu0
        %v3597 = vadd.f32 %v3306, %v3596
        %3598 = vmatprep.mubr.f32.mxu0 0.0
        %v3599 = vand.u32 %v1630, 4294901760
        %3600 = vmatmul.mubr.f32.gmra.mxu0 %v3599
        %v3601 = vpop.f32.mrf.mxu0
        %v3602 = vadd.f32 %v3311, %v3601
        %v3603 = vpop.f32.mrf.mxu0
        %v3604 = vadd.f32 %v3313, %v3603
        %3605 = vmatprep.mubr.f32.mxu0 0.0
        %v3606 = vand.u32 %v1633, 4294901760
        %3607 = vmatmul.mubr.f32.gmra.mxu0 %v3606
        %v3608 = vpop.f32.mrf.mxu0
        %v3609 = vadd.f32 %v3318, %v3608
        %v3610 = vpop.f32.mrf.mxu0
        %v3611 = vadd.f32 %v3320, %v3610
        %3612 = vmatprep.mubr.f32.mxu0 0.0
        %v3613 = vand.u32 %v1636, 4294901760
        %3614 = vmatmul.mubr.f32.gmra.mxu0 %v3613
        %v3615 = vpop.f32.mrf.mxu0
        %v3616 = vadd.f32 %v3325, %v3615
        %v3617 = vpop.f32.mrf.mxu0
        %v3618 = vadd.f32 %v3327, %v3617
        %3619 = vmatprep.mubr.f32.mxu0 0.0
        %v3620 = vand.u32 %v1639, 4294901760
        %3621 = vmatmul.mubr.f32.gmra.mxu0 %v3620
        %v3622 = vpop.f32.mrf.mxu0
        %v3623 = vadd.f32 %v3332, %v3622
        %v3624 = vpop.f32.mrf.mxu0
        %v3625 = vadd.f32 %v3334, %v3624
        %3626 = vmatprep.mubr.f32.mxu0 0.0
        %v3627 = vand.u32 %v1642, 4294901760
        %3628 = vmatmul.mubr.f32.gmra.mxu0 %v3627
        %v3629 = vpop.f32.mrf.mxu0
        %v3630 = vadd.f32 %v3339, %v3629
        %v3631 = vpop.f32.mrf.mxu0
        %v3632 = vadd.f32 %v3341, %v3631
        %3633 = vdwg.mxu0
        %v3634 = vmax.f32 %v3413, %v3415
        %3635 = vmax.xlane.f32.xlu0 %v3634
        %v3636 = vpop.xlane.xlu0 %3635
        %v3637 = vmax.f32 %v3420, %v3422
        %3638 = vmax.xlane.f32.xlu0 %v3637
        %v3639 = vpop.xlane.xlu0 %3638
        %v3640 = vmax.f32 %v3427, %v3429
        %3641 = vmax.xlane.f32.xlu0 %v3640
        %v3642 = vpop.xlane.xlu0 %3641
        %v3643 = vmax.f32 %v3434, %v3436
        %3644 = vmax.xlane.f32.xlu0 %v3643
        %v3645 = vpop.xlane.xlu0 %3644
        %v3646 = vmax.f32 %v3441, %v3443
        %3647 = vmax.xlane.f32.xlu0 %v3646
        %v3648 = vpop.xlane.xlu0 %3647
        %v3649 = vmax.f32 %v3448, %v3450
        %3650 = vmax.xlane.f32.xlu0 %v3649
        %v3651 = vpop.xlane.xlu0 %3650
        %v3652 = vmax.f32 %v3455, %v3457
        %3653 = vmax.xlane.f32.xlu0 %v3652
        %v3654 = vpop.xlane.xlu0 %3653
        %v3655 = vmax.f32 %v3462, %v3464
        %3656 = vmax.xlane.f32.xlu0 %v3655
        %v3657 = vpop.xlane.xlu0 %3656
        %v3658 = vmax.f32 %v3469, %v3471
        %3659 = vmax.xlane.f32.xlu0 %v3658
        %v3660 = vpop.xlane.xlu0 %3659
        %v3661 = vmax.f32 %v3476, %v3478
        %3662 = vmax.xlane.f32.xlu0 %v3661
        %v3663 = vpop.xlane.xlu0 %3662
        %v3664 = vmax.f32 %v3483, %v3485
        %3665 = vmax.xlane.f32.xlu0 %v3664
        %v3666 = vpop.xlane.xlu0 %3665
        %v3667 = vmax.f32 %v3490, %v3492
        %3668 = vmax.xlane.f32.xlu0 %v3667
        %v3669 = vpop.xlane.xlu0 %3668
        %v3670 = vmax.f32 %v3497, %v3499
        %3671 = vmax.xlane.f32.xlu0 %v3670
        %v3672 = vpop.xlane.xlu0 %3671
        %v3673 = vmax.f32 %v3504, %v3506
        %3674 = vmax.xlane.f32.xlu0 %v3673
        %v3675 = vpop.xlane.xlu0 %3674
        %v3676 = vmax.f32 %v3511, %v3513
        %3677 = vmax.xlane.f32.xlu0 %v3676
        %v3678 = vpop.xlane.xlu0 %3677
        %v3679 = vmax.f32 %v3518, %v3520
        %3680 = vmax.xlane.f32.xlu0 %v3679
        %v3681 = vpop.xlane.xlu0 %3680
        %v3682 = vmax.f32 %v3525, %v3527
        %3683 = vmax.xlane.f32.xlu0 %v3682
        %v3684 = vpop.xlane.xlu0 %3683
        %v3685 = vmax.f32 %v3532, %v3534
        %3686 = vmax.xlane.f32.xlu0 %v3685
        %v3687 = vpop.xlane.xlu0 %3686
        %v3688 = vmax.f32 %v3539, %v3541
        %3689 = vmax.xlane.f32.xlu0 %v3688
        %v3690 = vpop.xlane.xlu0 %3689
        %v3691 = vmax.f32 %v3546, %v3548
        %3692 = vmax.xlane.f32.xlu0 %v3691
        %v3693 = vpop.xlane.xlu0 %3692
        %v3694 = vmax.f32 %v3553, %v3555
        %3695 = vmax.xlane.f32.xlu0 %v3694
        %v3696 = vpop.xlane.xlu0 %3695
        %v3697 = vmax.f32 %v3560, %v3562
        %3698 = vmax.xlane.f32.xlu0 %v3697
        %v3699 = vpop.xlane.xlu0 %3698
        %v3700 = vmax.f32 %v3567, %v3569
        %3701 = vmax.xlane.f32.xlu0 %v3700
        %v3702 = vpop.xlane.xlu0 %3701
        %v3703 = vmax.f32 %v3574, %v3576
        %3704 = vmax.xlane.f32.xlu0 %v3703
        %v3705 = vpop.xlane.xlu0 %3704
        %v3706 = vmax.f32 %v3581, %v3583
        %3707 = vmax.xlane.f32.xlu0 %v3706
        %v3708 = vpop.xlane.xlu0 %3707
        %v3709 = vmax.f32 %v3588, %v3590
        %3710 = vmax.xlane.f32.xlu0 %v3709
        %v3711 = vpop.xlane.xlu0 %3710
        %v3712 = vmax.f32 %v3595, %v3597
        %3713 = vmax.xlane.f32.xlu0 %v3712
        %v3714 = vpop.xlane.xlu0 %3713
        %v3715 = vmax.f32 %v3602, %v3604
        %3716 = vmax.xlane.f32.xlu0 %v3715
        %v3717 = vpop.xlane.xlu0 %3716
        %v3718 = vmax.f32 %v3609, %v3611
        %3719 = vmax.xlane.f32.xlu0 %v3718
        %v3720 = vpop.xlane.xlu0 %3719
        %v3721 = vmax.f32 %v3616, %v3618
        %3722 = vmax.xlane.f32.xlu0 %v3721
        %v3723 = vpop.xlane.xlu0 %3722
        %v3724 = vmax.f32 %v3623, %v3625
        %3725 = vmax.xlane.f32.xlu0 %v3724
        %v3726 = vpop.xlane.xlu0 %3725
        %v3727 = vmax.f32 %v3630, %v3632
        %3728 = vmax.xlane.f32.xlu0 %v3727
        %v3729 = vpop.xlane.xlu0 %3728
        %v3730 = vsub.f32 %v3413, %v3636
        %v3731 = vsub.f32 %v3415, %v3636
        %v3732 = vsub.f32 %v3420, %v3639
        %v3733 = vsub.f32 %v3422, %v3639
        %v3734 = vsub.f32 %v3427, %v3642
        %v3735 = vsub.f32 %v3429, %v3642
        %v3736 = vsub.f32 %v3434, %v3645
        %v3737 = vsub.f32 %v3436, %v3645
        %v3738 = vsub.f32 %v3441, %v3648
        %v3739 = vsub.f32 %v3443, %v3648
        %v3740 = vsub.f32 %v3448, %v3651
        %v3741 = vsub.f32 %v3450, %v3651
        %v3742 = vsub.f32 %v3455, %v3654
        %v3743 = vsub.f32 %v3457, %v3654
        %v3744 = vsub.f32 %v3462, %v3657
        %v3745 = vsub.f32 %v3464, %v3657
        %v3746 = vsub.f32 %v3469, %v3660
        %v3747 = vsub.f32 %v3471, %v3660
        %v3748 = vsub.f32 %v3476, %v3663
        %v3749 = vsub.f32 %v3478, %v3663
        %v3750 = vsub.f32 %v3483, %v3666
        %v3751 = vsub.f32 %v3485, %v3666
        %v3752 = vsub.f32 %v3490, %v3669
        %v3753 = vsub.f32 %v3492, %v3669
        %v3754 = vsub.f32 %v3497, %v3672
        %v3755 = vsub.f32 %v3499, %v3672
        %v3756 = vsub.f32 %v3504, %v3675
        %v3757 = vsub.f32 %v3506, %v3675
        %v3758 = vsub.f32 %v3511, %v3678
        %v3759 = vsub.f32 %v3513, %v3678
        %v3760 = vsub.f32 %v3518, %v3681
        %v3761 = vsub.f32 %v3520, %v3681
        %v3762 = vsub.f32 %v3525, %v3684
        %v3763 = vsub.f32 %v3527, %v3684
        %v3764 = vsub.f32 %v3532, %v3687
        %v3765 = vsub.f32 %v3534, %v3687
        %v3766 = vsub.f32 %v3539, %v3690
        %v3767 = vsub.f32 %v3541, %v3690
        %v3768 = vsub.f32 %v3546, %v3693
        %v3769 = vsub.f32 %v3548, %v3693
        %v3770 = vsub.f32 %v3553, %v3696
        %v3771 = vsub.f32 %v3555, %v3696
        %v3772 = vsub.f32 %v3560, %v3699
        %v3773 = vsub.f32 %v3562, %v3699
        %v3774 = vsub.f32 %v3567, %v3702
        %v3775 = vsub.f32 %v3569, %v3702
        %v3776 = vsub.f32 %v3574, %v3705
        %v3777 = vsub.f32 %v3576, %v3705
        %v3778 = vsub.f32 %v3581, %v3708
        %v3779 = vsub.f32 %v3583, %v3708
        %v3780 = vsub.f32 %v3588, %v3711
        %v3781 = vsub.f32 %v3590, %v3711
        %v3782 = vsub.f32 %v3595, %v3714
        %v3783 = vsub.f32 %v3597, %v3714
        %v3784 = vsub.f32 %v3602, %v3717
        %v3785 = vsub.f32 %v3604, %v3717
        %v3786 = vsub.f32 %v3609, %v3720
        %v3787 = vsub.f32 %v3611, %v3720
        %v3788 = vsub.f32 %v3616, %v3723
        %v3789 = vsub.f32 %v3618, %v3723
        %v3790 = vsub.f32 %v3623, %v3726
        %v3791 = vsub.f32 %v3625, %v3726
        %v3792 = vsub.f32 %v3630, %v3729
        %v3793 = vsub.f32 %v3632, %v3729
        %v3794 = vmul.f32 %v3730, 1.442695
        %v3795 = vpow.pop %v3794
        %v3796 = vmul.f32 %v3731, 1.442695
        %v3797 = vpow.pop %v3796
        %v3798 = vmul.f32 %v3732, 1.442695
        %v3799 = vpow.pop %v3798
        %v3800 = vmul.f32 %v3733, 1.442695
        %v3801 = vpow.pop %v3800
        %v3802 = vmul.f32 %v3734, 1.442695
        %v3803 = vpow.pop %v3802
        %v3804 = vmul.f32 %v3735, 1.442695
        %v3805 = vpow.pop %v3804
        %v3806 = vmul.f32 %v3736, 1.442695
        %v3807 = vpow.pop %v3806
        %v3808 = vmul.f32 %v3737, 1.442695
        %v3809 = vpow.pop %v3808
        %v3810 = vmul.f32 %v3738, 1.442695
        %v3811 = vpow.pop %v3810
        %v3812 = vmul.f32 %v3739, 1.442695
        %v3813 = vpow.pop %v3812
        %v3814 = vmul.f32 %v3740, 1.442695
        %v3815 = vpow.pop %v3814
        %v3816 = vmul.f32 %v3741, 1.442695
        %v3817 = vpow.pop %v3816
        %v3818 = vmul.f32 %v3742, 1.442695
        %v3819 = vpow.pop %v3818
        %v3820 = vmul.f32 %v3743, 1.442695
        %v3821 = vpow.pop %v3820
        %v3822 = vmul.f32 %v3744, 1.442695
        %v3823 = vpow.pop %v3822
        %v3824 = vmul.f32 %v3745, 1.442695
        %v3825 = vpow.pop %v3824
        %v3826 = vmul.f32 %v3746, 1.442695
        %v3827 = vpow.pop %v3826
        %v3828 = vmul.f32 %v3747, 1.442695
        %v3829 = vpow.pop %v3828
        %v3830 = vmul.f32 %v3748, 1.442695
        %v3831 = vpow.pop %v3830
        %v3832 = vmul.f32 %v3749, 1.442695
        %v3833 = vpow.pop %v3832
        %v3834 = vmul.f32 %v3750, 1.442695
        %v3835 = vpow.pop %v3834
        %v3836 = vmul.f32 %v3751, 1.442695
        %v3837 = vpow.pop %v3836
        %v3838 = vmul.f32 %v3752, 1.442695
        %v3839 = vpow.pop %v3838
        %v3840 = vmul.f32 %v3753, 1.442695
        %v3841 = vpow.pop %v3840
        %v3842 = vmul.f32 %v3754, 1.442695
        %v3843 = vpow.pop %v3842
        %v3844 = vmul.f32 %v3755, 1.442695
        %v3845 = vpow.pop %v3844
        %v3846 = vmul.f32 %v3756, 1.442695
        %v3847 = vpow.pop %v3846
        %v3848 = vmul.f32 %v3757, 1.442695
        %v3849 = vpow.pop %v3848
        %v3850 = vmul.f32 %v3758, 1.442695
        %v3851 = vpow.pop %v3850
        %v3852 = vmul.f32 %v3759, 1.442695
        %v3853 = vpow.pop %v3852
        %v3854 = vmul.f32 %v3760, 1.442695
        %v3855 = vpow.pop %v3854
        %v3856 = vmul.f32 %v3761, 1.442695
        %v3857 = vpow.pop %v3856
        %v3858 = vmul.f32 %v3762, 1.442695
        %v3859 = vpow.pop %v3858
        %v3860 = vmul.f32 %v3763, 1.442695
        %v3861 = vpow.pop %v3860
        %v3862 = vmul.f32 %v3764, 1.442695
        %v3863 = vpow.pop %v3862
        %v3864 = vmul.f32 %v3765, 1.442695
        %v3865 = vpow.pop %v3864
        %v3866 = vmul.f32 %v3766, 1.442695
        %v3867 = vpow.pop %v3866
        %v3868 = vmul.f32 %v3767, 1.442695
        %v3869 = vpow.pop %v3868
        %v3870 = vmul.f32 %v3768, 1.442695
        %v3871 = vpow.pop %v3870
        %v3872 = vmul.f32 %v3769, 1.442695
        %v3873 = vpow.pop %v3872
        %v3874 = vmul.f32 %v3770, 1.442695
        %v3875 = vpow.pop %v3874
        %v3876 = vmul.f32 %v3771, 1.442695
        %v3877 = vpow.pop %v3876
        %v3878 = vmul.f32 %v3772, 1.442695
        %v3879 = vpow.pop %v3878
        %v3880 = vmul.f32 %v3773, 1.442695
        %v3881 = vpow.pop %v3880
        %v3882 = vmul.f32 %v3774, 1.442695
        %v3883 = vpow.pop %v3882
        %v3884 = vmul.f32 %v3775, 1.442695
        %v3885 = vpow.pop %v3884
        %v3886 = vmul.f32 %v3776, 1.442695
        %v3887 = vpow.pop %v3886
        %v3888 = vmul.f32 %v3777, 1.442695
        %v3889 = vpow.pop %v3888
        %v3890 = vmul.f32 %v3778, 1.442695
        %v3891 = vpow.pop %v3890
        %v3892 = vmul.f32 %v3779, 1.442695
        %v3893 = vpow.pop %v3892
        %v3894 = vmul.f32 %v3780, 1.442695
        %v3895 = vpow.pop %v3894
        %v3896 = vmul.f32 %v3781, 1.442695
        %v3897 = vpow.pop %v3896
        %v3898 = vmul.f32 %v3782, 1.442695
        %v3899 = vpow.pop %v3898
        %v3900 = vmul.f32 %v3783, 1.442695
        %v3901 = vpow.pop %v3900
        %v3902 = vmul.f32 %v3784, 1.442695
        %v3903 = vpow.pop %v3902
        %v3904 = vmul.f32 %v3785, 1.442695
        %v3905 = vpow.pop %v3904
        %v3906 = vmul.f32 %v3786, 1.442695
        %v3907 = vpow.pop %v3906
        %v3908 = vmul.f32 %v3787, 1.442695
        %v3909 = vpow.pop %v3908
        %v3910 = vmul.f32 %v3788, 1.442695
        %v3911 = vpow.pop %v3910
        %v3912 = vmul.f32 %v3789, 1.442695
        %v3913 = vpow.pop %v3912
        %v3914 = vmul.f32 %v3790, 1.442695
        %v3915 = vpow.pop %v3914
        %v3916 = vmul.f32 %v3791, 1.442695
        %v3917 = vpow.pop %v3916
        %v3918 = vmul.f32 %v3792, 1.442695
        %v3919 = vpow.pop %v3918
        %v3920 = vmul.f32 %v3793, 1.442695
        %v3921 = vpow.pop %v3920
        %v3922 = vadd.f32 %v3795, %v3797
        %3923 = vadd.xlane.f32.xlu0 %v3922
        %v3924 = vpop.xlane.xlu0 %3923
        %v3925 = vadd.f32 %v3799, %v3801
        %3926 = vadd.xlane.f32.xlu0 %v3925
        %v3927 = vpop.xlane.xlu0 %3926
        %v3928 = vadd.f32 %v3803, %v3805
        %3929 = vadd.xlane.f32.xlu0 %v3928
        %v3930 = vpop.xlane.xlu0 %3929
        %v3931 = vadd.f32 %v3807, %v3809
        %3932 = vadd.xlane.f32.xlu0 %v3931
        %v3933 = vpop.xlane.xlu0 %3932
        %v3934 = vadd.f32 %v3811, %v3813
        %3935 = vadd.xlane.f32.xlu0 %v3934
        %v3936 = vpop.xlane.xlu0 %3935
        %v3937 = vadd.f32 %v3815, %v3817
        %3938 = vadd.xlane.f32.xlu0 %v3937
        %v3939 = vpop.xlane.xlu0 %3938
        %v3940 = vadd.f32 %v3819, %v3821
        %3941 = vadd.xlane.f32.xlu0 %v3940
        %v3942 = vpop.xlane.xlu0 %3941
        %v3943 = vadd.f32 %v3823, %v3825
        %3944 = vadd.xlane.f32.xlu0 %v3943
        %v3945 = vpop.xlane.xlu0 %3944
        %v3946 = vadd.f32 %v3827, %v3829
        %3947 = vadd.xlane.f32.xlu0 %v3946
        %v3948 = vpop.xlane.xlu0 %3947
        %v3949 = vadd.f32 %v3831, %v3833
        %3950 = vadd.xlane.f32.xlu0 %v3949
        %v3951 = vpop.xlane.xlu0 %3950
        %v3952 = vadd.f32 %v3835, %v3837
        %3953 = vadd.xlane.f32.xlu0 %v3952
        %v3954 = vpop.xlane.xlu0 %3953
        %v3955 = vadd.f32 %v3839, %v3841
        %3956 = vadd.xlane.f32.xlu0 %v3955
        %v3957 = vpop.xlane.xlu0 %3956
        %v3958 = vadd.f32 %v3843, %v3845
        %3959 = vadd.xlane.f32.xlu0 %v3958
        %v3960 = vpop.xlane.xlu0 %3959
        %v3961 = vadd.f32 %v3847, %v3849
        %3962 = vadd.xlane.f32.xlu0 %v3961
        %v3963 = vpop.xlane.xlu0 %3962
        %v3964 = vadd.f32 %v3851, %v3853
        %3965 = vadd.xlane.f32.xlu0 %v3964
        %v3966 = vpop.xlane.xlu0 %3965
        %v3967 = vadd.f32 %v3855, %v3857
        %3968 = vadd.xlane.f32.xlu0 %v3967
        %v3969 = vpop.xlane.xlu0 %3968
        %v3970 = vadd.f32 %v3859, %v3861
        %3971 = vadd.xlane.f32.xlu0 %v3970
        %v3972 = vpop.xlane.xlu0 %3971
        %v3973 = vadd.f32 %v3863, %v3865
        %3974 = vadd.xlane.f32.xlu0 %v3973
        %v3975 = vpop.xlane.xlu0 %3974
        %v3976 = vadd.f32 %v3867, %v3869
        %3977 = vadd.xlane.f32.xlu0 %v3976
        %v3978 = vpop.xlane.xlu0 %3977
        %v3979 = vadd.f32 %v3871, %v3873
        %3980 = vadd.xlane.f32.xlu0 %v3979
        %v3981 = vpop.xlane.xlu0 %3980
        %v3982 = vadd.f32 %v3875, %v3877
        %3983 = vadd.xlane.f32.xlu0 %v3982
        %v3984 = vpop.xlane.xlu0 %3983
        %v3985 = vadd.f32 %v3879, %v3881
        %3986 = vadd.xlane.f32.xlu0 %v3985
        %v3987 = vpop.xlane.xlu0 %3986
        %v3988 = vadd.f32 %v3883, %v3885
        %3989 = vadd.xlane.f32.xlu0 %v3988
        %v3990 = vpop.xlane.xlu0 %3989
        %v3991 = vadd.f32 %v3887, %v3889
        %3992 = vadd.xlane.f32.xlu0 %v3991
        %v3993 = vpop.xlane.xlu0 %3992
        %v3994 = vadd.f32 %v3891, %v3893
        %3995 = vadd.xlane.f32.xlu0 %v3994
        %v3996 = vpop.xlane.xlu0 %3995
        %v3997 = vadd.f32 %v3895, %v3897
        %3998 = vadd.xlane.f32.xlu0 %v3997
        %v3999 = vpop.xlane.xlu0 %3998
        %v4000 = vadd.f32 %v3899, %v3901
        %4001 = vadd.xlane.f32.xlu0 %v4000
        %v4002 = vpop.xlane.xlu0 %4001
        %v4003 = vadd.f32 %v3903, %v3905
        %4004 = vadd.xlane.f32.xlu0 %v4003
        %v4005 = vpop.xlane.xlu0 %4004
        %v4006 = vadd.f32 %v3907, %v3909
        %4007 = vadd.xlane.f32.xlu0 %v4006
        %v4008 = vpop.xlane.xlu0 %4007
        %v4009 = vadd.f32 %v3911, %v3913
        %4010 = vadd.xlane.f32.xlu0 %v4009
        %v4011 = vpop.xlane.xlu0 %4010
        %v4012 = vadd.f32 %v3915, %v3917
        %4013 = vadd.xlane.f32.xlu0 %v4012
        %v4014 = vpop.xlane.xlu0 %4013
        %v4015 = vadd.f32 %v3919, %v3921
        %4016 = vadd.xlane.f32.xlu0 %v4015
        %v4017 = vpop.xlane.xlu0 %4016
        %v4018 = vrcp.pop %v3924
        %v4019 = vrcp.pop %v3927
        %v4020 = vrcp.pop %v3930
        %v4021 = vrcp.pop %v3933
        %v4022 = vrcp.pop %v3936
        %v4023 = vrcp.pop %v3939
        %v4024 = vrcp.pop %v3942
        %v4025 = vrcp.pop %v3945
        %v4026 = vrcp.pop %v3948
        %v4027 = vrcp.pop %v3951
        %v4028 = vrcp.pop %v3954
        %v4029 = vrcp.pop %v3957
        %v4030 = vrcp.pop %v3960
        %v4031 = vrcp.pop %v3963
        %v4032 = vrcp.pop %v3966
        %v4033 = vrcp.pop %v3969
        %v4034 = vrcp.pop %v3972
        %v4035 = vrcp.pop %v3975
        %v4036 = vrcp.pop %v3978
        %v4037 = vrcp.pop %v3981
        %v4038 = vrcp.pop %v3984
        %v4039 = vrcp.pop %v3987
        %v4040 = vrcp.pop %v3990
        %v4041 = vrcp.pop %v3993
        %v4042 = vrcp.pop %v3996
        %v4043 = vrcp.pop %v3999
        %v4044 = vrcp.pop %v4002
        %v4045 = vrcp.pop %v4005
        %v4046 = vrcp.pop %v4008
        %v4047 = vrcp.pop %v4011
        %v4048 = vrcp.pop %v4014
        %v4049 = vrcp.pop %v4017
        %v4050 = vmul.f32 %v3795, %v4018
        %v4051 = vmul.f32 %v3797, %v4018
        %v4052 = vmul.f32 %v3799, %v4019
        %v4053 = vmul.f32 %v3801, %v4019
        %v4054 = vmul.f32 %v3803, %v4020
        %v4055 = vmul.f32 %v3805, %v4020
        %v4056 = vmul.f32 %v3807, %v4021
        %v4057 = vmul.f32 %v3809, %v4021
        %v4058 = vmul.f32 %v3811, %v4022
        %v4059 = vmul.f32 %v3813, %v4022
        %v4060 = vmul.f32 %v3815, %v4023
        %v4061 = vmul.f32 %v3817, %v4023
        %v4062 = vmul.f32 %v3819, %v4024
        %v4063 = vmul.f32 %v3821, %v4024
        %v4064 = vmul.f32 %v3823, %v4025
        %v4065 = vmul.f32 %v3825, %v4025
        %v4066 = vmul.f32 %v3827, %v4026
        %v4067 = vmul.f32 %v3829, %v4026
        %v4068 = vmul.f32 %v3831, %v4027
        %v4069 = vmul.f32 %v3833, %v4027
        %v4070 = vmul.f32 %v3835, %v4028
        %v4071 = vmul.f32 %v3837, %v4028
        %v4072 = vmul.f32 %v3839, %v4029
        %v4073 = vmul.f32 %v3841, %v4029
        %v4074 = vmul.f32 %v3843, %v4030
        %v4075 = vmul.f32 %v3845, %v4030
        %v4076 = vmul.f32 %v3847, %v4031
        %v4077 = vmul.f32 %v3849, %v4031
        %v4078 = vmul.f32 %v3851, %v4032
        %v4079 = vmul.f32 %v3853, %v4032
        %v4080 = vmul.f32 %v3855, %v4033
        %v4081 = vmul.f32 %v3857, %v4033
        %v4082 = vmul.f32 %v3859, %v4034
        %v4083 = vmul.f32 %v3861, %v4034
        %v4084 = vmul.f32 %v3863, %v4035
        %v4085 = vmul.f32 %v3865, %v4035
        %v4086 = vmul.f32 %v3867, %v4036
        %v4087 = vmul.f32 %v3869, %v4036
        %v4088 = vmul.f32 %v3871, %v4037
        %v4089 = vmul.f32 %v3873, %v4037
        %v4090 = vmul.f32 %v3875, %v4038
        %v4091 = vmul.f32 %v3877, %v4038
        %v4092 = vmul.f32 %v3879, %v4039
        %v4093 = vmul.f32 %v3881, %v4039
        %v4094 = vmul.f32 %v3883, %v4040
        %v4095 = vmul.f32 %v3885, %v4040
        %v4096 = vmul.f32 %v3887, %v4041
        %v4097 = vmul.f32 %v3889, %v4041
        %v4098 = vmul.f32 %v3891, %v4042
        %v4099 = vmul.f32 %v3893, %v4042
        %v4100 = vmul.f32 %v3895, %v4043
        %v4101 = vmul.f32 %v3897, %v4043
        %v4102 = vmul.f32 %v3899, %v4044
        %v4103 = vmul.f32 %v3901, %v4044
        %v4104 = vmul.f32 %v3903, %v4045
        %v4105 = vmul.f32 %v3905, %v4045
        %v4106 = vmul.f32 %v3907, %v4046
        %v4107 = vmul.f32 %v3909, %v4046
        %v4108 = vmul.f32 %v3911, %v4047
        %v4109 = vmul.f32 %v3913, %v4047
        %v4110 = vmul.f32 %v3915, %v4048
        %v4111 = vmul.f32 %v3917, %v4048
        %v4112 = vmul.f32 %v3919, %v4049
        %v4113 = vmul.f32 %v3921, %v4049
        %v4114 = vld [vmem:[%s5] sm:$0xf]
        %v4115 = vld [vmem:[%s6] sm:$0xf]
        %4117 = vset.pattern.permute.xlu0 0
        %4118 = vperm.xlu0 %4117, %v4115
        %v4119 = vpop.permute.xlu0 %4118
        %v4122 = vsel %vm531, %v4114, 0
        %v4124 = vsel %vm447, %v443, 0
        %v4126 = vsel %vm447, %v488, 0
        %4128 = vmatprep.subr.mxu0 0.0
        %4129 = vmatpush1.msra.mxu0 0.0
        %4130 = vmatprep.subr.mxu0 0.0
        %4131 = vmatpush1.msra.mxu0 0.0
        %4132 = vmatprep.subr.mxu0 0.0
        %4133 = vmatpush1.msra.mxu0 0.0
        %4134 = vmatprep.subr.mxu0 0.0
        %4135 = vmatpush1.msra.mxu0 0.0
        %4136 = vmatprep.subr.mxu0 0.0
        %4137 = vmatpush1.msra.mxu0 0.0
        %4138 = vmatprep.subr.mxu0 0.0
        %4139 = vmatpush1.msra.mxu0 0.0
        %4140 = vmatprep.subr.mxu0 0.0
        %4141 = vmatpush1.msra.mxu0 0.0
        %4142 = vmatprep.subr.mxu0 0.0
        %4143 = vmatpush1.msra.mxu0 0.0
        %4144 = vmatprep.subr.mxu0 0.0
        %4145 = vmatpush1.msra.mxu0 0.0
        %4146 = vmatprep.subr.mxu0 0.0
        %4147 = vmatpush1.msra.mxu0 0.0
        %4148 = vmatprep.subr.mxu0 0.0
        %4149 = vmatpush1.msra.mxu0 0.0
        %4150 = vmatprep.subr.mxu0 0.0
        %4151 = vmatpush1.msra.mxu0 0.0
        %4152 = vmatprep.subr.mxu0 0.0
        %4153 = vmatpush1.msra.mxu0 0.0
        %4154 = vmatprep.subr.mxu0 0.0
        %4155 = vmatpush1.msra.mxu0 0.0
        %4156 = vmatprep.subr.mxu0 0.0
        %4157 = vmatpush1.msra.mxu0 0.0
        %v4158 = vand.u32 %v4126, 4294901760
        %4159 = vmatprep.subr.mxu0 %v4158
        %v4160 = vand.u32 %v4124, 4294901760
        %4161 = vmatpush1.msra.mxu0 %v4160
        %4162 = vmatprep.subr.mxu0 0.0
        %4163 = vmatpush2.msra.mxu0 0.0
        %4164 = vmatprep.subr.mxu0 0.0
        %4165 = vmatpush2.msra.mxu0 0.0
        %4166 = vmatprep.subr.mxu0 0.0
        %4167 = vmatpush2.msra.mxu0 0.0
        %4168 = vmatprep.subr.mxu0 0.0
        %4169 = vmatpush2.msra.mxu0 0.0
        %4170 = vmatprep.subr.mxu0 0.0
        %4171 = vmatpush2.msra.mxu0 0.0
        %4172 = vmatprep.subr.mxu0 0.0
        %4173 = vmatpush2.msra.mxu0 0.0
        %4174 = vmatprep.subr.mxu0 0.0
        %4175 = vmatpush2.msra.mxu0 0.0
        %4176 = vmatprep.subr.mxu0 0.0
        %4177 = vmatpush2.msra.mxu0 0.0
        %4178 = vmatprep.subr.mxu0 0.0
        %4179 = vmatpush2.msra.mxu0 0.0
        %4180 = vmatprep.subr.mxu0 0.0
        %4181 = vmatpush2.msra.mxu0 0.0
        %4182 = vmatprep.subr.mxu0 0.0
        %4183 = vmatpush2.msra.mxu0 0.0
        %4184 = vmatprep.subr.mxu0 0.0
        %4185 = vmatpush2.msra.mxu0 0.0
        %4186 = vmatprep.subr.mxu0 0.0
        %4187 = vmatpush2.msra.mxu0 0.0
        %4188 = vmatprep.subr.mxu0 0.0
        %4189 = vmatpush2.msra.mxu0 0.0
        %4190 = vmatprep.subr.mxu0 0.0
        %4191 = vmatpush2.msra.mxu0 0.0
        %4192 = vmatprep.subr.mxu0 0.0
        %4193 = vmatpush2.msra.mxu0 0.0
        %4194 = vmatprep.mubr.f32.mxu0 0.0
        %v4195 = vand.u32 %v4122, 4294901760
        %v4196 = vsub.f32 %v4122, %v4195
        %v4197 = vand.u32 %v4196, 4294901760
        %v4198 = vsub.f32 %v4196, %v4197
        %v4199 = vand.u32 %v4198, 4294901760
        %4200 = vmatmul.mubr.f32.gmra.mxu0 %v4199
        %v4201 = vpop.f32.mrf.mxu0
        %v4202 = vadd.f32 %v4119, %v4201
        %v4203 = vpop.f32.mrf.mxu0
        %v4204 = vadd.f32 %v4119, %v4203
        %4205 = vdwg.mxu0
        %4206 = vmatprep.subr.mxu0 0.0
        %4207 = vmatpush1.msra.mxu0 0.0
        %4208 = vmatprep.subr.mxu0 0.0
        %4209 = vmatpush1.msra.mxu0 0.0
        %4210 = vmatprep.subr.mxu0 0.0
        %4211 = vmatpush1.msra.mxu0 0.0
        %4212 = vmatprep.subr.mxu0 0.0
        %4213 = vmatpush1.msra.mxu0 0.0
        %4214 = vmatprep.subr.mxu0 0.0
        %4215 = vmatpush1.msra.mxu0 0.0
        %4216 = vmatprep.subr.mxu0 0.0
        %4217 = vmatpush1.msra.mxu0 0.0
        %4218 = vmatprep.subr.mxu0 0.0
        %4219 = vmatpush1.msra.mxu0 0.0
        %4220 = vmatprep.subr.mxu0 0.0
        %4221 = vmatpush1.msra.mxu0 0.0
        %4222 = vmatprep.subr.mxu0 0.0
        %4223 = vmatpush1.msra.mxu0 0.0
        %4224 = vmatprep.subr.mxu0 0.0
        %4225 = vmatpush1.msra.mxu0 0.0
        %4226 = vmatprep.subr.mxu0 0.0
        %4227 = vmatpush1.msra.mxu0 0.0
        %4228 = vmatprep.subr.mxu0 0.0
        %4229 = vmatpush1.msra.mxu0 0.0
        %4230 = vmatprep.subr.mxu0 0.0
        %4231 = vmatpush1.msra.mxu0 0.0
        %4232 = vmatprep.subr.mxu0 0.0
        %4233 = vmatpush1.msra.mxu0 0.0
        %4234 = vmatprep.subr.mxu0 0.0
        %4235 = vmatpush1.msra.mxu0 0.0
        %v4236 = vand.u32 %v4126, 4294901760
        %v4237 = vsub.f32 %v4126, %v4236
        %v4238 = vand.u32 %v4237, 4294901760
        %v4239 = vsub.f32 %v4237, %v4238
        %v4240 = vand.u32 %v4239, 4294901760
        %4241 = vmatprep.subr.mxu0 %v4240
        %v4242 = vand.u32 %v4124, 4294901760
        %v4243 = vsub.f32 %v4124, %v4242
        %v4244 = vand.u32 %v4243, 4294901760
        %v4245 = vsub.f32 %v4243, %v4244
        %v4246 = vand.u32 %v4245, 4294901760
        %4247 = vmatpush1.msra.mxu0 %v4246
        %4248 = vmatprep.subr.mxu0 0.0
        %4249 = vmatpush2.msra.mxu0 0.0
        %4250 = vmatprep.subr.mxu0 0.0
        %4251 = vmatpush2.msra.mxu0 0.0
        %4252 = vmatprep.subr.mxu0 0.0
        %4253 = vmatpush2.msra.mxu0 0.0
        %4254 = vmatprep.subr.mxu0 0.0
        %4255 = vmatpush2.msra.mxu0 0.0
        %4256 = vmatprep.subr.mxu0 0.0
        %4257 = vmatpush2.msra.mxu0 0.0
        %4258 = vmatprep.subr.mxu0 0.0
        %4259 = vmatpush2.msra.mxu0 0.0
        %4260 = vmatprep.subr.mxu0 0.0
        %4261 = vmatpush2.msra.mxu0 0.0
        %4262 = vmatprep.subr.mxu0 0.0
        %4263 = vmatpush2.msra.mxu0 0.0
        %4264 = vmatprep.subr.mxu0 0.0
        %4265 = vmatpush2.msra.mxu0 0.0
        %4266 = vmatprep.subr.mxu0 0.0
        %4267 = vmatpush2.msra.mxu0 0.0
        %4268 = vmatprep.subr.mxu0 0.0
        %4269 = vmatpush2.msra.mxu0 0.0
        %4270 = vmatprep.subr.mxu0 0.0
        %4271 = vmatpush2.msra.mxu0 0.0
        %4272 = vmatprep.subr.mxu0 0.0
        %4273 = vmatpush2.msra.mxu0 0.0
        %4274 = vmatprep.subr.mxu0 0.0
        %4275 = vmatpush2.msra.mxu0 0.0
        %4276 = vmatprep.subr.mxu0 0.0
        %4277 = vmatpush2.msra.mxu0 0.0
        %4278 = vmatprep.subr.mxu0 0.0
        %4279 = vmatpush2.msra.mxu0 0.0
        %4280 = vmatprep.mubr.f32.mxu0 0.0
        %v4281 = vand.u32 %v4122, 4294901760
        %4282 = vmatmul.mubr.f32.gmra.mxu0 %v4281
        %v4283 = vpop.f32.mrf.mxu0
        %v4284 = vadd.f32 %v4202, %v4283
        %v4285 = vpop.f32.mrf.mxu0
        %v4286 = vadd.f32 %v4204, %v4285
        %4287 = vdwg.mxu0
        %4288 = vmatprep.subr.mxu0 0.0
        %4289 = vmatpush1.msra.mxu0 0.0
        %4290 = vmatprep.subr.mxu0 0.0
        %4291 = vmatpush1.msra.mxu0 0.0
        %4292 = vmatprep.subr.mxu0 0.0
        %4293 = vmatpush1.msra.mxu0 0.0
        %4294 = vmatprep.subr.mxu0 0.0
        %4295 = vmatpush1.msra.mxu0 0.0
        %4296 = vmatprep.subr.mxu0 0.0
        %4297 = vmatpush1.msra.mxu0 0.0
        %4298 = vmatprep.subr.mxu0 0.0
        %4299 = vmatpush1.msra.mxu0 0.0
        %4300 = vmatprep.subr.mxu0 0.0
        %4301 = vmatpush1.msra.mxu0 0.0
        %4302 = vmatprep.subr.mxu0 0.0
        %4303 = vmatpush1.msra.mxu0 0.0
        %4304 = vmatprep.subr.mxu0 0.0
        %4305 = vmatpush1.msra.mxu0 0.0
        %4306 = vmatprep.subr.mxu0 0.0
        %4307 = vmatpush1.msra.mxu0 0.0
        %4308 = vmatprep.subr.mxu0 0.0
        %4309 = vmatpush1.msra.mxu0 0.0
        %4310 = vmatprep.subr.mxu0 0.0
        %4311 = vmatpush1.msra.mxu0 0.0
        %4312 = vmatprep.subr.mxu0 0.0
        %4313 = vmatpush1.msra.mxu0 0.0
        %4314 = vmatprep.subr.mxu0 0.0
        %4315 = vmatpush1.msra.mxu0 0.0
        %4316 = vmatprep.subr.mxu0 0.0
        %4317 = vmatpush1.msra.mxu0 0.0
        %v4318 = vand.u32 %v4126, 4294901760
        %v4319 = vsub.f32 %v4126, %v4318
        %4320 = vmatprep.subr.mxu0 %v4319
        %v4321 = vand.u32 %v4124, 4294901760
        %v4322 = vsub.f32 %v4124, %v4321
        %4323 = vmatpush1.msra.mxu0 %v4322
        %4324 = vmatprep.subr.mxu0 0.0
        %4325 = vmatpush2.msra.mxu0 0.0
        %4326 = vmatprep.subr.mxu0 0.0
        %4327 = vmatpush2.msra.mxu0 0.0
        %4328 = vmatprep.subr.mxu0 0.0
        %4329 = vmatpush2.msra.mxu0 0.0
        %4330 = vmatprep.subr.mxu0 0.0
        %4331 = vmatpush2.msra.mxu0 0.0
        %4332 = vmatprep.subr.mxu0 0.0
        %4333 = vmatpush2.msra.mxu0 0.0
        %4334 = vmatprep.subr.mxu0 0.0
        %4335 = vmatpush2.msra.mxu0 0.0
        %4336 = vmatprep.subr.mxu0 0.0
        %4337 = vmatpush2.msra.mxu0 0.0
        %4338 = vmatprep.subr.mxu0 0.0
        %4339 = vmatpush2.msra.mxu0 0.0
        %4340 = vmatprep.subr.mxu0 0.0
        %4341 = vmatpush2.msra.mxu0 0.0
        %4342 = vmatprep.subr.mxu0 0.0
        %4343 = vmatpush2.msra.mxu0 0.0
        %4344 = vmatprep.subr.mxu0 0.0
        %4345 = vmatpush2.msra.mxu0 0.0
        %4346 = vmatprep.subr.mxu0 0.0
        %4347 = vmatpush2.msra.mxu0 0.0
        %4348 = vmatprep.subr.mxu0 0.0
        %4349 = vmatpush2.msra.mxu0 0.0
        %4350 = vmatprep.subr.mxu0 0.0
        %4351 = vmatpush2.msra.mxu0 0.0
        %4352 = vmatprep.subr.mxu0 0.0
        %4353 = vmatpush2.msra.mxu0 0.0
        %4354 = vmatprep.subr.mxu0 0.0
        %4355 = vmatpush2.msra.mxu0 0.0
        %4356 = vmatprep.mubr.f32.mxu0 0.0
        %v4357 = vand.u32 %v4122, 4294901760
        %v4358 = vsub.f32 %v4122, %v4357
        %4359 = vmatmul.mubr.f32.gmra.mxu0 %v4358
        %v4360 = vpop.f32.mrf.mxu0
        %v4361 = vadd.f32 %v4284, %v4360
        %v4362 = vpop.f32.mrf.mxu0
        %v4363 = vadd.f32 %v4286, %v4362
        %4364 = vdwg.mxu0
        %4365 = vmatprep.subr.mxu0 0.0
        %4366 = vmatpush1.msra.mxu0 0.0
        %4367 = vmatprep.subr.mxu0 0.0
        %4368 = vmatpush1.msra.mxu0 0.0
        %4369 = vmatprep.subr.mxu0 0.0
        %4370 = vmatpush1.msra.mxu0 0.0
        %4371 = vmatprep.subr.mxu0 0.0
        %4372 = vmatpush1.msra.mxu0 0.0
        %4373 = vmatprep.subr.mxu0 0.0
        %4374 = vmatpush1.msra.mxu0 0.0
        %4375 = vmatprep.subr.mxu0 0.0
        %4376 = vmatpush1.msra.mxu0 0.0
        %4377 = vmatprep.subr.mxu0 0.0
        %4378 = vmatpush1.msra.mxu0 0.0
        %4379 = vmatprep.subr.mxu0 0.0
        %4380 = vmatpush1.msra.mxu0 0.0
        %4381 = vmatprep.subr.mxu0 0.0
        %4382 = vmatpush1.msra.mxu0 0.0
        %4383 = vmatprep.subr.mxu0 0.0
        %4384 = vmatpush1.msra.mxu0 0.0
        %4385 = vmatprep.subr.mxu0 0.0
        %4386 = vmatpush1.msra.mxu0 0.0
        %4387 = vmatprep.subr.mxu0 0.0
        %4388 = vmatpush1.msra.mxu0 0.0
        %4389 = vmatprep.subr.mxu0 0.0
        %4390 = vmatpush1.msra.mxu0 0.0
        %4391 = vmatprep.subr.mxu0 0.0
        %4392 = vmatpush1.msra.mxu0 0.0
        %4393 = vmatprep.subr.mxu0 0.0
        %4394 = vmatpush1.msra.mxu0 0.0
        %v4395 = vand.u32 %v4126, 4294901760
        %4396 = vmatprep.subr.mxu0 %v4395
        %v4397 = vand.u32 %v4124, 4294901760
        %4398 = vmatpush1.msra.mxu0 %v4397
        %4399 = vmatprep.subr.mxu0 0.0
        %4400 = vmatpush2.msra.mxu0 0.0
        %4401 = vmatprep.subr.mxu0 0.0
        %4402 = vmatpush2.msra.mxu0 0.0
        %4403 = vmatprep.subr.mxu0 0.0
        %4404 = vmatpush2.msra.mxu0 0.0
        %4405 = vmatprep.subr.mxu0 0.0
        %4406 = vmatpush2.msra.mxu0 0.0
        %4407 = vmatprep.subr.mxu0 0.0
        %4408 = vmatpush2.msra.mxu0 0.0
        %4409 = vmatprep.subr.mxu0 0.0
        %4410 = vmatpush2.msra.mxu0 0.0
        %4411 = vmatprep.subr.mxu0 0.0
        %4412 = vmatpush2.msra.mxu0 0.0
        %4413 = vmatprep.subr.mxu0 0.0
        %4414 = vmatpush2.msra.mxu0 0.0
        %4415 = vmatprep.subr.mxu0 0.0
        %4416 = vmatpush2.msra.mxu0 0.0
        %4417 = vmatprep.subr.mxu0 0.0
        %4418 = vmatpush2.msra.mxu0 0.0
        %4419 = vmatprep.subr.mxu0 0.0
        %4420 = vmatpush2.msra.mxu0 0.0
        %4421 = vmatprep.subr.mxu0 0.0
        %4422 = vmatpush2.msra.mxu0 0.0
        %4423 = vmatprep.subr.mxu0 0.0
        %4424 = vmatpush2.msra.mxu0 0.0
        %4425 = vmatprep.subr.mxu0 0.0
        %4426 = vmatpush2.msra.mxu0 0.0
        %4427 = vmatprep.subr.mxu0 0.0
        %4428 = vmatpush2.msra.mxu0 0.0
        %4429 = vmatprep.subr.mxu0 0.0
        %4430 = vmatpush2.msra.mxu0 0.0
        %4431 = vmatprep.mubr.f32.mxu0 0.0
        %v4432 = vand.u32 %v4122, 4294901760
        %v4433 = vsub.f32 %v4122, %v4432
        %v4434 = vand.u32 %v4433, 4294901760
        %4435 = vmatmul.mubr.f32.gmra.mxu0 %v4434
        %v4436 = vpop.f32.mrf.mxu0
        %v4437 = vadd.f32 %v4361, %v4436
        %v4438 = vpop.f32.mrf.mxu0
        %v4439 = vadd.f32 %v4363, %v4438
        %4440 = vdwg.mxu0
        %4441 = vmatprep.subr.mxu0 0.0
        %4442 = vmatpush1.msra.mxu0 0.0
        %4443 = vmatprep.subr.mxu0 0.0
        %4444 = vmatpush1.msra.mxu0 0.0
        %4445 = vmatprep.subr.mxu0 0.0
        %4446 = vmatpush1.msra.mxu0 0.0
        %4447 = vmatprep.subr.mxu0 0.0
        %4448 = vmatpush1.msra.mxu0 0.0
        %4449 = vmatprep.subr.mxu0 0.0
        %4450 = vmatpush1.msra.mxu0 0.0
        %4451 = vmatprep.subr.mxu0 0.0
        %4452 = vmatpush1.msra.mxu0 0.0
        %4453 = vmatprep.subr.mxu0 0.0
        %4454 = vmatpush1.msra.mxu0 0.0
        %4455 = vmatprep.subr.mxu0 0.0
        %4456 = vmatpush1.msra.mxu0 0.0
        %4457 = vmatprep.subr.mxu0 0.0
        %4458 = vmatpush1.msra.mxu0 0.0
        %4459 = vmatprep.subr.mxu0 0.0
        %4460 = vmatpush1.msra.mxu0 0.0
        %4461 = vmatprep.subr.mxu0 0.0
        %4462 = vmatpush1.msra.mxu0 0.0
        %4463 = vmatprep.subr.mxu0 0.0
        %4464 = vmatpush1.msra.mxu0 0.0
        %4465 = vmatprep.subr.mxu0 0.0
        %4466 = vmatpush1.msra.mxu0 0.0
        %4467 = vmatprep.subr.mxu0 0.0
        %4468 = vmatpush1.msra.mxu0 0.0
        %4469 = vmatprep.subr.mxu0 0.0
        %4470 = vmatpush1.msra.mxu0 0.0
        %v4471 = vand.u32 %v4126, 4294901760
        %v4472 = vsub.f32 %v4126, %v4471
        %v4473 = vand.u32 %v4472, 4294901760
        %4474 = vmatprep.subr.mxu0 %v4473
        %v4475 = vand.u32 %v4124, 4294901760
        %v4476 = vsub.f32 %v4124, %v4475
        %v4477 = vand.u32 %v4476, 4294901760
        %4478 = vmatpush1.msra.mxu0 %v4477
        %4479 = vmatprep.subr.mxu0 0.0
        %4480 = vmatpush2.msra.mxu0 0.0
        %4481 = vmatprep.subr.mxu0 0.0
        %4482 = vmatpush2.msra.mxu0 0.0
        %4483 = vmatprep.subr.mxu0 0.0
        %4484 = vmatpush2.msra.mxu0 0.0
        %4485 = vmatprep.subr.mxu0 0.0
        %4486 = vmatpush2.msra.mxu0 0.0
        %4487 = vmatprep.subr.mxu0 0.0
        %4488 = vmatpush2.msra.mxu0 0.0
        %4489 = vmatprep.subr.mxu0 0.0
        %4490 = vmatpush2.msra.mxu0 0.0
        %4491 = vmatprep.subr.mxu0 0.0
        %4492 = vmatpush2.msra.mxu0 0.0
        %4493 = vmatprep.subr.mxu0 0.0
        %4494 = vmatpush2.msra.mxu0 0.0
        %4495 = vmatprep.subr.mxu0 0.0
        %4496 = vmatpush2.msra.mxu0 0.0
        %4497 = vmatprep.subr.mxu0 0.0
        %4498 = vmatpush2.msra.mxu0 0.0
        %4499 = vmatprep.subr.mxu0 0.0
        %4500 = vmatpush2.msra.mxu0 0.0
        %4501 = vmatprep.subr.mxu0 0.0
        %4502 = vmatpush2.msra.mxu0 0.0
        %4503 = vmatprep.subr.mxu0 0.0
        %4504 = vmatpush2.msra.mxu0 0.0
        %4505 = vmatprep.subr.mxu0 0.0
        %4506 = vmatpush2.msra.mxu0 0.0
        %4507 = vmatprep.subr.mxu0 0.0
        %4508 = vmatpush2.msra.mxu0 0.0
        %4509 = vmatprep.subr.mxu0 0.0
        %4510 = vmatpush2.msra.mxu0 0.0
        %4511 = vmatprep.mubr.f32.mxu0 0.0
        %v4512 = vand.u32 %v4122, 4294901760
        %4513 = vmatmul.mubr.f32.gmra.mxu0 %v4512
        %v4514 = vpop.f32.mrf.mxu0
        %v4515 = vadd.f32 %v4437, %v4514
        %v4516 = vpop.f32.mrf.mxu0
        %v4517 = vadd.f32 %v4439, %v4516
        %4518 = vdwg.mxu0
        %4519 = vmatprep.subr.mxu0 0.0
        %4520 = vmatpush1.msra.mxu0 0.0
        %4521 = vmatprep.subr.mxu0 0.0
        %4522 = vmatpush1.msra.mxu0 0.0
        %4523 = vmatprep.subr.mxu0 0.0
        %4524 = vmatpush1.msra.mxu0 0.0
        %4525 = vmatprep.subr.mxu0 0.0
        %4526 = vmatpush1.msra.mxu0 0.0
        %4527 = vmatprep.subr.mxu0 0.0
        %4528 = vmatpush1.msra.mxu0 0.0
        %4529 = vmatprep.subr.mxu0 0.0
        %4530 = vmatpush1.msra.mxu0 0.0
        %4531 = vmatprep.subr.mxu0 0.0
        %4532 = vmatpush1.msra.mxu0 0.0
        %4533 = vmatprep.subr.mxu0 0.0
        %4534 = vmatpush1.msra.mxu0 0.0
        %4535 = vmatprep.subr.mxu0 0.0
        %4536 = vmatpush1.msra.mxu0 0.0
        %4537 = vmatprep.subr.mxu0 0.0
        %4538 = vmatpush1.msra.mxu0 0.0
        %4539 = vmatprep.subr.mxu0 0.0
        %4540 = vmatpush1.msra.mxu0 0.0
        %4541 = vmatprep.subr.mxu0 0.0
        %4542 = vmatpush1.msra.mxu0 0.0
        %4543 = vmatprep.subr.mxu0 0.0
        %4544 = vmatpush1.msra.mxu0 0.0
        %4545 = vmatprep.subr.mxu0 0.0
        %4546 = vmatpush1.msra.mxu0 0.0
        %4547 = vmatprep.subr.mxu0 0.0
        %4548 = vmatpush1.msra.mxu0 0.0
        %v4549 = vand.u32 %v4126, 4294901760
        %4550 = vmatprep.subr.mxu0 %v4549
        %v4551 = vand.u32 %v4124, 4294901760
        %4552 = vmatpush1.msra.mxu0 %v4551
        %4553 = vmatprep.subr.mxu0 0.0
        %4554 = vmatpush2.msra.mxu0 0.0
        %4555 = vmatprep.subr.mxu0 0.0
        %4556 = vmatpush2.msra.mxu0 0.0
        %4557 = vmatprep.subr.mxu0 0.0
        %4558 = vmatpush2.msra.mxu0 0.0
        %4559 = vmatprep.subr.mxu0 0.0
        %4560 = vmatpush2.msra.mxu0 0.0
        %4561 = vmatprep.subr.mxu0 0.0
        %4562 = vmatpush2.msra.mxu0 0.0
        %4563 = vmatprep.subr.mxu0 0.0
        %4564 = vmatpush2.msra.mxu0 0.0
        %4565 = vmatprep.subr.mxu0 0.0
        %4566 = vmatpush2.msra.mxu0 0.0
        %4567 = vmatprep.subr.mxu0 0.0
        %4568 = vmatpush2.msra.mxu0 0.0
        %4569 = vmatprep.subr.mxu0 0.0
        %4570 = vmatpush2.msra.mxu0 0.0
        %4571 = vmatprep.subr.mxu0 0.0
        %4572 = vmatpush2.msra.mxu0 0.0
        %4573 = vmatprep.subr.mxu0 0.0
        %4574 = vmatpush2.msra.mxu0 0.0
        %4575 = vmatprep.subr.mxu0 0.0
        %4576 = vmatpush2.msra.mxu0 0.0
        %4577 = vmatprep.subr.mxu0 0.0
        %4578 = vmatpush2.msra.mxu0 0.0
        %4579 = vmatprep.subr.mxu0 0.0
        %4580 = vmatpush2.msra.mxu0 0.0
        %4581 = vmatprep.subr.mxu0 0.0
        %4582 = vmatpush2.msra.mxu0 0.0
        %4583 = vmatprep.subr.mxu0 0.0
        %4584 = vmatpush2.msra.mxu0 0.0
        %4585 = vmatprep.mubr.f32.mxu0 0.0
        %v4586 = vand.u32 %v4122, 4294901760
        %4587 = vmatmul.mubr.f32.gmra.mxu0 %v4586
        %v4588 = vpop.f32.mrf.mxu0
        %v4589 = vadd.f32 %v4515, %v4588
        %v4590 = vpop.f32.mrf.mxu0
        %v4591 = vadd.f32 %v4517, %v4590
        %4592 = vdwg.mxu0
        %v4593 = vpack.c.bf16 %v4052, %v4050
        %v4594 = vpack.c.bf16 %v4053, %v4051
        %v4595 = vpack.c.bf16 %v4056, %v4054
        %v4596 = vpack.c.bf16 %v4057, %v4055
        %v4597 = vpack.c.bf16 %v4060, %v4058
        %v4598 = vpack.c.bf16 %v4061, %v4059
        %v4599 = vpack.c.bf16 %v4064, %v4062
        %v4600 = vpack.c.bf16 %v4065, %v4063
        %v4601 = vpack.c.bf16 %v4068, %v4066
        %v4602 = vpack.c.bf16 %v4069, %v4067
        %v4603 = vpack.c.bf16 %v4072, %v4070
        %v4604 = vpack.c.bf16 %v4073, %v4071
        %v4605 = vpack.c.bf16 %v4076, %v4074
        %v4606 = vpack.c.bf16 %v4077, %v4075
        %v4607 = vpack.c.bf16 %v4080, %v4078
        %v4608 = vpack.c.bf16 %v4081, %v4079
        %v4609 = vpack.c.bf16 %v4084, %v4082
        %v4610 = vpack.c.bf16 %v4085, %v4083
        %v4611 = vpack.c.bf16 %v4088, %v4086
        %v4612 = vpack.c.bf16 %v4089, %v4087
        %v4613 = vpack.c.bf16 %v4092, %v4090
        %v4614 = vpack.c.bf16 %v4093, %v4091
        %v4615 = vpack.c.bf16 %v4096, %v4094
        %v4616 = vpack.c.bf16 %v4097, %v4095
        %v4617 = vpack.c.bf16 %v4100, %v4098
        %v4618 = vpack.c.bf16 %v4101, %v4099
        %v4619 = vpack.c.bf16 %v4104, %v4102
        %v4620 = vpack.c.bf16 %v4105, %v4103
        %v4621 = vpack.c.bf16 %v4108, %v4106
        %v4622 = vpack.c.bf16 %v4109, %v4107
        %v4623 = vpack.c.bf16 %v4112, %v4110
        %v4624 = vpack.c.bf16 %v4113, %v4111
        %4625 = vxpose.xlu0.b32.start [1/16] %v4589, 128
        %4626 = vxpose.xlu0.b32.cont [2/16] 0.0, 128
        %4627 = vxpose.xlu0.b32.cont [3/16] 0.0, 128
        %4628 = vxpose.xlu0.b32.cont [4/16] 0.0, 128
        %4629 = vxpose.xlu0.b32.cont [5/16] 0.0, 128
        %4630 = vxpose.xlu0.b32.cont [6/16] 0.0, 128
        %4631 = vxpose.xlu0.b32.cont [7/16] 0.0, 128
        %4632 = vxpose.xlu0.b32.cont [8/16] 0.0, 128
        %4633 = vxpose.xlu0.b32.cont [9/16] 0.0, 128
        %4634 = vxpose.xlu0.b32.cont [10/16] 0.0, 128
        %4635 = vxpose.xlu0.b32.cont [11/16] 0.0, 128
        %4636 = vxpose.xlu0.b32.cont [12/16] 0.0, 128
        %4637 = vxpose.xlu0.b32.cont [13/16] 0.0, 128
        %4638 = vxpose.xlu0.b32.cont [14/16] 0.0, 128
        %4639 = vxpose.xlu0.b32.cont [15/16] 0.0, 128
        %4640 = vxpose.xlu0.b32.end [16/16] 0.0, 128
        %v4641 = vpop.trf.xlu0
        %v4642 = vpop.trf.xlu0
        %v4643 = vpop.trf.xlu0
        %v4644 = vpop.trf.xlu0
        %v4645 = vpop.trf.xlu0
        %v4646 = vpop.trf.xlu0
        %v4647 = vpop.trf.xlu0
        %v4648 = vpop.trf.xlu0
        %v4649 = vpop.trf.xlu0
        %v4650 = vpop.trf.xlu0
        %v4651 = vpop.trf.xlu0
        %v4652 = vpop.trf.xlu0
        %v4653 = vpop.trf.xlu0
        %v4654 = vpop.trf.xlu0
        %v4655 = vpop.trf.xlu0
        %v4656 = vpop.trf.xlu0
        %4657 = vxpose.xlu0.b32.start [1/16] %v4591, 128
        %4658 = vxpose.xlu0.b32.cont [2/16] 0.0, 128
        %4659 = vxpose.xlu0.b32.cont [3/16] 0.0, 128
        %4660 = vxpose.xlu0.b32.cont [4/16] 0.0, 128
        %4661 = vxpose.xlu0.b32.cont [5/16] 0.0, 128
        %4662 = vxpose.xlu0.b32.cont [6/16] 0.0, 128
        %4663 = vxpose.xlu0.b32.cont [7/16] 0.0, 128
        %4664 = vxpose.xlu0.b32.cont [8/16] 0.0, 128
        %4665 = vxpose.xlu0.b32.cont [9/16] 0.0, 128
        %4666 = vxpose.xlu0.b32.cont [10/16] 0.0, 128
        %4667 = vxpose.xlu0.b32.cont [11/16] 0.0, 128
        %4668 = vxpose.xlu0.b32.cont [12/16] 0.0, 128
        %4669 = vxpose.xlu0.b32.cont [13/16] 0.0, 128
        %4670 = vxpose.xlu0.b32.cont [14/16] 0.0, 128
        %4671 = vxpose.xlu0.b32.cont [15/16] 0.0, 128
        %4672 = vxpose.xlu0.b32.end [16/16] 0.0, 128
        %v4673 = vpop.trf.xlu0
        %v4674 = vpop.trf.xlu0
        %v4675 = vpop.trf.xlu0
        %v4676 = vpop.trf.xlu0
        %v4677 = vpop.trf.xlu0
        %v4678 = vpop.trf.xlu0
        %v4679 = vpop.trf.xlu0
        %v4680 = vpop.trf.xlu0
        %v4681 = vpop.trf.xlu0
        %v4682 = vpop.trf.xlu0
        %v4683 = vpop.trf.xlu0
        %v4684 = vpop.trf.xlu0
        %v4685 = vpop.trf.xlu0
        %v4686 = vpop.trf.xlu0
        %v4687 = vpop.trf.xlu0
        %v4688 = vpop.trf.xlu0
        %v4689 = vpack.c.bf16 %v4642, %v4641
        %v4690 = vpack.c.bf16 %v4644, %v4643
        %v4691 = vpack.c.bf16 %v4646, %v4645
        %v4692 = vpack.c.bf16 %v4648, %v4647
        %v4693 = vpack.c.bf16 %v4650, %v4649
        %v4694 = vpack.c.bf16 %v4652, %v4651
        %v4695 = vpack.c.bf16 %v4654, %v4653
        %v4696 = vpack.c.bf16 %v4656, %v4655
        %v4697 = vpack.c.bf16 %v4674, %v4673
        %v4698 = vpack.c.bf16 %v4676, %v4675
        %v4699 = vpack.c.bf16 %v4678, %v4677
        %v4700 = vpack.c.bf16 %v4680, %v4679
        %v4701 = vpack.c.bf16 %v4682, %v4681
        %v4702 = vpack.c.bf16 %v4684, %v4683
        %v4703 = vpack.c.bf16 %v4686, %v4685
        %v4704 = vpack.c.bf16 %v4688, %v4687
        %4705 = vmatprep.subr.bf16.mxu0 0
        %4706 = vmatpush1.bf16.msra.mxu0 %v4696
        %4707 = vmatprep.subr.bf16.mxu0 0
        %4708 = vmatpush1.bf16.msra.mxu0 %v4695
        %4709 = vmatprep.subr.bf16.mxu0 0
        %4710 = vmatpush1.bf16.msra.mxu0 %v4694
        %4711 = vmatprep.subr.bf16.mxu0 0
        %4712 = vmatpush1.bf16.msra.mxu0 %v4693
        %4713 = vmatprep.subr.bf16.mxu0 0
        %4714 = vmatpush1.bf16.msra.mxu0 %v4692
        %4715 = vmatprep.subr.bf16.mxu0 0
        %4716 = vmatpush1.bf16.msra.mxu0 %v4691
        %4717 = vmatprep.subr.bf16.mxu0 0
        %4718 = vmatpush1.bf16.msra.mxu0 %v4690
        %4719 = vmatprep.subr.bf16.mxu0 0
        %4720 = vmatpush1.bf16.msra.mxu0 %v4689
        %4721 = vmatprep.subr.bf16.mxu0 0
        %4722 = vmatpush2.bf16.msra.mxu0 %v4704
        %4723 = vmatprep.subr.bf16.mxu0 0
        %4724 = vmatpush2.bf16.msra.mxu0 %v4703
        %4725 = vmatprep.subr.bf16.mxu0 0
        %4726 = vmatpush2.bf16.msra.mxu0 %v4702
        %4727 = vmatprep.subr.bf16.mxu0 0
        %4728 = vmatpush2.bf16.msra.mxu0 %v4701
        %4729 = vmatprep.subr.bf16.mxu0 0
        %4730 = vmatpush2.bf16.msra.mxu0 %v4700
        %4731 = vmatprep.subr.bf16.mxu0 0
        %4732 = vmatpush2.bf16.msra.mxu0 %v4699
        %4733 = vmatprep.subr.bf16.mxu0 0
        %4734 = vmatpush2.bf16.msra.mxu0 %v4698
        %4735 = vmatprep.subr.bf16.mxu0 0
        %4736 = vmatpush2.bf16.msra.mxu0 %v4697
        %4737 = vmatprep.mubr.bf16.mxu0 %v4594
        %4738 = vmatmul.mubr.bf16.gmra.mxu0 %v4593
        %v4739 = vpop.f32.mrf.mxu0
        %v4740 = vadd.f32 0.0, %v4739
        %v4741 = vpop.f32.mrf.mxu0
        %v4742 = vpop.f32.mrf.mxu0
        %v4743 = vadd.f32 0.0, %v4742
        %v4744 = vpop.f32.mrf.mxu0
        %4745 = vmatprep.mubr.bf16.mxu0 %v4596
        %4746 = vmatmul.mubr.bf16.gmra.mxu0 %v4595
        %v4747 = vpop.f32.mrf.mxu0
        %v4748 = vadd.f32 0.0, %v4747
        %v4749 = vpop.f32.mrf.mxu0
        %v4750 = vpop.f32.mrf.mxu0
        %v4751 = vadd.f32 0.0, %v4750
        %v4752 = vpop.f32.mrf.mxu0
        %4753 = vmatprep.mubr.bf16.mxu0 %v4598
        %4754 = vmatmul.mubr.bf16.gmra.mxu0 %v4597
        %v4755 = vpop.f32.mrf.mxu0
        %v4756 = vadd.f32 0.0, %v4755
        %v4757 = vpop.f32.mrf.mxu0
        %v4758 = vpop.f32.mrf.mxu0
        %v4759 = vadd.f32 0.0, %v4758
        %v4760 = vpop.f32.mrf.mxu0
        %4761 = vmatprep.mubr.bf16.mxu0 %v4600
        %4762 = vmatmul.mubr.bf16.gmra.mxu0 %v4599
        %v4763 = vpop.f32.mrf.mxu0
        %v4764 = vadd.f32 0.0, %v4763
        %v4765 = vpop.f32.mrf.mxu0
        %v4766 = vpop.f32.mrf.mxu0
        %v4767 = vadd.f32 0.0, %v4766
        %v4768 = vpop.f32.mrf.mxu0
        %4769 = vmatprep.mubr.bf16.mxu0 %v4602
        %4770 = vmatmul.mubr.bf16.gmra.mxu0 %v4601
        %v4771 = vpop.f32.mrf.mxu0
        %v4772 = vadd.f32 0.0, %v4771
        %v4773 = vpop.f32.mrf.mxu0
        %v4774 = vpop.f32.mrf.mxu0
        %v4775 = vadd.f32 0.0, %v4774
        %v4776 = vpop.f32.mrf.mxu0
        %4777 = vmatprep.mubr.bf16.mxu0 %v4604
        %4778 = vmatmul.mubr.bf16.gmra.mxu0 %v4603
        %v4779 = vpop.f32.mrf.mxu0
        %v4780 = vadd.f32 0.0, %v4779
        %v4781 = vpop.f32.mrf.mxu0
        %v4782 = vpop.f32.mrf.mxu0
        %v4783 = vadd.f32 0.0, %v4782
        %v4784 = vpop.f32.mrf.mxu0
        %4785 = vmatprep.mubr.bf16.mxu0 %v4606
        %4786 = vmatmul.mubr.bf16.gmra.mxu0 %v4605
        %v4787 = vpop.f32.mrf.mxu0
        %v4788 = vadd.f32 0.0, %v4787
        %v4789 = vpop.f32.mrf.mxu0
        %v4790 = vpop.f32.mrf.mxu0
        %v4791 = vadd.f32 0.0, %v4790
        %v4792 = vpop.f32.mrf.mxu0
        %4793 = vmatprep.mubr.bf16.mxu0 %v4608
        %4794 = vmatmul.mubr.bf16.gmra.mxu0 %v4607
        %v4795 = vpop.f32.mrf.mxu0
        %v4796 = vadd.f32 0.0, %v4795
        %v4797 = vpop.f32.mrf.mxu0
        %v4798 = vpop.f32.mrf.mxu0
        %v4799 = vadd.f32 0.0, %v4798
        %v4800 = vpop.f32.mrf.mxu0
        %4801 = vmatprep.mubr.bf16.mxu0 %v4610
        %4802 = vmatmul.mubr.bf16.gmra.mxu0 %v4609
        %v4803 = vpop.f32.mrf.mxu0
        %v4804 = vadd.f32 0.0, %v4803
        %v4805 = vpop.f32.mrf.mxu0
        %v4806 = vpop.f32.mrf.mxu0
        %v4807 = vadd.f32 0.0, %v4806
        %v4808 = vpop.f32.mrf.mxu0
        %4809 = vmatprep.mubr.bf16.mxu0 %v4612
        %4810 = vmatmul.mubr.bf16.gmra.mxu0 %v4611
        %v4811 = vpop.f32.mrf.mxu0
        %v4812 = vadd.f32 0.0, %v4811
        %v4813 = vpop.f32.mrf.mxu0
        %v4814 = vpop.f32.mrf.mxu0
        %v4815 = vadd.f32 0.0, %v4814
        %v4816 = vpop.f32.mrf.mxu0
        %4817 = vmatprep.mubr.bf16.mxu0 %v4614
        %4818 = vmatmul.mubr.bf16.gmra.mxu0 %v4613
        %v4819 = vpop.f32.mrf.mxu0
        %v4820 = vadd.f32 0.0, %v4819
        %v4821 = vpop.f32.mrf.mxu0
        %v4822 = vpop.f32.mrf.mxu0
        %v4823 = vadd.f32 0.0, %v4822
        %v4824 = vpop.f32.mrf.mxu0
        %4825 = vmatprep.mubr.bf16.mxu0 %v4616
        %4826 = vmatmul.mubr.bf16.gmra.mxu0 %v4615
        %v4827 = vpop.f32.mrf.mxu0
        %v4828 = vadd.f32 0.0, %v4827
        %v4829 = vpop.f32.mrf.mxu0
        %v4830 = vpop.f32.mrf.mxu0
        %v4831 = vadd.f32 0.0, %v4830
        %v4832 = vpop.f32.mrf.mxu0
        %4833 = vmatprep.mubr.bf16.mxu0 %v4618
        %4834 = vmatmul.mubr.bf16.gmra.mxu0 %v4617
        %v4835 = vpop.f32.mrf.mxu0
        %v4836 = vadd.f32 0.0, %v4835
        %v4837 = vpop.f32.mrf.mxu0
        %v4838 = vpop.f32.mrf.mxu0
        %v4839 = vadd.f32 0.0, %v4838
        %v4840 = vpop.f32.mrf.mxu0
        %4841 = vmatprep.mubr.bf16.mxu0 %v4620
        %4842 = vmatmul.mubr.bf16.gmra.mxu0 %v4619
        %v4843 = vpop.f32.mrf.mxu0
        %v4844 = vadd.f32 0.0, %v4843
        %v4845 = vpop.f32.mrf.mxu0
        %v4846 = vpop.f32.mrf.mxu0
        %v4847 = vadd.f32 0.0, %v4846
        %v4848 = vpop.f32.mrf.mxu0
        %4849 = vmatprep.mubr.bf16.mxu0 %v4622
        %4850 = vmatmul.mubr.bf16.gmra.mxu0 %v4621
        %v4851 = vpop.f32.mrf.mxu0
        %v4852 = vadd.f32 0.0, %v4851
        %v4853 = vpop.f32.mrf.mxu0
        %v4854 = vpop.f32.mrf.mxu0
        %v4855 = vadd.f32 0.0, %v4854
        %v4856 = vpop.f32.mrf.mxu0
        %4857 = vmatprep.mubr.bf16.mxu0 %v4624
        %4858 = vmatmul.mubr.bf16.gmra.mxu0 %v4623
        %v4859 = vpop.f32.mrf.mxu0
        %v4860 = vadd.f32 0.0, %v4859
        %v4861 = vpop.f32.mrf.mxu0
        %v4862 = vpop.f32.mrf.mxu0
        %v4863 = vadd.f32 0.0, %v4862
        %v4864 = vpop.f32.mrf.mxu0
        %4865 = vdwg.mxu0
        %4866 = vxpose.xlu0.b32.start [1/16] %v4740, 128
        %4867 = vxpose.xlu0.b32.cont [2/16] %v4743, 128
        %4868 = vxpose.xlu0.b32.cont [3/16] %v4748, 128
        %4869 = vxpose.xlu0.b32.cont [4/16] %v4751, 128
        %4870 = vxpose.xlu0.b32.cont [5/16] %v4756, 128
        %4871 = vxpose.xlu0.b32.cont [6/16] %v4759, 128
        %4872 = vxpose.xlu0.b32.cont [7/16] %v4764, 128
        %4873 = vxpose.xlu0.b32.cont [8/16] %v4767, 128
        %4874 = vxpose.xlu0.b32.cont [9/16] %v4772, 128
        %4875 = vxpose.xlu0.b32.cont [10/16] %v4775, 128
        %4876 = vxpose.xlu0.b32.cont [11/16] %v4780, 128
        %4877 = vxpose.xlu0.b32.cont [12/16] %v4783, 128
        %4878 = vxpose.xlu0.b32.cont [13/16] %v4788, 128
        %4879 = vxpose.xlu0.b32.cont [14/16] %v4791, 128
        %4880 = vxpose.xlu0.b32.cont [15/16] %v4796, 128
        %4881 = vxpose.xlu0.b32.end [16/16] %v4799, 128
        %v4882 = vpop.trf.xlu0
        %v4883 = vpop.trf.xlu0
        %v4884 = vpop.trf.xlu0
        %v4885 = vpop.trf.xlu0
        %v4886 = vpop.trf.xlu0
        %v4887 = vpop.trf.xlu0
        %v4888 = vpop.trf.xlu0
        %v4889 = vpop.trf.xlu0
        %v4890 = vpop.trf.xlu0
        %v4891 = vpop.trf.xlu0
        %v4892 = vpop.trf.xlu0
        %v4893 = vpop.trf.xlu0
        %v4894 = vpop.trf.xlu0
        %v4895 = vpop.trf.xlu0
        %v4896 = vpop.trf.xlu0
        %v4897 = vpop.trf.xlu0
        %4898 = vxpose.xlu0.b32.start [1/16] %v4804, 128
        %4899 = vxpose.xlu0.b32.cont [2/16] %v4807, 128
        %4900 = vxpose.xlu0.b32.cont [3/16] %v4812, 128
        %4901 = vxpose.xlu0.b32.cont [4/16] %v4815, 128
        %4902 = vxpose.xlu0.b32.cont [5/16] %v4820, 128
        %4903 = vxpose.xlu0.b32.cont [6/16] %v4823, 128
        %4904 = vxpose.xlu0.b32.cont [7/16] %v4828, 128
        %4905 = vxpose.xlu0.b32.cont [8/16] %v4831, 128
        %4906 = vxpose.xlu0.b32.cont [9/16] %v4836, 128
        %4907 = vxpose.xlu0.b32.cont [10/16] %v4839, 128
        %4908 = vxpose.xlu0.b32.cont [11/16] %v4844, 128
        %4909 = vxpose.xlu0.b32.cont [12/16] %v4847, 128
        %4910 = vxpose.xlu0.b32.cont [13/16] %v4852, 128
        %4911 = vxpose.xlu0.b32.cont [14/16] %v4855, 128
        %4912 = vxpose.xlu0.b32.cont [15/16] %v4860, 128
        %4913 = vxpose.xlu0.b32.end [16/16] %v4863, 128
        %v4914 = vpop.trf.xlu0
        %v4915 = vpop.trf.xlu0
        %v4916 = vpop.trf.xlu0
        %v4917 = vpop.trf.xlu0
        %v4918 = vpop.trf.xlu0
        %v4919 = vpop.trf.xlu0
        %v4920 = vpop.trf.xlu0
        %v4921 = vpop.trf.xlu0
        %v4922 = vpop.trf.xlu0
        %v4923 = vpop.trf.xlu0
        %v4924 = vpop.trf.xlu0
        %v4925 = vpop.trf.xlu0
        %v4926 = vpop.trf.xlu0
        %v4927 = vpop.trf.xlu0
        %v4928 = vpop.trf.xlu0
        %v4929 = vpop.trf.xlu0
        %v4930 = vld [vmem:[%s2] sm:$0xff]
        %vm4931 = vcmp.eq.s32.totalorder %v4930, 1
        %4933 = vrot.lane.b32.xlu0 %v4914, 1
        %v4934 = vpop.permute.xlu0 %4933
        %4937 = vrot.lane.b32.xlu0 %v4882, 1
        %v4938 = vpop.permute.xlu0 %4937
        %vm4939 = vcmask 7168
        %v4940 = vsel %vm4939, %v4938, %v4934
        %v4943 = vsel %vm4939, %v4934, %v4938
        %4944 = vrot.lane.b32.xlu0 %v4882, 127
        %v4945 = vpop.permute.xlu0 %4944
        %4946 = vrot.lane.b32.xlu0 %v4914, 127
        %v4947 = vpop.permute.xlu0 %4946
        %vm4948 = vcmask 1039360
        %v4949 = vsel %vm4948, %v4945, %v4947
        %v4953 = vsel %vm4948, %v4947, %v4945
        %v4954 = vsel %vm4931, 1, 0
        %v4955 = vlaneseq
        %v4956 = vshrl.u32 %v4955, 7
        %v4957 = vsub.s32 0, %v4956
        %v4958 = vrot.slane %v4954, %v4957
        %v4959 = vlaneseq
        %v4960 = vshrl.u32 %v4959, 7
        %v4961 = vsub.s32 4, %v4960
        %v4962 = vrot.slane %v4954, %v4961
        %v4963 = vlaneseq
        %v4964 = vshrl.u32 %v4963, 7
        %v4965 = vsub.s32 0, %v4964
        %v4966 = vrot.slane %v4958, %v4965
        %v4967 = vlaneseq
        %v4968 = vshrl.u32 %v4967, 7
        %v4969 = vsub.s32 0, %v4968
        %v4970 = vrot.slane %v4962, %v4969
        %vm4971 = vcmp.eq.s32.totalorder %v4966, 1
        %vm4972 = vcmp.eq.s32.totalorder %v4970, 1
        %v4973 = vsel %vm4971, %v4949, %v4943
        %v4974 = vsel %vm4972, %v4953, %v4940
        %v4975 = vlaneseq
        %v4976 = vshrl.u32 %v4975, 7
        %v4977 = vsub.s32 1, %v4976
        %v4978 = vrot.slane %v4954, %v4977
        %v4979 = vlaneseq
        %v4980 = vshrl.u32 %v4979, 7
        %v4981 = vsub.s32 5, %v4980
        %v4982 = vrot.slane %v4954, %v4981
        %v4983 = vlaneseq
        %v4984 = vshrl.u32 %v4983, 7
        %v4985 = vsub.s32 1, %v4984
        %v4986 = vrot.slane %v4978, %v4985
        %v4987 = vlaneseq
        %v4988 = vshrl.u32 %v4987, 7
        %v4989 = vsub.s32 1, %v4988
        %v4990 = vrot.slane %v4982, %v4989
        %vm4991 = vcmp.eq.s32.totalorder %v4986, 1
        %vm4992 = vcmp.eq.s32.totalorder %v4990, 1
        %v4993 = vsel %vm4991, %v4943, %v4949
        %v4994 = vsel %vm4992, %v4940, %v4953
        %4996 = vrot.lane.b32.xlu0 %v4974, 16
        %v4997 = vpop.permute.xlu0 %4996
        %5000 = vrot.lane.b32.xlu0 %v4973, 16
        %v5001 = vpop.permute.xlu0 %5000
        %vm5002 = vcmask 130048
        %v5003 = vsel %vm5002, %v5001, %v4997
        %v5006 = vsel %vm5002, %v4997, %v5001
        %5007 = vrot.lane.b32.xlu0 %v4973, 112
        %v5008 = vpop.permute.xlu0 %5007
        %5009 = vrot.lane.b32.xlu0 %v4974, 112
        %v5010 = vpop.permute.xlu0 %5009
        %vm5011 = vcmask 916480
        %v5012 = vsel %vm5011, %v5008, %v5010
        %v5016 = vsel %vm5011, %v5010, %v5008
        %v5017 = vlaneseq
        %v5018 = vshrl.u32 %v5017, 7
        %v5019 = vsub.s32 2, %v5018
        %v5020 = vrot.slane %v4954, %v5019
        %v5021 = vlaneseq
        %v5022 = vshrl.u32 %v5021, 7
        %v5023 = vsub.s32 6, %v5022
        %v5024 = vrot.slane %v4954, %v5023
        %v5025 = vlaneseq
        %v5026 = vshrl.u32 %v5025, 7
        %v5027 = vsub.s32 2, %v5026
        %v5028 = vrot.slane %v5020, %v5027
        %v5029 = vlaneseq
        %v5030 = vshrl.u32 %v5029, 7
        %v5031 = vsub.s32 2, %v5030
        %v5032 = vrot.slane %v5024, %v5031
        %vm5033 = vcmp.eq.s32.totalorder %v5028, 1
        %vm5034 = vcmp.eq.s32.totalorder %v5032, 1
        %v5035 = vsel %vm5033, %v5012, %v5006
        %v5036 = vsel %vm5034, %v5016, %v5003
        %5037 = vst [vmem:[#allocation2] sm:$0xf] %v5035
        %5038 = vst [vmem:[#allocation2 + $0x8] sm:$0xf] %v5036
        %v5039 = vrot.slane %v4973, 4
        %v5040 = vrot.slane %v4974, 4
        %5043 = vst [vmem:[#allocation2 + $0x10] sm:$0xf0] %v5039
        %5044 = vst [vmem:[#allocation2 + $0x18] sm:$0xf0] %v5040
        %v5045 = vlaneseq
        %v5046 = vshrl.u32 %v5045, 7
        %v5047 = vsub.s32 3, %v5046
        %v5048 = vrot.slane %v4954, %v5047
        %v5049 = vlaneseq
        %v5050 = vshrl.u32 %v5049, 7
        %v5051 = vsub.s32 7, %v5050
        %v5052 = vrot.slane %v4954, %v5051
        %v5053 = vlaneseq
        %v5054 = vshrl.u32 %v5053, 7
        %v5055 = vsub.s32 3, %v5054
        %v5056 = vrot.slane %v5048, %v5055
        %v5057 = vlaneseq
        %v5058 = vshrl.u32 %v5057, 7
        %v5059 = vsub.s32 3, %v5058
        %v5060 = vrot.slane %v5052, %v5059
        %vm5061 = vcmp.eq.s32.totalorder %v5056, 1
        %vm5062 = vcmp.eq.s32.totalorder %v5060, 1
        %v5063 = vsel %vm5061, %v5006, %v5012
        %v5064 = vsel %vm5062, %v5003, %v5016
        %5065 = vst [vmem:[#allocation2 + $0x30] sm:$0xf] %v5063
        %5066 = vst [vmem:[#allocation2 + $0x38] sm:$0xf] %v5064
        %5067 = vrot.lane.b32.xlu0 %v4914, 16
        %v5068 = vpop.permute.xlu0 %5067
        %5070 = vrot.lane.b32.xlu0 %v4882, 16
        %v5071 = vpop.permute.xlu0 %5070
        %v5072 = vsel %vm5002, %v5071, %v5068
        %v5075 = vsel %vm5002, %v5068, %v5071
        %5076 = vrot.lane.b32.xlu0 %v4882, 112
        %v5077 = vpop.permute.xlu0 %5076
        %5078 = vrot.lane.b32.xlu0 %v4914, 112
        %v5079 = vpop.permute.xlu0 %5078
        %v5080 = vsel %vm5011, %v5077, %v5079
        %v5084 = vsel %vm5011, %v5079, %v5077
        %v5085 = vsel %vm5033, %v5080, %v5075
        %v5086 = vsel %vm5034, %v5084, %v5072
        %v5089 = vrot.slane %v5085, 4
        %v5090 = vrot.slane %v5086, 4
        %5093 = vst [vmem:[#allocation2] sm:$0xf0] %v5089
        %5094 = vst [vmem:[#allocation2 + $0x8] sm:$0xf0] %v5090
        %5095 = vst [vmem:[#allocation2 + $0x20] sm:$0xf] %v4882
        %5096 = vst [vmem:[#allocation2 + $0x28] sm:$0xf] %v4914
        %v5097 = vsel %vm5061, %v5075, %v5080
        %v5098 = vsel %vm5062, %v5072, %v5084
        %v5101 = vrot.slane %v5097, 4
        %v5102 = vrot.slane %v5098, 4
        %5105 = vst [vmem:[#allocation2 + $0x30] sm:$0xf0] %v5101
        %5106 = vst [vmem:[#allocation2 + $0x38] sm:$0xf0] %v5102
        %5108 = vrot.lane.b32.xlu0 %v4994, 16
        %v5109 = vpop.permute.xlu0 %5108
        %5112 = vrot.lane.b32.xlu0 %v4993, 16
        %v5113 = vpop.permute.xlu0 %5112
        %v5114 = vsel %vm5002, %v5113, %v5109
        %v5117 = vsel %vm5002, %v5109, %v5113
        %5118 = vrot.lane.b32.xlu0 %v4993, 112
        %v5119 = vpop.permute.xlu0 %5118
        %5120 = vrot.lane.b32.xlu0 %v4994, 112
        %v5121 = vpop.permute.xlu0 %5120
        %v5122 = vsel %vm5011, %v5119, %v5121
        %v5126 = vsel %vm5011, %v5121, %v5119
        %v5127 = vsel %vm5033, %v5122, %v5117
        %v5128 = vsel %vm5034, %v5126, %v5114
        %5129 = vst [vmem:[#allocation2 + $0x10] sm:$0xf] %v5127
        %5130 = vst [vmem:[#allocation2 + $0x18] sm:$0xf] %v5128
        %v5131 = vrot.slane %v4993, 4
        %v5132 = vrot.slane %v4994, 4
        %5135 = vst [vmem:[#allocation2 + $0x20] sm:$0xf0] %v5131
        %5136 = vst [vmem:[#allocation2 + $0x28] sm:$0xf0] %v5132
        %v5137 = vsel %vm5061, %v5117, %v5122
        %v5138 = vsel %vm5062, %v5114, %v5126
        %5139 = vst [vmem:[#allocation2 + $0x40] sm:$0xf] %v5137
        %5140 = vst [vmem:[#allocation2 + $0x48] sm:$0xf] %v5138
        %v5141 = vld [vmem:[%s7] sm:$0xff]
        %v5142 = vpack.c.bf16 %v5141, %v5141
        %v5143 = vld [vmem:[#allocation2] sm:$0xff]
        %v5144 = vld [vmem:[#allocation2 + $0x8] sm:$0xff]
        %v5145 = vld [vmem:[#allocation2 + $0x10] sm:$0xff]
        %v5146 = vld [vmem:[#allocation2 + $0x18] sm:$0xff]
        %v5147 = vld [vmem:[#allocation2 + $0x20] sm:$0xff]
        %v5148 = vld [vmem:[#allocation2 + $0x28] sm:$0xff]
        %v5149 = vld [vmem:[#allocation2 + $0x30] sm:$0xff]
        %v5150 = vld [vmem:[#allocation2 + $0x38] sm:$0xff]
        %v5151 = vld [vmem:[#allocation2 + $0x40] sm:$0xf]
        %v5152 = vld [vmem:[#allocation2 + $0x48] sm:$0xf]
        %v5153 = vpack.c.bf16 %v5145, %v5143
        %v5154 = vpack.c.bf16 %v5146, %v5144
        %v5155 = vpack.c.bf16 %v5149, %v5147
        %v5156 = vpack.c.bf16 %v5150, %v5148
        %v5157 = vpack.c.bf16 %v5151, %v5151
        %v5158 = vpack.c.bf16 %v5152, %v5152
        %v5159 = vld [vmem:[%s8] sm:$0xff]
        %5161 = vset.pattern.permute.xlu0 0
        %5162 = vperm.xlu0 %5161, %v5159
        %v5163 = vpop.permute.xlu0 %5162
        %vm5165 = vcmask 293888
        %v5167 = vsel %vm5165, %v5142, 0
        %vm5169 = vcmask 1041408
        %v5171 = vsel %vm5169, %v5157, 0
        %v5174 = vsel %vm5169, %v5158, 0
        %5176 = vmatprep.subr.bf16.mxu0 0
        %5177 = vmatpush1.bf16.msra.mxu0 0
        %5178 = vmatprep.subr.bf16.mxu0 0
        %5179 = vmatpush1.bf16.msra.mxu0 0
        %5180 = vmatprep.subr.bf16.mxu0 0
        %5181 = vmatpush1.bf16.msra.mxu0 0
        %5182 = vmatprep.subr.bf16.mxu0 0
        %5183 = vmatpush1.bf16.msra.mxu0 0
        %5184 = vmatprep.subr.bf16.mxu0 0
        %5185 = vmatpush1.bf16.msra.mxu0 0
        %5186 = vmatprep.subr.bf16.mxu0 %v5174
        %5187 = vmatpush1.bf16.msra.mxu0 %v5171
        %5188 = vmatprep.subr.bf16.mxu0 %v5156
        %5189 = vmatpush1.bf16.msra.mxu0 %v5155
        %5190 = vmatprep.subr.bf16.mxu0 %v5154
        %5191 = vmatpush1.bf16.msra.mxu0 %v5153
        %5192 = vmatprep.subr.bf16.mxu0 0
        %5193 = vmatpush2.bf16.msra.mxu0 0
        %5194 = vmatprep.subr.bf16.mxu0 0
        %5195 = vmatpush2.bf16.msra.mxu0 0
        %5196 = vmatprep.subr.bf16.mxu0 0
        %5197 = vmatpush2.bf16.msra.mxu0 0
        %5198 = vmatprep.subr.bf16.mxu0 0
        %5199 = vmatpush2.bf16.msra.mxu0 0
        %5200 = vmatprep.subr.bf16.mxu0 0
        %5201 = vmatpush2.bf16.msra.mxu0 0
        %5202 = vmatprep.subr.bf16.mxu0 0
        %5203 = vmatpush2.bf16.msra.mxu0 0
        %5204 = vmatprep.subr.bf16.mxu0 0
        %5205 = vmatpush2.bf16.msra.mxu0 0
        %5206 = vmatprep.subr.bf16.mxu0 0
        %5207 = vmatpush2.bf16.msra.mxu0 0
        %5208 = vmatprep.mubr.bf16.mxu0 0
        %5209 = vmatmul.mubr.bf16.gmra.mxu0 %v5167
        %v5210 = vpop.f32.mrf.mxu0
        %v5211 = vadd.f32 %v5163, %v5210
        %v5212 = vpop.f32.mrf.mxu0
        %v5213 = vadd.f32 %v5163, %v5212
        %v5214 = vpop.f32.mrf.mxu0
        %v5215 = vpop.f32.mrf.mxu0
        %5216 = vdwg.mxu0
        %v5217 = vmax.f32 %v5211, 0.0
        %v5218 = vmax.f32 %v5213, 0.0
        %v5219 = vld [vmem:[%s9] sm:$0xf]
        %5221 = vset.pattern.permute.xlu0 0
        %5222 = vperm.xlu0 %5221, %v5219
        %v5223 = vpop.permute.xlu0 %5222
        %v5225 = vunpack.c.l.s4 839922192
        %v5226 = vunpack.c.0.s8 %v5225
        %v5227 = vlaneseq
        %v5228 = vshrl.u32 %v5227, 7
        %v5229 = vsub.s32 %v5226, %v5228
        %v5230 = vrot.slane %v5223, %v5229
        %v5232 = vmul.f32 %v486, %v5230
        %v5233 = vld [vmem:[%s10] sm:$0xf]
        %5235 = vset.pattern.permute.xlu0 0
        %5236 = vperm.xlu0 %5235, %v5233
        %v5237 = vpop.permute.xlu0 %5236
        %v5239 = vunpack.c.l.s4 839922192
        %v5240 = vunpack.c.0.s8 %v5239
        %v5241 = vlaneseq
        %v5242 = vshrl.u32 %v5241, 7
        %v5243 = vsub.s32 %v5240, %v5242
        %v5244 = vrot.slane %v5237, %v5243
        %v5246 = vadd.f32 %v5232, %v5244
        %v5249 = vcombine.low %v5217, %v5218
        %v5251 = vmul.f32 %v5246, %v5249
        %v5252 = vcombine.high %v5217, %v5218
        %v5254 = vadd.f32 %v5251, %v5252
        %5255 = vst [vmem:[%s440] sm:$0xff] %v5254
        %s5256 = sand.u32 %s280, 1
        %s5257 = scalar_lea.sflag [#allocation5], %s5256
        %s5258 = sand.u32 %s280, 1
        %s5259 = smul.addr %s5258, 8
        %s5260 = scalar_lea.vmem [#allocation8], %s5259
        // Predicated region
        $region73: #{tpu_custom_call.1} parent=63 // pred_check
          %p5261 = pneg %p290
        $region74: #{tpu_custom_call.1} parent=63 // pred_check_branch
          %5263 = sbr.rel (%p5261) target = $region76
        $region75: #{tpu_custom_call.1} parent=63 // pred_region
          %s5265 = ssub.s32 128, 128
          %5266 = vsyncadd %s5257, %s5265
          %s5267 = smul.addr %s31, 2
          %s5268 = smul.addr %s5267, 64
          %s5269 = scalar_lea.hbm %s11, %s5268
          %s5271 = sshll.u32 %s5260, 4
          %s5272 = int_to_ptr.vmem [resolvable:$true] %s5271
          %5274 = dma.vmem_to_hbm [thread:$0]  %s5272, 128, %s5269, %s5257
        $region76: #{tpu_custom_call.1} parent=63 // pred_fallthru
          _
      $region64: #{tpu_custom_call.1} parent=5 // pred_fallthru
        _
      %p5275 = scmp.le.s32.totalorder 2, %s26
      // Predicated region
      $region77: #{tpu_custom_call.1} parent=5 // pred_check
        %p5276 = pneg %p5275
      $region78: #{tpu_custom_call.1} parent=5 // pred_check_branch
        %5278 = sbr.rel (%p5276) target = $region80
      $region79: #{tpu_custom_call.1} parent=5 // pred_region
        %s5279 = ssub.s32 %s26, 2
        // Predicated region
        $region81: #{tpu_custom_call.1} parent=79 // pred_check
          %p5280 = pneg %p296
        $region82: #{tpu_custom_call.1} parent=79 // pred_check_branch
          %5282 = sbr.rel (%p5280) target = $region84
        $region83: #{tpu_custom_call.1} parent=79 // pred_region
          %s5283 = sand.u32 %s281, 1
          %s5284 = scalar_lea.sflag [#allocation5], %s5283
          %s5285 = sand.u32 %s281, 1
          %s5286 = smul.addr %s5285, 8
          %s5287 = scalar_lea.vmem [#allocation8], %s5286
          %5288 = dma.done %s5284, 128
        $region84: #{tpu_custom_call.1} parent=79 // pred_fallthru
          _
      $region80: #{tpu_custom_call.1} parent=5 // pred_fallthru
        _
    $region6: #{tpu_custom_call.1} parent=1 // loop_footer
      %s30 = sadd.s32 1, %s26
    $region7: #{tpu_custom_call.1} parent=1 // loop_footer_branch
      %25 = sbr.rel target = $region3
    $region8: #{tpu_custom_call.1} parent=1 // loop_exit
      _
    %5289 = vsyncpa [#allocation4], 1
    %s5290 = scalar_lea.sflag [#allocation4], 1
    %5291 = vsyncpa %s5290, 1
    %5292 = vsyncpa [#allocation7], 1
    %s5293 = scalar_lea.sflag [#allocation7], 1
    %5294 = vsyncpa %s5293, 1
    %5295 = vsyncpa [#allocation5], 1
    %s5296 = scalar_lea.sflag [#allocation5], 1
    %5297 = vsyncpa %s5296, 1

</llo_original>
